<compile_context>
chip_gen: v7x
topology: tpu7x:2x2x1
jax: 0.10.0
libtpu: 0.0.40
codegen_flags: <defaults>
</compile_context>

<pallas_src>
import functools

import jax
import jax.numpy as jnp
from jax.experimental import pallas as pl
from jax.experimental.pallas import tpu as pltpu

BN_EPS = 1e-5


def _round_up(x, m):
    return (x + m - 1) // m * m


# ----------------------------- Pallas kernels -----------------------------

def _conv3d_bn_stats_kernel(xm_ref, x0_ref, xp_ref, w_ref, z_ref, s_ref, lhs_ref, *,
                            w_valid, wp, cin_p):
    """Fused 3x3x3 conv (pad=1) for one (batch, depth-slice) tile + BN partial stats.

    xm/x0/xp_ref: (1, 1, ROWS_IN, Cin_p) bf16 -- padded depth slabs d, d+1, d+2,
                  H/W flattened as row = h_pad * Wp + w_pad (zero padded).
    w_ref:        (3, 9*Cin_p, Cout_p) bf16, K index = (kh*3 + kw)*Cin_p + cin.
    z_ref:        (1, 1, R_OUT, Cout_p) bf16 pre-BN conv output, R_OUT = H * Wp.
    s_ref:        (1, 1, 2, Cout_p) f32 per-tile [sum, sum_of_squares].
    lhs_ref:      (R_OUT, 9*Cin_p) bf16 VMEM scratch holding the K-folded LHS.
    """
    r_out = z_ref.shape[2]
    cout_p = z_ref.shape[3]
    acc = jnp.zeros((r_out, cout_p), jnp.float32)
    for kd, xref in enumerate((xm_ref, x0_ref, xp_ref)):
        # Build the K-folded LHS for this depth tap: 9 shifted slabs side by side.
        for kh in range(3):
            for kw in range(3):
                kk = kh * 3 + kw
                off = kh * wp + kw
                lhs_ref[:, kk * cin_p:(kk + 1) * cin_p] = xref[0, 0, off:off + r_out, :]
        acc = acc + jnp.dot(lhs_ref[...], w_ref[kd],
                            preferred_element_type=jnp.float32)
    # Zero the 2 garbage columns (w >= W): keeps BN stats exact and makes these rows
    # land as zeros on the padding positions of the next layer's input.
    col = jax.lax.broadcasted_iota(jnp.int32, (r_out, 1), 0) % wp
    acc = jnp.where(col < w_valid, acc, 0.0)
    z_ref[0, 0] = acc.astype(z_ref.dtype)
    s_ref[0, 0, 0:1, :] = jnp.sum(acc, axis=0, keepdims=True)
    s_ref[0, 0, 1:2, :] = jnp.sum(acc * acc, axis=0, keepdims=True)


def _bn_relu_pad_kernel(z_ref, sc_ref, sh_ref, y_ref, *, w_valid, wp, lead):
    """Layer-1 epilogue: y = relu(z*scale + shift), written DIRECTLY into the zero-padded
    layer-2 input layout (pad depth slices and pad rows are zeroed here)."""
    r_out = z_ref.shape[2]
    rows_in = y_ref.shape[2]
    cp = y_ref.shape[3]
    j = pl.program_id(1)
    interior = jnp.logical_and(j >= 1, j < pl.num_programs(1) - 1)

    @pl.when(interior)
    def _():
        z = z_ref[0, 0].astype(jnp.float32)
        y = jnp.maximum(z * sc_ref[...] + sh_ref[...], 0.0)
        col = jax.lax.broadcasted_iota(jnp.int32, (r_out, 1), 0) % wp
        y = jnp.where(col < w_valid, y, 0.0)          # garbage cols -> padding zeros
        y_ref[0, 0, 0:lead, :] = jnp.zeros((lead, cp), y_ref.dtype)
        y_ref[0, 0, lead:lead + r_out, :] = y.astype(y_ref.dtype)
        y_ref[0, 0, lead + r_out:rows_in, :] = jnp.zeros(
            (rows_in - lead - r_out, cp), y_ref.dtype)

    @pl.when(jnp.logical_not(interior))
    def _():
        y_ref[0, 0] = jnp.zeros((rows_in, cp), y_ref.dtype)


def _bn_relu_dhpool_kernel(z_ref, sc_ref, sh_ref, y_ref, p_ref, *, wp, h):
    """Layer-2 epilogue: y = relu(z*scale + shift); fused max-pool over the depth pair and
    over H pairs (the W pairs are finished outside on the 4x-smaller tensor).

    z_ref: (1, 2, R_OUT, Cp) bf16 (two consecutive depth slices, pre-BN)
    y_ref: (1, 2, R_OUT, Cp) f32 normalized output (conv_x basis)
    p_ref: (1, 1, H//2, Wp, Cp) f32 depth+H pooled output
    """
    z = z_ref[0].astype(jnp.float32)                  # (2, R_OUT, Cp)
    y = jnp.maximum(z * sc_ref[...] + sh_ref[...], 0.0)
    y_ref[0] = y
    dmax = jnp.maximum(y[0], y[1])                    # pool over the depth pair
    for k in range(h // 2):                           # pool over H pairs (static slices)
        a = dmax[(2 * k) * wp:(2 * k + 1) * wp, :]
        b = dmax[(2 * k + 1) * wp:(2 * k + 2) * wp, :]
        p_ref[0, 0, k] = jnp.maximum(a, b)


# ----------------------------- pallas_call wrappers -----------------------------

def _conv3d_layer(x_flat, w_fold, n, d, h, w_sp):
    """x_flat: (N, D+2, ROWS_IN, Cin_p) bf16;  w_fold: (3, 9*Cin_p, Cout_p) bf16."""
    wp = w_sp + 2
    r_out = h * wp
    rows_in = x_flat.shape[2]
    cin_p = x_flat.shape[3]
    cout_p = w_fold.shape[-1]

    def x_spec(kd):
        return pl.BlockSpec((1, 1, rows_in, cin_p),
                            lambda i, j, kd=kd: (i, j + kd, 0, 0))

    kern = functools.partial(_conv3d_bn_stats_kernel, w_valid=w_sp, wp=wp, cin_p=cin_p)
    z, stats = pl.pallas_call(
        kern,
        grid=(n, d),
        in_specs=[x_spec(0), x_spec(1), x_spec(2),
                  pl.BlockSpec((3, 9 * cin_p, cout_p), lambda i, j: (0, 0, 0))],
        out_specs=[pl.BlockSpec((1, 1, r_out, cout_p), lambda i, j: (i, j, 0, 0)),
                   pl.BlockSpec((1, 1, 2, cout_p), lambda i, j: (i, j, 0, 0))],
        out_shape=[jax.ShapeDtypeStruct((n, d, r_out, cout_p), jnp.bfloat16),
                   jax.ShapeDtypeStruct((n, d, 2, cout_p), jnp.float32)],
        scratch_shapes=[pltpu.VMEM((r_out, 9 * cin_p), jnp.bfloat16)],
        compiler_params=pltpu.CompilerParams(
            dimension_semantics=("parallel", "parallel")),
    )(x_flat, x_flat, x_flat, w_fold)
    return z, stats


def _bn_scale_shift(stats, gamma_p, beta_p, m_count):
    # Note: E[x^2]-E[x]^2 in f32; fine for moderate sizes (Welford merge would be safer).
    s = jnp.sum(stats[:, :, 0, :], axis=(0, 1))
    ss = jnp.sum(stats[:, :, 1, :], axis=(0, 1))
    mean = s / m_count
    var = jnp.maximum(ss / m_count - mean * mean, 0.0)        # biased var (training BN)
    scale = gamma_p * jax.lax.rsqrt(var + BN_EPS)
    shift = beta_p - mean * scale
    return (scale.reshape(1, -1).astype(jnp.float32),
            shift.reshape(1, -1).astype(jnp.float32))


def _bn_relu_pad_apply(z, scale, shift, d, rows_in, lead, w_sp, wp):
    n, _, r_out, cp = z.shape
    return pl.pallas_call(
        functools.partial(_bn_relu_pad_kernel, w_valid=w_sp, wp=wp, lead=lead),
        grid=(n, d + 2),
        in_specs=[pl.BlockSpec((1, 1, r_out, cp),
                               lambda i, j: (i, jnp.clip(j - 1, 0, d - 1), 0, 0)),
                  pl.BlockSpec((1, cp), lambda i, j: (0, 0)),
                  pl.BlockSpec((1, cp), lambda i, j: (0, 0))],
        out_specs=pl.BlockSpec((1, 1, rows_in, cp), lambda i, j: (i, j, 0, 0)),
        out_shape=jax.ShapeDtypeStruct((n, d + 2, rows_in, cp), jnp.bfloat16),
        compiler_params=pltpu.CompilerParams(
            dimension_semantics=("parallel", "parallel")),
    )(z, scale, shift)


def _bn_relu_dhpool_apply(z, scale, shift, h, wp):
    n, d, r_out, cp = z.shape
    return pl.pallas_call(
        functools.partial(_bn_relu_dhpool_kernel, wp=wp, h=h),
        grid=(n, d // 2),
        in_specs=[pl.BlockSpec((1, 2, r_out, cp), lambda i, j: (i, j, 0, 0)),
                  pl.BlockSpec((1, cp), lambda i, j: (0, 0)),
                  pl.BlockSpec((1, cp), lambda i, j: (0, 0))],
        out_specs=[pl.BlockSpec((1, 2, r_out, cp), lambda i, j: (i, j, 0, 0)),
                   pl.BlockSpec((1, 1, h // 2, wp, cp), lambda i, j: (i, j, 0, 0, 0))],
        out_shape=[jax.ShapeDtypeStruct((n, d, r_out, cp), jnp.float32),
                   jax.ShapeDtypeStruct((n, d // 2, h // 2, wp, cp), jnp.float32)],
        compiler_params=pltpu.CompilerParams(
            dimension_semantics=("parallel", "parallel")),
    )(z, scale, shift)


# ----------------------------- parameters / layout glue -----------------------------

def init_down_block_params(key, in_channels, out_channels):
    k1, k2 = jax.random.split(key)

    def conv_w(k, cin, cout):
        bound = 1.0 / float(cin * 27) ** 0.5
        return jax.random.uniform(k, (cout, cin, 3, 3, 3), jnp.float32, -bound, bound)

    # Conv bias is omitted on purpose: a per-channel bias before training-mode BatchNorm is
    # exactly cancelled by the BN mean subtraction (dead compute / dead DMA).
    return dict(w1=conv_w(k1, in_channels, out_channels),
                w2=conv_w(k2, out_channels, out_channels),
                g1=jnp.ones((out_channels,), jnp.float32),
                be1=jnp.zeros((out_channels,), jnp.float32),
                g2=jnp.ones((out_channels,), jnp.float32),
                be2=jnp.zeros((out_channels,), jnp.float32))


def _prep_weight(w_oidhw, cin_p, cout_p):
    # PyTorch (Cout, Cin, kd, kh, kw) -> K-folded (kd, (kh,kw,Cin)->K, Cout_p), bf16.
    cout, cin = w_oidhw.shape[:2]
    w = jnp.transpose(w_oidhw, (2, 3, 4, 1, 0))               # (kd, kh, kw, cin, cout)
    w = jnp.pad(w, ((0, 0), (0, 0), (0, 0), (0, cin_p - cin), (0, cout_p - cout)))
    return w.reshape(3, 9 * cin_p, cout_p).astype(jnp.bfloat16)


# ----------------------------- DownBlock forward -----------------------------

def down_block_forward(params, x_ncdhw):
    n, cin, d, h, w = x_ncdhw.shape
    # TODO(synk): PyTorch max_pool3d(kernel_size=2) floors odd spatial sizes; we require even.
    assert d % 2 == 0 and h % 2 == 0 and w % 2 == 0, "even D/H/W required"
    cout = params["w1"].shape[0]

    cin_p = _round_up(cin, 8)
    # Adaptive Cout padding: only pad to full 128-lane tiles for large channel counts.
    cout_p = _round_up(cout, 128) if cout >= 128 else _round_up(cout, 8)
    wp, hp = w + 2, h + 2
    rows_pad = hp * wp
    rows_in = _round_up(rows_pad + 2, 8)        # + halo slack for the last taps
    r_out = h * wp
    lead = wp + 1                               # flat-row shift: conv-output -> padded-input
    m_count = float(n * d * h * w)

    # layer-1 input: NCDHW -> channels-last, zero-pad channels + spatial, flatten (Hp, Wp)
    xcl = jnp.transpose(x_ncdhw, (0, 2, 3, 4, 1))
    xcl = jnp.pad(xcl, ((0, 0), (1, 1), (1, 1), (1, 1), (0, cin_p - cin)))
    xf = xcl.reshape(n, d + 2, rows_pad, cin_p)
    xf = jnp.pad(xf, ((0, 0), (0, 0), (0, rows_in - rows_pad), (0, 0))).astype(jnp.bfloat16)

    w1 = _prep_weight(params["w1"], cin_p, cout_p)
    w2 = _prep_weight(params["w2"], cout_p, cout_p)
    g1 = jnp.pad(params["g1"], (0, cout_p - cout))
    b1 = jnp.pad(params["be1"], (0, cout_p - cout))
    g2 = jnp.pad(params["g2"], (0, cout_p - cout))
    b2 = jnp.pad(params["be2"], (0, cout_p - cout))

    # ---- layer 1: K-folded conv (+BN partial stats), BN+ReLU written into padded layer-2 layout
    z1, st1 = _conv3d_layer(xf, w1, n, d, h, w)
    sc1, sh1 = _bn_scale_shift(st1, g1, b1, m_count)
    x2 = _bn_relu_pad_apply(z1, sc1, sh1, d, rows_in, lead, w, wp)

    # ---- layer 2: K-folded conv (+stats), BN+ReLU + fused depth/H max-pool
    z2, st2 = _conv3d_layer(x2, w2, n, d, h, w)
    sc2, sh2 = _bn_scale_shift(st2, g2, b2, m_count)
    y2, pdh = _bn_relu_dhpool_apply(z2, sc2, sh2, h, wp)

    conv_x = jnp.transpose(
        y2.reshape(n, d, h, wp, cout_p)[:, :, :, :w, :cout], (0, 4, 1, 2, 3))
    # finish the W pool in XLA on the already depth/H-pooled (4x smaller) tensor
    pdh = pdh[:, :, :, :w, :cout].reshape(n, d // 2, h // 2, w // 2, 2, cout)
    maxp_x = jnp.transpose(jnp.max(pdh, axis=4), (0, 4, 1, 2, 3))
    return conv_x, maxp_x


# ----------------------------- pure-JAX reference (for validation) -----------------------------

def _reference_down_block(params, x):
    dn = ("NCDHW", "OIDHW", "NCDHW")

    def conv(v, wgt):
        return jax.lax.conv_general_dilated(v, wgt, (1, 1, 1),
                                            [(1, 1), (1, 1), (1, 1)],
                                            dimension_numbers=dn)

    def bn_relu(z, g, b):
        mean = jnp.mean(z, axis=(0, 2, 3, 4), keepdims=True)
        var = jnp.mean(jnp.square(z - mean), axis=(0, 2, 3, 4), keepdims=True)
        zn = (z - mean) * jax.lax.rsqrt(var + BN_EPS)
        return jnp.maximum(zn * g.reshape(1, -1, 1, 1, 1) + b.reshape(1, -1, 1, 1, 1), 0.0)

    y = bn_relu(conv(x, params["w1"]), params["g1"], params["be1"])
    y = bn_relu(conv(y, params["w2"]), params["g2"], params["be2"])
    nb, c, d, h, w = y.shape
    p = y.reshape(nb, c, d // 2, 2, h // 2, 2, w // 2, 2).max(axis=(3, 5, 7))
    return y, p


if __name__ == "__main__":
    key = jax.random.PRNGKey(0)
    kx, kp = jax.random.split(key)
    N, Cin, Cout, D, H, W = 2, 4, 8, 8, 8, 8
    x = jax.random.normal(kx, (N, Cin, D, H, W), jnp.float32)
    params = init_down_block_params(kp, Cin, Cout)

    fwd = jax.jit(down_block_forward)
    conv_x, maxp_x = fwd(params, x)
    jax.block_until_ready((conv_x, maxp_x))

    assert conv_x.shape == (N, Cout, D, H, W), conv_x.shape
    assert maxp_x.shape == (N, Cout, D // 2, H // 2, W // 2), maxp_x.shape
    assert bool(jnp.all(jnp.isfinite(conv_x))) and bool(jnp.all(jnp.isfinite(maxp_x)))

    # numerical check vs. an XLA f32 reference (kernel uses bf16 MXU operands -> loose tol)
    ref_c, ref_p = _reference_down_block(params, x)
    err_c = float(jnp.max(jnp.abs(conv_x - ref_c)))
    err_p = float(jnp.max(jnp.abs(maxp_x - ref_p)))
    assert err_c < 0.15 and err_p < 0.15, (err_c, err_p)

    print("KERNEL_OK")
</pallas_src>

<mosaic_0001>
module attributes {stable_mosaic.version = 11 : i64} {
  func.func @_conv3d_bn_stats_kernel(%arg0: i32, %arg1: i32, %arg2: memref<1x1x104x8xbf16, #tpu.memory_space<vmem>>, %arg3: memref<1x1x104x8xbf16, #tpu.memory_space<vmem>>, %arg4: memref<1x1x104x8xbf16, #tpu.memory_space<vmem>>, %arg5: memref<3x72x8xbf16, #tpu.memory_space<vmem>>, %arg6: memref<1x1x80x8xbf16, #tpu.memory_space<vmem>>, %arg7: memref<1x1x2x8xf32, #tpu.memory_space<vmem>>, %arg8: memref<80x72xbf16, #tpu.memory_space<vmem>>) attributes {dimension_semantics = [#tpu.dimension_semantics<parallel>, #tpu.dimension_semantics<parallel>], iteration_bounds = array<i64: 2, 8>, scalar_prefetch = 0 : i64, scratch_operands = 1 : i64, tpu.core_type = #tpu.core_type<tc>, window_params = [{transform_indices = @transform_0, window_bounds = array<i64: 1, 1, 104, 8>}, {transform_indices = @transform_1, window_bounds = array<i64: 1, 1, 104, 8>}, {transform_indices = @transform_2, window_bounds = array<i64: 1, 1, 104, 8>}, {pipeline_mode = #tpu.pipeline_mode<synchronous>, transform_indices = @transform_3, window_bounds = array<i64: 3, 72, 8>}, {transform_indices = @transform_4, window_bounds = array<i64: 1, 1, 80, 8>}, {transform_indices = @transform_5, window_bounds = array<i64: 1, 1, 2, 8>}]} {
    %cst = arith.constant 0.000000e+00 : f32
    %0 = vector.broadcast %cst : f32 to vector<80x8xf32>
    %c0 = arith.constant 0 : index
    %c0_0 = arith.constant 0 : index
    %c0_1 = arith.constant 0 : index
    %c0_2 = arith.constant 0 : index
    %1 = vector.load %arg2[%c0, %c0_0, %c0_1, %c0_2] : memref<1x1x104x8xbf16, #tpu.memory_space<vmem>>, vector<1x1x80x8xbf16>
    %2 = vector.shape_cast %1 : vector<1x1x80x8xbf16> to vector<80x8xbf16>
    %c0_3 = arith.constant 0 : index
    %c0_4 = arith.constant 0 : index
    %3 = vector.load %arg8[%c0_3, %c0_4] : memref<80x72xbf16, #tpu.memory_space<vmem>>, vector<80x8xbf16>
    tpu.vector_store %arg8[%c0_3, %c0_4], %2 {strides = array<i32>} : memref<80x72xbf16, #tpu.memory_space<vmem>>, vector<80x8xbf16>,
    %c0_5 = arith.constant 0 : index
    %c0_6 = arith.constant 0 : index
    %c1 = arith.constant 1 : index
    %c0_7 = arith.constant 0 : index
    %4 = vector.load %arg2[%c0_5, %c0_6, %c1, %c0_7] : memref<1x1x104x8xbf16, #tpu.memory_space<vmem>>, vector<1x1x80x8xbf16>
    %5 = vector.shape_cast %4 : vector<1x1x80x8xbf16> to vector<80x8xbf16>
    %c0_8 = arith.constant 0 : index
    %c8 = arith.constant 8 : index
    %6 = vector.load %arg8[%c0_8, %c8] : memref<80x72xbf16, #tpu.memory_space<vmem>>, vector<80x8xbf16>
    tpu.vector_store %arg8[%c0_8, %c8], %5 {strides = array<i32>} : memref<80x72xbf16, #tpu.memory_space<vmem>>, vector<80x8xbf16>,
    %c0_9 = arith.constant 0 : index
    %c0_10 = arith.constant 0 : index
    %c2 = arith.constant 2 : index
    %c0_11 = arith.constant 0 : index
    %7 = vector.load %arg2[%c0_9, %c0_10, %c2, %c0_11] : memref<1x1x104x8xbf16, #tpu.memory_space<vmem>>, vector<1x1x80x8xbf16>
    %8 = vector.shape_cast %7 : vector<1x1x80x8xbf16> to vector<80x8xbf16>
    %c0_12 = arith.constant 0 : index
    %c16 = arith.constant 16 : index
    %9 = vector.load %arg8[%c0_12, %c16] : memref<80x72xbf16, #tpu.memory_space<vmem>>, vector<80x8xbf16>
    tpu.vector_store %arg8[%c0_12, %c16], %8 {strides = array<i32>} : memref<80x72xbf16, #tpu.memory_space<vmem>>, vector<80x8xbf16>,
    %c0_13 = arith.constant 0 : index
    %c0_14 = arith.constant 0 : index
    %c10 = arith.constant 10 : index
    %c0_15 = arith.constant 0 : index
    %10 = vector.load %arg2[%c0_13, %c0_14, %c10, %c0_15] : memref<1x1x104x8xbf16, #tpu.memory_space<vmem>>, vector<1x1x80x8xbf16>
    %11 = vector.shape_cast %10 : vector<1x1x80x8xbf16> to vector<80x8xbf16>
    %c0_16 = arith.constant 0 : index
    %c24 = arith.constant 24 : index
    %12 = vector.load %arg8[%c0_16, %c24] : memref<80x72xbf16, #tpu.memory_space<vmem>>, vector<80x8xbf16>
    tpu.vector_store %arg8[%c0_16, %c24], %11 {strides = array<i32>} : memref<80x72xbf16, #tpu.memory_space<vmem>>, vector<80x8xbf16>,
    %c0_17 = arith.constant 0 : index
    %c0_18 = arith.constant 0 : index
    %c11 = arith.constant 11 : index
    %c0_19 = arith.constant 0 : index
    %13 = vector.load %arg2[%c0_17, %c0_18, %c11, %c0_19] : memref<1x1x104x8xbf16, #tpu.memory_space<vmem>>, vector<1x1x80x8xbf16>
    %14 = vector.shape_cast %13 : vector<1x1x80x8xbf16> to vector<80x8xbf16>
    %c0_20 = arith.constant 0 : index
    %c32 = arith.constant 32 : index
    %15 = vector.load %arg8[%c0_20, %c32] : memref<80x72xbf16, #tpu.memory_space<vmem>>, vector<80x8xbf16>
    tpu.vector_store %arg8[%c0_20, %c32], %14 {strides = array<i32>} : memref<80x72xbf16, #tpu.memory_space<vmem>>, vector<80x8xbf16>,
    %c0_21 = arith.constant 0 : index
    %c0_22 = arith.constant 0 : index
    %c12 = arith.constant 12 : index
    %c0_23 = arith.constant 0 : index
    %16 = vector.load %arg2[%c0_21, %c0_22, %c12, %c0_23] : memref<1x1x104x8xbf16, #tpu.memory_space<vmem>>, vector<1x1x80x8xbf16>
    %17 = vector.shape_cast %16 : vector<1x1x80x8xbf16> to vector<80x8xbf16>
    %c0_24 = arith.constant 0 : index
    %c40 = arith.constant 40 : index
    %18 = vector.load %arg8[%c0_24, %c40] : memref<80x72xbf16, #tpu.memory_space<vmem>>, vector<80x8xbf16>
    tpu.vector_store %arg8[%c0_24, %c40], %17 {strides = array<i32>} : memref<80x72xbf16, #tpu.memory_space<vmem>>, vector<80x8xbf16>,
    %c0_25 = arith.constant 0 : index
    %c0_26 = arith.constant 0 : index
    %c20 = arith.constant 20 : index
    %c0_27 = arith.constant 0 : index
    %19 = vector.load %arg2[%c0_25, %c0_26, %c20, %c0_27] : memref<1x1x104x8xbf16, #tpu.memory_space<vmem>>, vector<1x1x80x8xbf16>
    %20 = vector.shape_cast %19 : vector<1x1x80x8xbf16> to vector<80x8xbf16>
    %c0_28 = arith.constant 0 : index
    %c48 = arith.constant 48 : index
    %21 = vector.load %arg8[%c0_28, %c48] : memref<80x72xbf16, #tpu.memory_space<vmem>>, vector<80x8xbf16>
    tpu.vector_store %arg8[%c0_28, %c48], %20 {strides = array<i32>} : memref<80x72xbf16, #tpu.memory_space<vmem>>, vector<80x8xbf16>,
    %c0_29 = arith.constant 0 : index
    %c0_30 = arith.constant 0 : index
    %c21 = arith.constant 21 : index
    %c0_31 = arith.constant 0 : index
    %22 = vector.load %arg2[%c0_29, %c0_30, %c21, %c0_31] : memref<1x1x104x8xbf16, #tpu.memory_space<vmem>>, vector<1x1x80x8xbf16>
    %23 = vector.shape_cast %22 : vector<1x1x80x8xbf16> to vector<80x8xbf16>
    %c0_32 = arith.constant 0 : index
    %c56 = arith.constant 56 : index
    %24 = vector.load %arg8[%c0_32, %c56] : memref<80x72xbf16, #tpu.memory_space<vmem>>, vector<80x8xbf16>
    tpu.vector_store %arg8[%c0_32, %c56], %23 {strides = array<i32>} : memref<80x72xbf16, #tpu.memory_space<vmem>>, vector<80x8xbf16>,
    %c0_33 = arith.constant 0 : index
    %c0_34 = arith.constant 0 : index
    %c22 = arith.constant 22 : index
    %c0_35 = arith.constant 0 : index
    %25 = vector.load %arg2[%c0_33, %c0_34, %c22, %c0_35] : memref<1x1x104x8xbf16, #tpu.memory_space<vmem>>, vector<1x1x80x8xbf16>
    %26 = vector.shape_cast %25 : vector<1x1x80x8xbf16> to vector<80x8xbf16>
    %c0_36 = arith.constant 0 : index
    %c64 = arith.constant 64 : index
    %27 = vector.load %arg8[%c0_36, %c64] : memref<80x72xbf16, #tpu.memory_space<vmem>>, vector<80x8xbf16>
    tpu.vector_store %arg8[%c0_36, %c64], %26 {strides = array<i32>} : memref<80x72xbf16, #tpu.memory_space<vmem>>, vector<80x8xbf16>,
    %c0_37 = arith.constant 0 : index
    %c0_38 = arith.constant 0 : index
    %28 = vector.load %arg8[%c0_37, %c0_38] : memref<80x72xbf16, #tpu.memory_space<vmem>>, vector<80x72xbf16>
    %c0_39 = arith.constant 0 : index
    %c0_40 = arith.constant 0 : index
    %c0_41 = arith.constant 0 : index
    %29 = vector.load %arg5[%c0_39, %c0_40, %c0_41] : memref<3x72x8xbf16, #tpu.memory_space<vmem>>, vector<1x72x8xbf16>
    %30 = vector.shape_cast %29 : vector<1x72x8xbf16> to vector<72x8xbf16>
    %cst_42 = arith.constant dense<0.000000e+00> : vector<80x8xf32>
    %31 = tpu.matmul %28, %30, %cst_42 {dimension_numbers = #tpu.dot_dimension_numbers<[1], [0], [0], [1], [0, 0, 1, 1], [], []>} : vector<80x72xbf16>, vector<72x8xbf16>, vector<80x8xf32> -> vector<80x8xf32>
    %32 = arith.addf %0, %31 : vector<80x8xf32>
    %c0_43 = arith.constant 0 : index
    %c0_44 = arith.constant 0 : index
    %c0_45 = arith.constant 0 : index
    %c0_46 = arith.constant 0 : index
    %33 = vector.load %arg3[%c0_43, %c0_44, %c0_45, %c0_46] : memref<1x1x104x8xbf16, #tpu.memory_space<vmem>>, vector<1x1x80x8xbf16>
    %34 = vector.shape_cast %33 : vector<1x1x80x8xbf16> to vector<80x8xbf16>
    %c0_47 = arith.constant 0 : index
    %c0_48 = arith.constant 0 : index
    %35 = vector.load %arg8[%c0_47, %c0_48] : memref<80x72xbf16, #tpu.memory_space<vmem>>, vector<80x8xbf16>
    tpu.vector_store %arg8[%c0_47, %c0_48], %34 {strides = array<i32>} : memref<80x72xbf16, #tpu.memory_space<vmem>>, vector<80x8xbf16>,
    %c0_49 = arith.constant 0 : index
    %c0_50 = arith.constant 0 : index
    %c1_51 = arith.constant 1 : index
    %c0_52 = arith.constant 0 : index
    %36 = vector.load %arg3[%c0_49, %c0_50, %c1_51, %c0_52] : memref<1x1x104x8xbf16, #tpu.memory_space<vmem>>, vector<1x1x80x8xbf16>
    %37 = vector.shape_cast %36 : vector<1x1x80x8xbf16> to vector<80x8xbf16>
    %c0_53 = arith.constant 0 : index
    %c8_54 = arith.constant 8 : index
    %38 = vector.load %arg8[%c0_53, %c8_54] : memref<80x72xbf16, #tpu.memory_space<vmem>>, vector<80x8xbf16>
    tpu.vector_store %arg8[%c0_53, %c8_54], %37 {strides = array<i32>} : memref<80x72xbf16, #tpu.memory_space<vmem>>, vector<80x8xbf16>,
    %c0_55 = arith.constant 0 : index
    %c0_56 = arith.constant 0 : index
    %c2_57 = arith.constant 2 : index
    %c0_58 = arith.constant 0 : index
    %39 = vector.load %arg3[%c0_55, %c0_56, %c2_57, %c0_58] : memref<1x1x104x8xbf16, #tpu.memory_space<vmem>>, vector<1x1x80x8xbf16>
    %40 = vector.shape_cast %39 : vector<1x1x80x8xbf16> to vector<80x8xbf16>
    %c0_59 = arith.constant 0 : index
    %c16_60 = arith.constant 16 : index
    %41 = vector.load %arg8[%c0_59, %c16_60] : memref<80x72xbf16, #tpu.memory_space<vmem>>, vector<80x8xbf16>
    tpu.vector_store %arg8[%c0_59, %c16_60], %40 {strides = array<i32>} : memref<80x72xbf16, #tpu.memory_space<vmem>>, vector<80x8xbf16>,
    %c0_61 = arith.constant 0 : index
    %c0_62 = arith.constant 0 : index
    %c10_63 = arith.constant 10 : index
    %c0_64 = arith.constant 0 : index
    %42 = vector.load %arg3[%c0_61, %c0_62, %c10_63, %c0_64] : memref<1x1x104x8xbf16, #tpu.memory_space<vmem>>, vector<1x1x80x8xbf16>
    %43 = vector.shape_cast %42 : vector<1x1x80x8xbf16> to vector<80x8xbf16>
    %c0_65 = arith.constant 0 : index
    %c24_66 = arith.constant 24 : index
    %44 = vector.load %arg8[%c0_65, %c24_66] : memref<80x72xbf16, #tpu.memory_space<vmem>>, vector<80x8xbf16>
    tpu.vector_store %arg8[%c0_65, %c24_66], %43 {strides = array<i32>} : memref<80x72xbf16, #tpu.memory_space<vmem>>, vector<80x8xbf16>,
    %c0_67 = arith.constant 0 : index
    %c0_68 = arith.constant 0 : index
    %c11_69 = arith.constant 11 : index
    %c0_70 = arith.constant 0 : index
    %45 = vector.load %arg3[%c0_67, %c0_68, %c11_69, %c0_70] : memref<1x1x104x8xbf16, #tpu.memory_space<vmem>>, vector<1x1x80x8xbf16>
    %46 = vector.shape_cast %45 : vector<1x1x80x8xbf16> to vector<80x8xbf16>
    %c0_71 = arith.constant 0 : index
    %c32_72 = arith.constant 32 : index
    %47 = vector.load %arg8[%c0_71, %c32_72] : memref<80x72xbf16, #tpu.memory_space<vmem>>, vector<80x8xbf16>
    tpu.vector_store %arg8[%c0_71, %c32_72], %46 {strides = array<i32>} : memref<80x72xbf16, #tpu.memory_space<vmem>>, vector<80x8xbf16>,
    %c0_73 = arith.constant 0 : index
    %c0_74 = arith.constant 0 : index
    %c12_75 = arith.constant 12 : index
    %c0_76 = arith.constant 0 : index
    %48 = vector.load %arg3[%c0_73, %c0_74, %c12_75, %c0_76] : memref<1x1x104x8xbf16, #tpu.memory_space<vmem>>, vector<1x1x80x8xbf16>
    %49 = vector.shape_cast %48 : vector<1x1x80x8xbf16> to vector<80x8xbf16>
    %c0_77 = arith.constant 0 : index
    %c40_78 = arith.constant 40 : index
    %50 = vector.load %arg8[%c0_77, %c40_78] : memref<80x72xbf16, #tpu.memory_space<vmem>>, vector<80x8xbf16>
    tpu.vector_store %arg8[%c0_77, %c40_78], %49 {strides = array<i32>} : memref<80x72xbf16, #tpu.memory_space<vmem>>, vector<80x8xbf16>,
    %c0_79 = arith.constant 0 : index
    %c0_80 = arith.constant 0 : index
    %c20_81 = arith.constant 20 : index
    %c0_82 = arith.constant 0 : index
    %51 = vector.load %arg3[%c0_79, %c0_80, %c20_81, %c0_82] : memref<1x1x104x8xbf16, #tpu.memory_space<vmem>>, vector<1x1x80x8xbf16>
    %52 = vector.shape_cast %51 : vector<1x1x80x8xbf16> to vector<80x8xbf16>
    %c0_83 = arith.constant 0 : index
    %c48_84 = arith.constant 48 : index
    %53 = vector.load %arg8[%c0_83, %c48_84] : memref<80x72xbf16, #tpu.memory_space<vmem>>, vector<80x8xbf16>
    tpu.vector_store %arg8[%c0_83, %c48_84], %52 {strides = array<i32>} : memref<80x72xbf16, #tpu.memory_space<vmem>>, vector<80x8xbf16>,
    %c0_85 = arith.constant 0 : index
    %c0_86 = arith.constant 0 : index
    %c21_87 = arith.constant 21 : index
    %c0_88 = arith.constant 0 : index
    %54 = vector.load %arg3[%c0_85, %c0_86, %c21_87, %c0_88] : memref<1x1x104x8xbf16, #tpu.memory_space<vmem>>, vector<1x1x80x8xbf16>
    %55 = vector.shape_cast %54 : vector<1x1x80x8xbf16> to vector<80x8xbf16>
    %c0_89 = arith.constant 0 : index
    %c56_90 = arith.constant 56 : index
    %56 = vector.load %arg8[%c0_89, %c56_90] : memref<80x72xbf16, #tpu.memory_space<vmem>>, vector<80x8xbf16>
    tpu.vector_store %arg8[%c0_89, %c56_90], %55 {strides = array<i32>} : memref<80x72xbf16, #tpu.memory_space<vmem>>, vector<80x8xbf16>,
    %c0_91 = arith.constant 0 : index
    %c0_92 = arith.constant 0 : index
    %c22_93 = arith.constant 22 : index
    %c0_94 = arith.constant 0 : index
    %57 = vector.load %arg3[%c0_91, %c0_92, %c22_93, %c0_94] : memref<1x1x104x8xbf16, #tpu.memory_space<vmem>>, vector<1x1x80x8xbf16>
    %58 = vector.shape_cast %57 : vector<1x1x80x8xbf16> to vector<80x8xbf16>
    %c0_95 = arith.constant 0 : index
    %c64_96 = arith.constant 64 : index
    %59 = vector.load %arg8[%c0_95, %c64_96] : memref<80x72xbf16, #tpu.memory_space<vmem>>, vector<80x8xbf16>
    tpu.vector_store %arg8[%c0_95, %c64_96], %58 {strides = array<i32>} : memref<80x72xbf16, #tpu.memory_space<vmem>>, vector<80x8xbf16>,
    %c0_97 = arith.constant 0 : index
    %c0_98 = arith.constant 0 : index
    %60 = vector.load %arg8[%c0_97, %c0_98] : memref<80x72xbf16, #tpu.memory_space<vmem>>, vector<80x72xbf16>
    %c1_99 = arith.constant 1 : index
    %c0_100 = arith.constant 0 : index
    %c0_101 = arith.constant 0 : index
    %61 = vector.load %arg5[%c1_99, %c0_100, %c0_101] : memref<3x72x8xbf16, #tpu.memory_space<vmem>>, vector<1x72x8xbf16>
    %62 = vector.shape_cast %61 : vector<1x72x8xbf16> to vector<72x8xbf16>
    %cst_102 = arith.constant dense<0.000000e+00> : vector<80x8xf32>
    %63 = tpu.matmul %60, %62, %cst_102 {dimension_numbers = #tpu.dot_dimension_numbers<[1], [0], [0], [1], [0, 0, 1, 1], [], []>} : vector<80x72xbf16>, vector<72x8xbf16>, vector<80x8xf32> -> vector<80x8xf32>
    %64 = arith.addf %32, %63 : vector<80x8xf32>
    %c0_103 = arith.constant 0 : index
    %c0_104 = arith.constant 0 : index
    %c0_105 = arith.constant 0 : index
    %c0_106 = arith.constant 0 : index
    %65 = vector.load %arg4[%c0_103, %c0_104, %c0_105, %c0_106] : memref<1x1x104x8xbf16, #tpu.memory_space<vmem>>, vector<1x1x80x8xbf16>
    %66 = vector.shape_cast %65 : vector<1x1x80x8xbf16> to vector<80x8xbf16>
    %c0_107 = arith.constant 0 : index
    %c0_108 = arith.constant 0 : index
    %67 = vector.load %arg8[%c0_107, %c0_108] : memref<80x72xbf16, #tpu.memory_space<vmem>>, vector<80x8xbf16>
    tpu.vector_store %arg8[%c0_107, %c0_108], %66 {strides = array<i32>} : memref<80x72xbf16, #tpu.memory_space<vmem>>, vector<80x8xbf16>,
    %c0_109 = arith.constant 0 : index
    %c0_110 = arith.constant 0 : index
    %c1_111 = arith.constant 1 : index
    %c0_112 = arith.constant 0 : index
    %68 = vector.load %arg4[%c0_109, %c0_110, %c1_111, %c0_112] : memref<1x1x104x8xbf16, #tpu.memory_space<vmem>>, vector<1x1x80x8xbf16>
    %69 = vector.shape_cast %68 : vector<1x1x80x8xbf16> to vector<80x8xbf16>
    %c0_113 = arith.constant 0 : index
    %c8_114 = arith.constant 8 : index
    %70 = vector.load %arg8[%c0_113, %c8_114] : memref<80x72xbf16, #tpu.memory_space<vmem>>, vector<80x8xbf16>
    tpu.vector_store %arg8[%c0_113, %c8_114], %69 {strides = array<i32>} : memref<80x72xbf16, #tpu.memory_space<vmem>>, vector<80x8xbf16>,
    %c0_115 = arith.constant 0 : index
    %c0_116 = arith.constant 0 : index
    %c2_117 = arith.constant 2 : index
    %c0_118 = arith.constant 0 : index
    %71 = vector.load %arg4[%c0_115, %c0_116, %c2_117, %c0_118] : memref<1x1x104x8xbf16, #tpu.memory_space<vmem>>, vector<1x1x80x8xbf16>
    %72 = vector.shape_cast %71 : vector<1x1x80x8xbf16> to vector<80x8xbf16>
    %c0_119 = arith.constant 0 : index
    %c16_120 = arith.constant 16 : index
    %73 = vector.load %arg8[%c0_119, %c16_120] : memref<80x72xbf16, #tpu.memory_space<vmem>>, vector<80x8xbf16>
    tpu.vector_store %arg8[%c0_119, %c16_120], %72 {strides = array<i32>} : memref<80x72xbf16, #tpu.memory_space<vmem>>, vector<80x8xbf16>,
    %c0_121 = arith.constant 0 : index
    %c0_122 = arith.constant 0 : index
    %c10_123 = arith.constant 10 : index
    %c0_124 = arith.constant 0 : index
    %74 = vector.load %arg4[%c0_121, %c0_122, %c10_123, %c0_124] : memref<1x1x104x8xbf16, #tpu.memory_space<vmem>>, vector<1x1x80x8xbf16>
    %75 = vector.shape_cast %74 : vector<1x1x80x8xbf16> to vector<80x8xbf16>
    %c0_125 = arith.constant 0 : index
    %c24_126 = arith.constant 24 : index
    %76 = vector.load %arg8[%c0_125, %c24_126] : memref<80x72xbf16, #tpu.memory_space<vmem>>, vector<80x8xbf16>
    tpu.vector_store %arg8[%c0_125, %c24_126], %75 {strides = array<i32>} : memref<80x72xbf16, #tpu.memory_space<vmem>>, vector<80x8xbf16>,
    %c0_127 = arith.constant 0 : index
    %c0_128 = arith.constant 0 : index
    %c11_129 = arith.constant 11 : index
    %c0_130 = arith.constant 0 : index
    %77 = vector.load %arg4[%c0_127, %c0_128, %c11_129, %c0_130] : memref<1x1x104x8xbf16, #tpu.memory_space<vmem>>, vector<1x1x80x8xbf16>
    %78 = vector.shape_cast %77 : vector<1x1x80x8xbf16> to vector<80x8xbf16>
    %c0_131 = arith.constant 0 : index
    %c32_132 = arith.constant 32 : index
    %79 = vector.load %arg8[%c0_131, %c32_132] : memref<80x72xbf16, #tpu.memory_space<vmem>>, vector<80x8xbf16>
    tpu.vector_store %arg8[%c0_131, %c32_132], %78 {strides = array<i32>} : memref<80x72xbf16, #tpu.memory_space<vmem>>, vector<80x8xbf16>,
    %c0_133 = arith.constant 0 : index
    %c0_134 = arith.constant 0 : index
    %c12_135 = arith.constant 12 : index
    %c0_136 = arith.constant 0 : index
    %80 = vector.load %arg4[%c0_133, %c0_134, %c12_135, %c0_136] : memref<1x1x104x8xbf16, #tpu.memory_space<vmem>>, vector<1x1x80x8xbf16>
    %81 = vector.shape_cast %80 : vector<1x1x80x8xbf16> to vector<80x8xbf16>
    %c0_137 = arith.constant 0 : index
    %c40_138 = arith.constant 40 : index
    %82 = vector.load %arg8[%c0_137, %c40_138] : memref<80x72xbf16, #tpu.memory_space<vmem>>, vector<80x8xbf16>
    tpu.vector_store %arg8[%c0_137, %c40_138], %81 {strides = array<i32>} : memref<80x72xbf16, #tpu.memory_space<vmem>>, vector<80x8xbf16>,
    %c0_139 = arith.constant 0 : index
    %c0_140 = arith.constant 0 : index
    %c20_141 = arith.constant 20 : index
    %c0_142 = arith.constant 0 : index
    %83 = vector.load %arg4[%c0_139, %c0_140, %c20_141, %c0_142] : memref<1x1x104x8xbf16, #tpu.memory_space<vmem>>, vector<1x1x80x8xbf16>
    %84 = vector.shape_cast %83 : vector<1x1x80x8xbf16> to vector<80x8xbf16>
    %c0_143 = arith.constant 0 : index
    %c48_144 = arith.constant 48 : index
    %85 = vector.load %arg8[%c0_143, %c48_144] : memref<80x72xbf16, #tpu.memory_space<vmem>>, vector<80x8xbf16>
    tpu.vector_store %arg8[%c0_143, %c48_144], %84 {strides = array<i32>} : memref<80x72xbf16, #tpu.memory_space<vmem>>, vector<80x8xbf16>,
    %c0_145 = arith.constant 0 : index
    %c0_146 = arith.constant 0 : index
    %c21_147 = arith.constant 21 : index
    %c0_148 = arith.constant 0 : index
    %86 = vector.load %arg4[%c0_145, %c0_146, %c21_147, %c0_148] : memref<1x1x104x8xbf16, #tpu.memory_space<vmem>>, vector<1x1x80x8xbf16>
    %87 = vector.shape_cast %86 : vector<1x1x80x8xbf16> to vector<80x8xbf16>
    %c0_149 = arith.constant 0 : index
    %c56_150 = arith.constant 56 : index
    %88 = vector.load %arg8[%c0_149, %c56_150] : memref<80x72xbf16, #tpu.memory_space<vmem>>, vector<80x8xbf16>
    tpu.vector_store %arg8[%c0_149, %c56_150], %87 {strides = array<i32>} : memref<80x72xbf16, #tpu.memory_space<vmem>>, vector<80x8xbf16>,
    %c0_151 = arith.constant 0 : index
    %c0_152 = arith.constant 0 : index
    %c22_153 = arith.constant 22 : index
    %c0_154 = arith.constant 0 : index
    %89 = vector.load %arg4[%c0_151, %c0_152, %c22_153, %c0_154] : memref<1x1x104x8xbf16, #tpu.memory_space<vmem>>, vector<1x1x80x8xbf16>
    %90 = vector.shape_cast %89 : vector<1x1x80x8xbf16> to vector<80x8xbf16>
    %c0_155 = arith.constant 0 : index
    %c64_156 = arith.constant 64 : index
    %91 = vector.load %arg8[%c0_155, %c64_156] : memref<80x72xbf16, #tpu.memory_space<vmem>>, vector<80x8xbf16>
    tpu.vector_store %arg8[%c0_155, %c64_156], %90 {strides = array<i32>} : memref<80x72xbf16, #tpu.memory_space<vmem>>, vector<80x8xbf16>,
    %c0_157 = arith.constant 0 : index
    %c0_158 = arith.constant 0 : index
    %92 = vector.load %arg8[%c0_157, %c0_158] : memref<80x72xbf16, #tpu.memory_space<vmem>>, vector<80x72xbf16>
    %c2_159 = arith.constant 2 : index
    %c0_160 = arith.constant 0 : index
    %c0_161 = arith.constant 0 : index
    %93 = vector.load %arg5[%c2_159, %c0_160, %c0_161] : memref<3x72x8xbf16, #tpu.memory_space<vmem>>, vector<1x72x8xbf16>
    %94 = vector.shape_cast %93 : vector<1x72x8xbf16> to vector<72x8xbf16>
    %cst_162 = arith.constant dense<0.000000e+00> : vector<80x8xf32>
    %95 = tpu.matmul %92, %94, %cst_162 {dimension_numbers = #tpu.dot_dimension_numbers<[1], [0], [0], [1], [0, 0, 1, 1], [], []>} : vector<80x72xbf16>, vector<72x8xbf16>, vector<80x8xf32> -> vector<80x8xf32>
    %96 = arith.addf %64, %95 : vector<80x8xf32>
    %97 = tpu.iota {dimensions = array<i32: 0>} : vector<80x1xi32>
    %c10_i32 = arith.constant 10 : i32
    %c0_i32 = arith.constant 0 : i32
    %98 = arith.cmpi eq, %c10_i32, %c0_i32 : i32
    %c1_i32 = arith.constant 1 : i32
    %99 = arith.select %98, %c1_i32, %c10_i32 : i32
    %100 = vector.broadcast %99 : i32 to vector<80x1xi32>
    %101 = arith.remsi %97, %100 : vector<80x1xi32>
    %c0_i32_163 = arith.constant 0 : i32
    %102 = vector.broadcast %c0_i32_163 : i32 to vector<80x1xi32>
    %103 = arith.cmpi ne, %101, %102 : vector<80x1xi32>
    %c0_i32_164 = arith.constant 0 : i32
    %104 = vector.broadcast %c0_i32_164 : i32 to vector<80x1xi32>
    %105 = arith.cmpi slt, %101, %104 : vector<80x1xi32>
    %c0_i32_165 = arith.constant 0 : i32
    %106 = arith.cmpi slt, %99, %c0_i32_165 : i32
    %107 = vector.broadcast %106 : i1 to vector<80x1xi1>
    %108 = vector.broadcast %107 : vector<80x1xi1> to vector<80x1xi1>
    %109 = arith.xori %105, %108 : vector<80x1xi1>
    %110 = arith.andi %109, %103 : vector<80x1xi1>
    %111 = vector.broadcast %99 : i32 to vector<80x1xi32>
    %112 = arith.addi %101, %111 : vector<80x1xi32>
    %113 = arith.select %110, %112, %101 : vector<80x1xi1>, vector<80x1xi32>
    %c8_i32 = arith.constant 8 : i32
    %114 = vector.broadcast %c8_i32 : i32 to vector<80x1xi32>
    %115 = arith.cmpi slt, %113, %114 : vector<80x1xi32>
    %cst_166 = arith.constant 0.000000e+00 : f32
    %116 = vector.shape_cast %115 : vector<80x1xi1> to vector<80x1xi1>
    %117 = vector.broadcast %116 : vector<80x1xi1> to vector<80x8xi1>
    %118 = vector.broadcast %cst_166 : f32 to vector<80x8xf32>
    %119 = arith.select %117, %96, %118 : vector<80x8xi1>, vector<80x8xf32>
    %120 = arith.truncf %119 : vector<80x8xf32> to vector<80x8xbf16>
    %c0_167 = arith.constant 0 : index
    %c0_168 = arith.constant 0 : index
    %c0_169 = arith.constant 0 : index
    %c0_170 = arith.constant 0 : index
    %121 = vector.load %arg6[%c0_167, %c0_168, %c0_169, %c0_170] : memref<1x1x80x8xbf16, #tpu.memory_space<vmem>>, vector<1x1x80x8xbf16>
    %122 = vector.shape_cast %121 : vector<1x1x80x8xbf16> to vector<80x8xbf16>
    %123 = vector.shape_cast %120 : vector<80x8xbf16> to vector<1x1x80x8xbf16>
    tpu.vector_store %arg6[%c0_167, %c0_168, %c0_169, %c0_170], %123 {strides = array<i32>} : memref<1x1x80x8xbf16, #tpu.memory_space<vmem>>, vector<1x1x80x8xbf16>,
    %cst_171 = arith.constant dense<0.000000e+00> : vector<8xf32>
    %124 = vector.multi_reduction <add>, %119, %cst_171 [0] : vector<80x8xf32> to vector<8xf32>
    %125 = vector.shape_cast %124 : vector<8xf32> to vector<1x8xf32>
    %c0_172 = arith.constant 0 : index
    %c0_173 = arith.constant 0 : index
    %c0_174 = arith.constant 0 : index
    %c0_175 = arith.constant 0 : index
    %126 = vector.load %arg7[%c0_172, %c0_173, %c0_174, %c0_175] : memref<1x1x2x8xf32, #tpu.memory_space<vmem>>, vector<1x1x1x8xf32>
    %127 = vector.shape_cast %126 : vector<1x1x1x8xf32> to vector<1x8xf32>
    %128 = vector.shape_cast %125 : vector<1x8xf32> to vector<1x1x1x8xf32>
    tpu.vector_store %arg7[%c0_172, %c0_173, %c0_174, %c0_175], %128 {strides = array<i32>} : memref<1x1x2x8xf32, #tpu.memory_space<vmem>>, vector<1x1x1x8xf32>,
    %129 = arith.mulf %119, %119 : vector<80x8xf32>
    %cst_176 = arith.constant dense<0.000000e+00> : vector<8xf32>
    %130 = vector.multi_reduction <add>, %129, %cst_176 [0] : vector<80x8xf32> to vector<8xf32>
    %131 = vector.shape_cast %130 : vector<8xf32> to vector<1x8xf32>
    %c0_177 = arith.constant 0 : index
    %c0_178 = arith.constant 0 : index
    %c1_179 = arith.constant 1 : index
    %c0_180 = arith.constant 0 : index
    %132 = vector.load %arg7[%c0_177, %c0_178, %c1_179, %c0_180] : memref<1x1x2x8xf32, #tpu.memory_space<vmem>>, vector<1x1x1x8xf32>
    %133 = vector.shape_cast %132 : vector<1x1x1x8xf32> to vector<1x8xf32>
    %134 = vector.shape_cast %131 : vector<1x8xf32> to vector<1x1x1x8xf32>
    tpu.vector_store %arg7[%c0_177, %c0_178, %c1_179, %c0_180], %134 {strides = array<i32>} : memref<1x1x2x8xf32, #tpu.memory_space<vmem>>, vector<1x1x1x8xf32>,
    return
  }
  func.func @transform_0(%arg0: i32, %arg1: i32) -> (i32, i32, i32, i32) {
    %c0_i32 = arith.constant 0 : i32
    %0 = arith.addi %arg1, %c0_i32 : i32
    %c0_i32_0 = arith.constant 0 : i32
    %c0_i32_1 = arith.constant 0 : i32
    %c0_i32_2 = arith.constant 0 : i32
    return %arg0, %0, %c0_i32_0, %c0_i32_1 : i32, i32, i32, i32
  }
  func.func @transform_1(%arg0: i32, %arg1: i32) -> (i32, i32, i32, i32) {
    %c1_i32 = arith.constant 1 : i32
    %0 = arith.addi %arg1, %c1_i32 : i32
    %c0_i32 = arith.constant 0 : i32
    %c0_i32_0 = arith.constant 0 : i32
    %c0_i32_1 = arith.constant 0 : i32
    return %arg0, %0, %c0_i32, %c0_i32_0 : i32, i32, i32, i32
  }
  func.func @transform_2(%arg0: i32, %arg1: i32) -> (i32, i32, i32, i32) {
    %c2_i32 = arith.constant 2 : i32
    %0 = arith.addi %arg1, %c2_i32 : i32
    %c0_i32 = arith.constant 0 : i32
    %c0_i32_0 = arith.constant 0 : i32
    %c0_i32_1 = arith.constant 0 : i32
    return %arg0, %0, %c0_i32, %c0_i32_0 : i32, i32, i32, i32
  }
  func.func @transform_3(%arg0: i32, %arg1: i32) -> (i32, i32, i32) {
    %c0_i32 = arith.constant 0 : i32
    %c0_i32_0 = arith.constant 0 : i32
    %c0_i32_1 = arith.constant 0 : i32
    %c0_i32_2 = arith.constant 0 : i32
    return %c0_i32, %c0_i32_0, %c0_i32_1 : i32, i32, i32
  }
  func.func @transform_4(%arg0: i32, %arg1: i32) -> (i32, i32, i32, i32) {
    %c0_i32 = arith.constant 0 : i32
    %c0_i32_0 = arith.constant 0 : i32
    %c0_i32_1 = arith.constant 0 : i32
    return %arg0, %arg1, %c0_i32, %c0_i32_0 : i32, i32, i32, i32
  }
  func.func @transform_5(%arg0: i32, %arg1: i32) -> (i32, i32, i32, i32) {
    %c0_i32 = arith.constant 0 : i32
    %c0_i32_0 = arith.constant 0 : i32
    %c0_i32_1 = arith.constant 0 : i32
    return %arg0, %arg1, %c0_i32, %c0_i32_0 : i32, i32, i32, i32
  }
}

module attributes {stable_mosaic.version = 11 : i64} {
  func.func @_bn_relu_pad_kernel(%arg0: i32, %arg1: i32, %arg2: memref<1x1x80x8xbf16, #tpu.memory_space<vmem>>, %arg3: memref<1x8xf32, #tpu.memory_space<vmem>>, %arg4: memref<1x8xf32, #tpu.memory_space<vmem>>, %arg5: memref<1x1x104x8xbf16, #tpu.memory_space<vmem>>) attributes {dimension_semantics = [#tpu.dimension_semantics<parallel>, #tpu.dimension_semantics<parallel>], iteration_bounds = array<i64: 2, 10>, scalar_prefetch = 0 : i64, scratch_operands = 0 : i64, tpu.core_type = #tpu.core_type<tc>, window_params = [{transform_indices = @transform_0, window_bounds = array<i64: 1, 1, 80, 8>}, {pipeline_mode = #tpu.pipeline_mode<synchronous>, transform_indices = @transform_1, window_bounds = array<i64: 1, 8>}, {pipeline_mode = #tpu.pipeline_mode<synchronous>, transform_indices = @transform_2, window_bounds = array<i64: 1, 8>}, {transform_indices = @transform_3, window_bounds = array<i64: 1, 1, 104, 8>}]} {
    %c1_i32 = arith.constant 1 : i32
    %0 = arith.cmpi sge, %arg1, %c1_i32 : i32
    %c9_i32 = arith.constant 9 : i32
    %1 = arith.cmpi slt, %arg1, %c9_i32 : i32
    %2 = arith.andi %0, %1 : i1
    %3 = arith.extui %2 : i1 to i32
    %c0_i32 = arith.constant 0 : i32
    %4 = arith.cmpi ne, %3, %c0_i32 : i32
    scf.if %4 {
      %c0 = arith.constant 0 : index
      %c0_1 = arith.constant 0 : index
      %c0_2 = arith.constant 0 : index
      %c0_3 = arith.constant 0 : index
      %8 = vector.load %arg2[%c0, %c0_1, %c0_2, %c0_3] : memref<1x1x80x8xbf16, #tpu.memory_space<vmem>>, vector<1x1x80x8xbf16>
      %9 = vector.shape_cast %8 : vector<1x1x80x8xbf16> to vector<80x8xbf16>
      %10 = arith.extf %9 : vector<80x8xbf16> to vector<80x8xf32>
      %c0_4 = arith.constant 0 : index
      %c0_5 = arith.constant 0 : index
      %11 = vector.load %arg3[%c0_4, %c0_5] : memref<1x8xf32, #tpu.memory_space<vmem>>, vector<1x8xf32>
      %12 = vector.broadcast %11 : vector<1x8xf32> to vector<80x8xf32>
      %13 = arith.mulf %10, %12 : vector<80x8xf32>
      %c0_6 = arith.constant 0 : index
      %c0_7 = arith.constant 0 : index
      %14 = vector.load %arg4[%c0_6, %c0_7] : memref<1x8xf32, #tpu.memory_space<vmem>>, vector<1x8xf32>
      %15 = vector.broadcast %14 : vector<1x8xf32> to vector<80x8xf32>
      %16 = arith.addf %13, %15 : vector<80x8xf32>
      %cst = arith.constant 0.000000e+00 : f32
      %17 = vector.broadcast %cst : f32 to vector<80x8xf32>
      %18 = arith.maximumf %16, %17 : vector<80x8xf32>
      %19 = tpu.iota {dimensions = array<i32: 0>} : vector<80x1xi32>
      %c10_i32 = arith.constant 10 : i32
      %c0_i32_8 = arith.constant 0 : i32
      %20 = arith.cmpi eq, %c10_i32, %c0_i32_8 : i32
      %c1_i32_9 = arith.constant 1 : i32
      %21 = arith.select %20, %c1_i32_9, %c10_i32 : i32
      %22 = vector.broadcast %21 : i32 to vector<80x1xi32>
      %23 = arith.remsi %19, %22 : vector<80x1xi32>
      %c0_i32_10 = arith.constant 0 : i32
      %24 = vector.broadcast %c0_i32_10 : i32 to vector<80x1xi32>
      %25 = arith.cmpi ne, %23, %24 : vector<80x1xi32>
      %c0_i32_11 = arith.constant 0 : i32
      %26 = vector.broadcast %c0_i32_11 : i32 to vector<80x1xi32>
      %27 = arith.cmpi slt, %23, %26 : vector<80x1xi32>
      %c0_i32_12 = arith.constant 0 : i32
      %28 = arith.cmpi slt, %21, %c0_i32_12 : i32
      %29 = vector.broadcast %28 : i1 to vector<80x1xi1>
      %30 = vector.broadcast %29 : vector<80x1xi1> to vector<80x1xi1>
      %31 = arith.xori %27, %30 : vector<80x1xi1>
      %32 = arith.andi %31, %25 : vector<80x1xi1>
      %33 = vector.broadcast %21 : i32 to vector<80x1xi32>
      %34 = arith.addi %23, %33 : vector<80x1xi32>
      %35 = arith.select %32, %34, %23 : vector<80x1xi1>, vector<80x1xi32>
      %c8_i32 = arith.constant 8 : i32
      %36 = vector.broadcast %c8_i32 : i32 to vector<80x1xi32>
      %37 = arith.cmpi slt, %35, %36 : vector<80x1xi32>
      %cst_13 = arith.constant 0.000000e+00 : f32
      %38 = vector.shape_cast %37 : vector<80x1xi1> to vector<80x1xi1>
      %39 = vector.broadcast %38 : vector<80x1xi1> to vector<80x8xi1>
      %40 = vector.broadcast %cst_13 : f32 to vector<80x8xf32>
      %41 = arith.select %39, %18, %40 : vector<80x8xi1>, vector<80x8xf32>
      %cst_14 = arith.constant 0.000000e+00 : bf16
      %42 = vector.broadcast %cst_14 : bf16 to vector<11x8xbf16>
      %c0_15 = arith.constant 0 : index
      %c0_16 = arith.constant 0 : index
      %c0_17 = arith.constant 0 : index
      %c0_18 = arith.constant 0 : index
      %43 = vector.load %arg5[%c0_15, %c0_16, %c0_17, %c0_18] : memref<1x1x104x8xbf16, #tpu.memory_space<vmem>>, vector<1x1x11x8xbf16>
      %44 = vector.shape_cast %43 : vector<1x1x11x8xbf16> to vector<11x8xbf16>
      %45 = vector.shape_cast %42 : vector<11x8xbf16> to vector<1x1x11x8xbf16>
      tpu.vector_store %arg5[%c0_15, %c0_16, %c0_17, %c0_18], %45 {strides = array<i32>} : memref<1x1x104x8xbf16, #tpu.memory_space<vmem>>, vector<1x1x11x8xbf16>,
      %46 = arith.truncf %41 : vector<80x8xf32> to vector<80x8xbf16>
      %c0_19 = arith.constant 0 : index
      %c0_20 = arith.constant 0 : index
      %c11 = arith.constant 11 : index
      %c0_21 = arith.constant 0 : index
      %47 = vector.load %arg5[%c0_19, %c0_20, %c11, %c0_21] : memref<1x1x104x8xbf16, #tpu.memory_space<vmem>>, vector<1x1x80x8xbf16>
      %48 = vector.shape_cast %47 : vector<1x1x80x8xbf16> to vector<80x8xbf16>
      %49 = vector.shape_cast %46 : vector<80x8xbf16> to vector<1x1x80x8xbf16>
      tpu.vector_store %arg5[%c0_19, %c0_20, %c11, %c0_21], %49 {strides = array<i32>} : memref<1x1x104x8xbf16, #tpu.memory_space<vmem>>, vector<1x1x80x8xbf16>,
      %cst_22 = arith.constant 0.000000e+00 : bf16
      %50 = vector.broadcast %cst_22 : bf16 to vector<13x8xbf16>
      %c0_23 = arith.constant 0 : index
      %c0_24 = arith.constant 0 : index
      %c91 = arith.constant 91 : index
      %c0_25 = arith.constant 0 : index
      %51 = vector.load %arg5[%c0_23, %c0_24, %c91, %c0_25] : memref<1x1x104x8xbf16, #tpu.memory_space<vmem>>, vector<1x1x13x8xbf16>
      %52 = vector.shape_cast %51 : vector<1x1x13x8xbf16> to vector<13x8xbf16>
      %53 = vector.shape_cast %50 : vector<13x8xbf16> to vector<1x1x13x8xbf16>
      tpu.vector_store %arg5[%c0_23, %c0_24, %c91, %c0_25], %53 {strides = array<i32>} : memref<1x1x104x8xbf16, #tpu.memory_space<vmem>>, vector<1x1x13x8xbf16>,
    } else {
    }
    %true = arith.constant true
    %5 = arith.xori %2, %true : i1
    %6 = arith.extui %5 : i1 to i32
    %c0_i32_0 = arith.constant 0 : i32
    %7 = arith.cmpi ne, %6, %c0_i32_0 : i32
    scf.if %7 {
      %cst = arith.constant 0.000000e+00 : bf16
      %8 = vector.broadcast %cst : bf16 to vector<104x8xbf16>
      %c0 = arith.constant 0 : index
      %c0_1 = arith.constant 0 : index
      %c0_2 = arith.constant 0 : index
      %c0_3 = arith.constant 0 : index
      %9 = vector.load %arg5[%c0, %c0_1, %c0_2, %c0_3] : memref<1x1x104x8xbf16, #tpu.memory_space<vmem>>, vector<1x1x104x8xbf16>
      %10 = vector.shape_cast %9 : vector<1x1x104x8xbf16> to vector<104x8xbf16>
      %11 = vector.shape_cast %8 : vector<104x8xbf16> to vector<1x1x104x8xbf16>
      tpu.vector_store %arg5[%c0, %c0_1, %c0_2, %c0_3], %11 {strides = array<i32>} : memref<1x1x104x8xbf16, #tpu.memory_space<vmem>>, vector<1x1x104x8xbf16>,
    } else {
    }
    return
  }
  func.func @transform_0(%arg0: i32, %arg1: i32) -> (i32, i32, i32, i32) {
    %c1_i32 = arith.constant 1 : i32
    %0 = arith.subi %arg1, %c1_i32 : i32
    %c0_i32 = arith.constant 0 : i32
    %c7_i32 = arith.constant 7 : i32
    %1 = arith.maxsi %c0_i32, %0 : i32
    %2 = arith.minsi %c7_i32, %1 : i32
    %c0_i32_0 = arith.constant 0 : i32
    %c0_i32_1 = arith.constant 0 : i32
    %c0_i32_2 = arith.constant 0 : i32
    return %arg0, %2, %c0_i32_0, %c0_i32_1 : i32, i32, i32, i32
  }
  func.func @transform_1(%arg0: i32, %arg1: i32) -> (i32, i32) {
    %c0_i32 = arith.constant 0 : i32
    %c0_i32_0 = arith.constant 0 : i32
    %c0_i32_1 = arith.constant 0 : i32
    return %c0_i32, %c0_i32_0 : i32, i32
  }
  func.func @transform_2(%arg0: i32, %arg1: i32) -> (i32, i32) {
    %c0_i32 = arith.constant 0 : i32
    %c0_i32_0 = arith.constant 0 : i32
    %c0_i32_1 = arith.constant 0 : i32
    return %c0_i32, %c0_i32_0 : i32, i32
  }
  func.func @transform_3(%arg0: i32, %arg1: i32) -> (i32, i32, i32, i32) {
    %c0_i32 = arith.constant 0 : i32
    %c0_i32_0 = arith.constant 0 : i32
    %c0_i32_1 = arith.constant 0 : i32
    return %arg0, %arg1, %c0_i32, %c0_i32_0 : i32, i32, i32, i32
  }
}

module attributes {stable_mosaic.version = 11 : i64} {
  func.func @_bn_relu_dhpool_kernel(%arg0: i32, %arg1: i32, %arg2: memref<1x2x80x8xbf16, #tpu.memory_space<vmem>>, %arg3: memref<1x8xf32, #tpu.memory_space<vmem>>, %arg4: memref<1x8xf32, #tpu.memory_space<vmem>>, %arg5: memref<1x2x80x8xf32, #tpu.memory_space<vmem>>, %arg6: memref<1x1x4x10x8xf32, #tpu.memory_space<vmem>>) attributes {dimension_semantics = [#tpu.dimension_semantics<parallel>, #tpu.dimension_semantics<parallel>], iteration_bounds = array<i64: 2, 4>, scalar_prefetch = 0 : i64, scratch_operands = 0 : i64, tpu.core_type = #tpu.core_type<tc>, window_params = [{transform_indices = @transform_0, window_bounds = array<i64: 1, 2, 80, 8>}, {pipeline_mode = #tpu.pipeline_mode<synchronous>, transform_indices = @transform_1, window_bounds = array<i64: 1, 8>}, {pipeline_mode = #tpu.pipeline_mode<synchronous>, transform_indices = @transform_2, window_bounds = array<i64: 1, 8>}, {transform_indices = @transform_3, window_bounds = array<i64: 1, 2, 80, 8>}, {transform_indices = @transform_4, window_bounds = array<i64: 1, 1, 4, 10, 8>}]} {
    %c0 = arith.constant 0 : index
    %c0_0 = arith.constant 0 : index
    %c0_1 = arith.constant 0 : index
    %c0_2 = arith.constant 0 : index
    %0 = vector.load %arg2[%c0, %c0_0, %c0_1, %c0_2] : memref<1x2x80x8xbf16, #tpu.memory_space<vmem>>, vector<1x2x80x8xbf16>
    %1 = vector.shape_cast %0 : vector<1x2x80x8xbf16> to vector<2x80x8xbf16>
    %2 = arith.extf %1 : vector<2x80x8xbf16> to vector<2x80x8xf32>
    %c0_3 = arith.constant 0 : index
    %c0_4 = arith.constant 0 : index
    %3 = vector.load %arg3[%c0_3, %c0_4] : memref<1x8xf32, #tpu.memory_space<vmem>>, vector<1x8xf32>
    %4 = vector.shape_cast %3 : vector<1x8xf32> to vector<1x1x8xf32>
    %5 = vector.broadcast %4 : vector<1x1x8xf32> to vector<2x80x8xf32>
    %6 = arith.mulf %2, %5 : vector<2x80x8xf32>
    %c0_5 = arith.constant 0 : index
    %c0_6 = arith.constant 0 : index
    %7 = vector.load %arg4[%c0_5, %c0_6] : memref<1x8xf32, #tpu.memory_space<vmem>>, vector<1x8xf32>
    %8 = vector.shape_cast %7 : vector<1x8xf32> to vector<1x1x8xf32>
    %9 = vector.broadcast %8 : vector<1x1x8xf32> to vector<2x80x8xf32>
    %10 = arith.addf %6, %9 : vector<2x80x8xf32>
    %cst = arith.constant 0.000000e+00 : f32
    %11 = vector.broadcast %cst : f32 to vector<2x80x8xf32>
    %12 = arith.maximumf %10, %11 : vector<2x80x8xf32>
    %c0_7 = arith.constant 0 : index
    %c0_8 = arith.constant 0 : index
    %c0_9 = arith.constant 0 : index
    %c0_10 = arith.constant 0 : index
    %13 = vector.load %arg5[%c0_7, %c0_8, %c0_9, %c0_10] : memref<1x2x80x8xf32, #tpu.memory_space<vmem>>, vector<1x2x80x8xf32>
    %14 = vector.shape_cast %13 : vector<1x2x80x8xf32> to vector<2x80x8xf32>
    %15 = vector.shape_cast %12 : vector<2x80x8xf32> to vector<1x2x80x8xf32>
    tpu.vector_store %arg5[%c0_7, %c0_8, %c0_9, %c0_10], %15 {strides = array<i32>} : memref<1x2x80x8xf32, #tpu.memory_space<vmem>>, vector<1x2x80x8xf32>,
    %16 = vector.extract_strided_slice %12 {offsets = [0, 0, 0], sizes = [1, 80, 8], strides = [1, 1, 1]} : vector<2x80x8xf32> to vector<1x80x8xf32>
    %17 = vector.shape_cast %16 : vector<1x80x8xf32> to vector<80x8xf32>
    %18 = vector.extract_strided_slice %12 {offsets = [1, 0, 0], sizes = [1, 80, 8], strides = [1, 1, 1]} : vector<2x80x8xf32> to vector<1x80x8xf32>
    %19 = vector.shape_cast %18 : vector<1x80x8xf32> to vector<80x8xf32>
    %20 = arith.maximumf %17, %19 : vector<80x8xf32>
    %21 = vector.extract_strided_slice %20 {offsets = [0, 0], sizes = [10, 8], strides = [1, 1]} : vector<80x8xf32> to vector<10x8xf32>
    %22 = vector.extract_strided_slice %20 {offsets = [10, 0], sizes = [10, 8], strides = [1, 1]} : vector<80x8xf32> to vector<10x8xf32>
    %23 = arith.maximumf %21, %22 : vector<10x8xf32>
    %c0_11 = arith.constant 0 : index
    %c0_12 = arith.constant 0 : index
    %c0_13 = arith.constant 0 : index
    %c0_14 = arith.constant 0 : index
    %c0_15 = arith.constant 0 : index
    %24 = vector.load %arg6[%c0_11, %c0_12, %c0_13, %c0_14, %c0_15] : memref<1x1x4x10x8xf32, #tpu.memory_space<vmem>>, vector<1x1x1x10x8xf32>
    %25 = vector.shape_cast %24 : vector<1x1x1x10x8xf32> to vector<10x8xf32>
    %26 = vector.shape_cast %23 : vector<10x8xf32> to vector<1x1x1x10x8xf32>
    tpu.vector_store %arg6[%c0_11, %c0_12, %c0_13, %c0_14, %c0_15], %26 {strides = array<i32>} : memref<1x1x4x10x8xf32, #tpu.memory_space<vmem>>, vector<1x1x1x10x8xf32>,
    %27 = vector.extract_strided_slice %20 {offsets = [20, 0], sizes = [10, 8], strides = [1, 1]} : vector<80x8xf32> to vector<10x8xf32>
    %28 = vector.extract_strided_slice %20 {offsets = [30, 0], sizes = [10, 8], strides = [1, 1]} : vector<80x8xf32> to vector<10x8xf32>
    %29 = arith.maximumf %27, %28 : vector<10x8xf32>
    %c0_16 = arith.constant 0 : index
    %c0_17 = arith.constant 0 : index
    %c1 = arith.constant 1 : index
    %c0_18 = arith.constant 0 : index
    %c0_19 = arith.constant 0 : index
    %30 = vector.load %arg6[%c0_16, %c0_17, %c1, %c0_18, %c0_19] : memref<1x1x4x10x8xf32, #tpu.memory_space<vmem>>, vector<1x1x1x10x8xf32>
    %31 = vector.shape_cast %30 : vector<1x1x1x10x8xf32> to vector<10x8xf32>
    %32 = vector.shape_cast %29 : vector<10x8xf32> to vector<1x1x1x10x8xf32>
    tpu.vector_store %arg6[%c0_16, %c0_17, %c1, %c0_18, %c0_19], %32 {strides = array<i32>} : memref<1x1x4x10x8xf32, #tpu.memory_space<vmem>>, vector<1x1x1x10x8xf32>,
    %33 = vector.extract_strided_slice %20 {offsets = [40, 0], sizes = [10, 8], strides = [1, 1]} : vector<80x8xf32> to vector<10x8xf32>
    %34 = vector.extract_strided_slice %20 {offsets = [50, 0], sizes = [10, 8], strides = [1, 1]} : vector<80x8xf32> to vector<10x8xf32>
    %35 = arith.maximumf %33, %34 : vector<10x8xf32>
    %c0_20 = arith.constant 0 : index
    %c0_21 = arith.constant 0 : index
    %c2 = arith.constant 2 : index
    %c0_22 = arith.constant 0 : index
    %c0_23 = arith.constant 0 : index
    %36 = vector.load %arg6[%c0_20, %c0_21, %c2, %c0_22, %c0_23] : memref<1x1x4x10x8xf32, #tpu.memory_space<vmem>>, vector<1x1x1x10x8xf32>
    %37 = vector.shape_cast %36 : vector<1x1x1x10x8xf32> to vector<10x8xf32>
    %38 = vector.shape_cast %35 : vector<10x8xf32> to vector<1x1x1x10x8xf32>
    tpu.vector_store %arg6[%c0_20, %c0_21, %c2, %c0_22, %c0_23], %38 {strides = array<i32>} : memref<1x1x4x10x8xf32, #tpu.memory_space<vmem>>, vector<1x1x1x10x8xf32>,
    %39 = vector.extract_strided_slice %20 {offsets = [60, 0], sizes = [10, 8], strides = [1, 1]} : vector<80x8xf32> to vector<10x8xf32>
    %40 = vector.extract_strided_slice %20 {offsets = [70, 0], sizes = [10, 8], strides = [1, 1]} : vector<80x8xf32> to vector<10x8xf32>
    %41 = arith.maximumf %39, %40 : vector<10x8xf32>
    %c0_24 = arith.constant 0 : index
    %c0_25 = arith.constant 0 : index
    %c3 = arith.constant 3 : index
    %c0_26 = arith.constant 0 : index
    %c0_27 = arith.constant 0 : index
    %42 = vector.load %arg6[%c0_24, %c0_25, %c3, %c0_26, %c0_27] : memref<1x1x4x10x8xf32, #tpu.memory_space<vmem>>, vector<1x1x1x10x8xf32>
    %43 = vector.shape_cast %42 : vector<1x1x1x10x8xf32> to vector<10x8xf32>
    %44 = vector.shape_cast %41 : vector<10x8xf32> to vector<1x1x1x10x8xf32>
    tpu.vector_store %arg6[%c0_24, %c0_25, %c3, %c0_26, %c0_27], %44 {strides = array<i32>} : memref<1x1x4x10x8xf32, #tpu.memory_space<vmem>>, vector<1x1x1x10x8xf32>,
    return
  }
  func.func @transform_0(%arg0: i32, %arg1: i32) -> (i32, i32, i32, i32) {
    %c0_i32 = arith.constant 0 : i32
    %c0_i32_0 = arith.constant 0 : i32
    %c0_i32_1 = arith.constant 0 : i32
    return %arg0, %arg1, %c0_i32, %c0_i32_0 : i32, i32, i32, i32
  }
  func.func @transform_1(%arg0: i32, %arg1: i32) -> (i32, i32) {
    %c0_i32 = arith.constant 0 : i32
    %c0_i32_0 = arith.constant 0 : i32
    %c0_i32_1 = arith.constant 0 : i32
    return %c0_i32, %c0_i32_0 : i32, i32
  }
  func.func @transform_2(%arg0: i32, %arg1: i32) -> (i32, i32) {
    %c0_i32 = arith.constant 0 : i32
    %c0_i32_0 = arith.constant 0 : i32
    %c0_i32_1 = arith.constant 0 : i32
    return %c0_i32, %c0_i32_0 : i32, i32
  }
  func.func @transform_3(%arg0: i32, %arg1: i32) -> (i32, i32, i32, i32) {
    %c0_i32 = arith.constant 0 : i32
    %c0_i32_0 = arith.constant 0 : i32
    %c0_i32_1 = arith.constant 0 : i32
    return %arg0, %arg1, %c0_i32, %c0_i32_0 : i32, i32, i32, i32
  }
  func.func @transform_4(%arg0: i32, %arg1: i32) -> (i32, i32, i32, i32, i32) {
    %c0_i32 = arith.constant 0 : i32
    %c0_i32_0 = arith.constant 0 : i32
    %c0_i32_1 = arith.constant 0 : i32
    %c0_i32_2 = arith.constant 0 : i32
    return %arg0, %arg1, %c0_i32, %c0_i32_0, %c0_i32_1 : i32, i32, i32, i32, i32
  }
}

</mosaic_0001>

<llo_original>
// kernel: down_block_forward.7
$region0: #{down_block_forward.7}
  #allocation0 [shape = 'u32[]', space=smem, size = 0x4, offset = 0x4, fixed_abs, tag = 'smem constant byte address 0x4 - core index']
  #allocation1 [shape = 'u32[144,128]{1,0:T(1,128)}', space=vmem, size = 0x12000, scoped, tag = 'internal scratch']
  %s0 = inlined_call_operand.vmem [shape: bf16[2,8,80,8], index: 0, kind: input, shape index: {}]
  %s1 = inlined_call_operand.vmem [shape: f32[1,8], index: 1, kind: input, shape index: {}]
  %s2 = inlined_call_operand.vmem [shape: f32[1,8], index: 2, kind: input, shape index: {}]
  %s3 = inlined_call_operand.vmem [shape: f32[2,8,80,8], index: 3, kind: output, shape index: {0}]
  %s4 = inlined_call_operand.vmem [shape: f32[2,4,4,10,8], index: 4, kind: output, shape index: {1}]
  %5 = xla_tuple %s3, %s4
  %s6 = sld [smem:[#allocation0]]
  $region53: #{down_block_forward.7} parent=0
    _
  %s8 = ssub.s32 1, %s6
  %s9 = scalar_select 0, %s8, %s6
  loop: start=0, step=1, limit=10
  $region2: #{down_block_forward.7} parent=0 // loop_pre_header
    _
  $region3: #{down_block_forward.7} parent=0 // loop_header
    %s11 = sphi 0, %s15
    %p12 = scmp.ge.s32.totalorder %s11, 10
    %s18 = sphi 0, %s30
    %s19 = sphi 0, %s26
    %s20 = sphi 0, %s18
    %s21 = sphi 0, %s19
    %s22 = sphi 0, %s20
    %s23 = sphi 0, %s21
    %s35 = sphi 0, %s37
    %s38 = sphi 0, %s35
    %s39 = sphi 0, %s38
    %s55 = sphi 0, %s39
    %s59 = sphi 0, %s59
    %s61 = sphi 0, %s59
    %s62 = sphi 0, %s61
    %s76 = sphi 0, %s62
    %s80 = sphi 0, %s80
    %s82 = sphi 0, %s80
    %s83 = sphi 0, %s82
    %s97 = sphi 0, %s83
    %s105 = sphi 0, %s107
    %s108 = sphi 0, %s105
    %s109 = sphi 0, %s108
    %s125 = sphi 0, %s109
    %s133 = sphi 0, %s135
    %s136 = sphi 0, %s133
    %s137 = sphi 0, %s136
    %s153 = sphi 0, %s137
  $region4: #{down_block_forward.7} parent=0 // loop_header_branch
    %14 = sbr.rel (%p12) target = $region8
  $region5: #{down_block_forward.7} parent=0 // loop_body
    %s16 = ssub.s32 %s11, 1
    %s17 = ssub.s32 %s11, 2
    %s24 = sadd.s32 1, %s19
    %p25 = scmp.ge.s32.totalorder %s24, 4
    %s26 = scalar_select %p25, 0, %s24
    %s27 = sadd.s32 1, %s18
    %s28 = scalar_select %p25, %s27, %s18
    %p29 = scmp.ge.s32.totalorder %s28, 2
    %s30 = scalar_select %p29, 0, %s28
    %s31 = ssub.s32 %s18, %s30
    %s32 = ssub.s32 %s19, %s26
    %s33 = sor.u32 %s31, %s32
    %p34 = scmp.eq.s32.totalorder %s33, 0
    %s36 = sadd.s32 %s35, 1
    %s37 = scalar_select %p34, %s35, %s36
    %p40 = pneg %p34
    %p41 = scmp.eq.s32.totalorder %s11, 7
    %p42 = por %p40, %p41
    %p43 = scmp.ne.s32.totalorder %s35, %s38
    %p44 = scmp.eq.s32.totalorder %s11, 0
    %p45 = por %p43, %p44
    %p46 = scmp.ne.s32.totalorder %s35, %s38
    %p47 = scmp.eq.s32.totalorder %s16, 7
    %p48 = por %p46, %p47
    %p49 = scmp.ne.s32.totalorder %s38, %s39
    %p50 = scmp.eq.s32.totalorder %s16, 0
    %p51 = por %p49, %p50
    %p52 = scmp.ne.s32.totalorder %s38, %s39
    %p53 = scmp.eq.s32.totalorder %s17, 7
    %p54 = por %p52, %p53
    %p56 = scmp.ne.s32.totalorder %s39, %s55
    %p57 = scmp.eq.s32.totalorder %s17, 0
    %p58 = por %p56, %p57
    %s60 = sadd.s32 %s59, 1
    %p63 = scmp.eq.s32.totalorder %s11, 7
    %p64 = scmp.ne.s32.totalorder %s59, %s61
    %p65 = scmp.eq.s32.totalorder %s11, 0
    %p66 = por %p64, %p65
    %p67 = scmp.ne.s32.totalorder %s59, %s61
    %p68 = scmp.eq.s32.totalorder %s16, 7
    %p69 = por %p67, %p68
    %p70 = scmp.ne.s32.totalorder %s61, %s62
    %p71 = scmp.eq.s32.totalorder %s16, 0
    %p72 = por %p70, %p71
    %p73 = scmp.ne.s32.totalorder %s61, %s62
    %p74 = scmp.eq.s32.totalorder %s17, 7
    %p75 = por %p73, %p74
    %p77 = scmp.ne.s32.totalorder %s62, %s76
    %p78 = scmp.eq.s32.totalorder %s17, 0
    %p79 = por %p77, %p78
    %s81 = sadd.s32 %s80, 1
    %p84 = scmp.eq.s32.totalorder %s11, 7
    %p85 = scmp.ne.s32.totalorder %s80, %s82
    %p86 = scmp.eq.s32.totalorder %s11, 0
    %p87 = por %p85, %p86
    %p88 = scmp.ne.s32.totalorder %s80, %s82
    %p89 = scmp.eq.s32.totalorder %s16, 7
    %p90 = por %p88, %p89
    %p91 = scmp.ne.s32.totalorder %s82, %s83
    %p92 = scmp.eq.s32.totalorder %s16, 0
    %p93 = por %p91, %p92
    %p94 = scmp.ne.s32.totalorder %s82, %s83
    %p95 = scmp.eq.s32.totalorder %s17, 7
    %p96 = por %p94, %p95
    %p98 = scmp.ne.s32.totalorder %s83, %s97
    %p99 = scmp.eq.s32.totalorder %s17, 0
    %p100 = por %p98, %p99
    %s101 = ssub.s32 %s18, %s30
    %s102 = ssub.s32 %s19, %s26
    %s103 = sor.u32 %s101, %s102
    %p104 = scmp.eq.s32.totalorder %s103, 0
    %s106 = sadd.s32 %s105, 1
    %s107 = scalar_select %p104, %s105, %s106
    %p110 = pneg %p104
    %p111 = scmp.eq.s32.totalorder %s11, 7
    %p112 = por %p110, %p111
    %p113 = scmp.ne.s32.totalorder %s105, %s108
    %p114 = scmp.eq.s32.totalorder %s11, 0
    %p115 = por %p113, %p114
    %p116 = scmp.ne.s32.totalorder %s105, %s108
    %p117 = scmp.eq.s32.totalorder %s16, 7
    %p118 = por %p116, %p117
    %p119 = scmp.ne.s32.totalorder %s108, %s109
    %p120 = scmp.eq.s32.totalorder %s16, 0
    %p121 = por %p119, %p120
    %p122 = scmp.ne.s32.totalorder %s108, %s109
    %p123 = scmp.eq.s32.totalorder %s17, 7
    %p124 = por %p122, %p123
    %p126 = scmp.ne.s32.totalorder %s109, %s125
    %p127 = scmp.eq.s32.totalorder %s17, 0
    %p128 = por %p126, %p127
    %s129 = ssub.s32 %s18, %s30
    %s130 = ssub.s32 %s19, %s26
    %s131 = sor.u32 %s129, %s130
    %p132 = scmp.eq.s32.totalorder %s131, 0
    %s134 = sadd.s32 %s133, 1
    %s135 = scalar_select %p132, %s133, %s134
    %p138 = pneg %p132
    %p139 = scmp.eq.s32.totalorder %s11, 7
    %p140 = por %p138, %p139
    %p141 = scmp.ne.s32.totalorder %s133, %s136
    %p142 = scmp.eq.s32.totalorder %s11, 0
    %p143 = por %p141, %p142
    %p144 = scmp.ne.s32.totalorder %s133, %s136
    %p145 = scmp.eq.s32.totalorder %s16, 7
    %p146 = por %p144, %p145
    %p147 = scmp.ne.s32.totalorder %s136, %s137
    %p148 = scmp.eq.s32.totalorder %s16, 0
    %p149 = por %p147, %p148
    %p150 = scmp.ne.s32.totalorder %s136, %s137
    %p151 = scmp.eq.s32.totalorder %s17, 7
    %p152 = por %p150, %p151
    %p154 = scmp.ne.s32.totalorder %s137, %s153
    %p155 = scmp.eq.s32.totalorder %s17, 0
    %p156 = por %p154, %p155
    %p157 = scmp.le.s32.totalorder 1, %s11
    %p158 = scmp.lt.s32.totalorder %s11, 9
    %p159 = pnand %p157, %p158
    %p160 = pneg %p159
    // Predicated region
    $region9: #{down_block_forward.7} parent=5 // pred_check
      _
    $region10: #{down_block_forward.7} parent=5 // pred_check_branch
      %162 = sbr.rel (%p159) target = $region12
    $region11: #{down_block_forward.7} parent=5 // pred_region
      %s163 = ssub.s32 %s11, 1
      // Predicated region
      $region13: #{down_block_forward.7} parent=11 // pred_check
        %p164 = pneg %p72
      $region14: #{down_block_forward.7} parent=11 // pred_check_branch
        %166 = sbr.rel (%p164) target = $region16
      $region15: #{down_block_forward.7} parent=11 // pred_region
        _
      $region16: #{down_block_forward.7} parent=11 // pred_fallthru
        _
      // Predicated region
      $region17: #{down_block_forward.7} parent=11 // pred_check
        %p167 = pneg %p93
      $region18: #{down_block_forward.7} parent=11 // pred_check_branch
        %169 = sbr.rel (%p167) target = $region20
      $region19: #{down_block_forward.7} parent=11 // pred_region
        _
      $region20: #{down_block_forward.7} parent=11 // pred_fallthru
        _
    $region12: #{down_block_forward.7} parent=5 // pred_fallthru
      _
    %p170 = scmp.lt.s32.totalorder %s11, 8
    // Predicated region
    $region21: #{down_block_forward.7} parent=5 // pred_check
      %p171 = pneg %p170
    $region22: #{down_block_forward.7} parent=5 // pred_check_branch
      %173 = sbr.rel (%p171) target = $region24
    $region23: #{down_block_forward.7} parent=5 // pred_region
      // Predicated region
      $region25: #{down_block_forward.7} parent=23 // pred_check
        %p174 = pneg %p45
      $region26: #{down_block_forward.7} parent=23 // pred_check_branch
        %176 = sbr.rel (%p174) target = $region28
      $region27: #{down_block_forward.7} parent=23 // pred_region
        %s177 = smul.u32 2, %s19
        %p178 = scmp.lt.s32.totalorder %s18, 1
        %s179 = scalar_select %p178, %s18, 1
        %p180 = scmp.lt.s32.totalorder %s177, 7
        %s181 = scalar_select %p180, %s177, 7
        %s182 = smul.addr %s181, 10
        %s183 = smul.addr %s179, 80
        %s184 = sadd.s32 %s182, %s183
        %s185 = smul.addr %s184, 4
        %s186 = scalar_lea.vmem %s0, %s185
        %s187 = smul.u32 2, %s19
      $region28: #{down_block_forward.7} parent=23 // pred_fallthru
        _
    $region24: #{down_block_forward.7} parent=5 // pred_fallthru
      _
    %p188 = scmp.le.s32.totalorder 1, %s11
    %p189 = scmp.lt.s32.totalorder %s11, 9
    %p190 = pnand %p188, %p189
    %p191 = pneg %p190
    // Predicated region
    $region29: #{down_block_forward.7} parent=5 // pred_check
      _
    $region30: #{down_block_forward.7} parent=5 // pred_check_branch
      %193 = sbr.rel (%p190) target = $region32
    $region31: #{down_block_forward.7} parent=5 // pred_region
      %s194 = ssub.s32 %s11, 1
      %s195 = smul.u32 2, %s21
      %p196 = scmp.lt.s32.totalorder %s20, 1
      %s197 = scalar_select %p196, %s20, 1
      %p198 = scmp.lt.s32.totalorder %s195, 7
      %s199 = scalar_select %p198, %s195, 7
      %s200 = smul.addr %s199, 10
      %s201 = smul.addr %s197, 80
      %s202 = sadd.s32 %s200, %s201
      %s203 = smul.addr %s202, 4
      %s204 = scalar_lea.vmem %s0, %s203
      %p205 = pneg %p51
      %p206 = pneg %p48
      %p207 = pneg %p72
      %p208 = pneg %p69
      %p209 = pneg %p93
      %p210 = pneg %p90
      %p211 = pneg %p121
      %p212 = pneg %p118
      %s213 = smul.u32 2, %s21
      %p214 = scmp.lt.s32.totalorder %s20, 1
      %s215 = scalar_select %p214, %s20, 1
      %p216 = scmp.lt.s32.totalorder %s213, 7
      %s217 = scalar_select %p216, %s213, 7
      %s218 = smul.addr %s217, 10
      %s219 = smul.addr %s215, 80
      %s220 = sadd.s32 %s218, %s219
      %s221 = smul.addr %s220, 8
      %s222 = scalar_lea.vmem %s3, %s221
      %p223 = pneg %p149
      %p224 = pneg %p146
      %p225 = scmp.lt.s32.totalorder %s20, 1
      %s226 = scalar_select %p225, %s20, 1
      %p227 = scmp.lt.s32.totalorder %s21, 3
      %s228 = scalar_select %p227, %s21, 3
      %s229 = smul.addr %s228, 8
      %s230 = smul.addr %s226, 32
      %s231 = sadd.s32 %s229, %s230
      %s232 = smul.addr %s231, 8
      %s233 = scalar_lea.vmem %s4, %s232
      %s234 = smul.u32 2, %s21
      %p235 = scmp.lt.s32.totalorder %s20, 1
      %s236 = scalar_select %p235, %s20, 1
      %p237 = scmp.lt.s32.totalorder %s234, 7
      %s238 = scalar_select %p237, %s234, 7
      %s239 = smul.addr %s238, 10
      %s240 = smul.addr %s236, 80
      %s241 = sadd.s32 %s239, %s240
      %s242 = smul.addr %s241, 4
      %s243 = scalar_lea.vmem %s0, %s242
      %s244 = smul.u32 2, %s21
      %s245 = smul.u32 2, %s21
      %p246 = scmp.lt.s32.totalorder %s20, 1
      %s247 = scalar_select %p246, %s20, 1
      %p248 = scmp.lt.s32.totalorder %s245, 7
      %s249 = scalar_select %p248, %s245, 7
      %s250 = smul.addr %s249, 10
      %s251 = smul.addr %s247, 80
      %s252 = sadd.s32 %s250, %s251
      %s253 = smul.addr %s252, 8
      %s254 = scalar_lea.vmem %s3, %s253
      %s255 = smul.u32 2, %s21
      %p256 = scmp.lt.s32.totalorder %s20, 1
      %s257 = scalar_select %p256, %s20, 1
      %p258 = scmp.lt.s32.totalorder %s21, 3
      %s259 = scalar_select %p258, %s21, 3
      %s260 = smul.addr %s259, 8
      %s261 = smul.addr %s257, 32
      %s262 = sadd.s32 %s260, %s261
      %s263 = smul.addr %s262, 8
      %s264 = scalar_lea.vmem %s4, %s263
      %v265 = vld [vmem:[%s243] sm:$0xf]
      %v266 = vld [vmem:[%s243 + $0x4] sm:$0xf]
      %v267 = vld [vmem:[%s243 + $0x8] sm:$0xf]
      %v268 = vld [vmem:[%s243 + $0xc] sm:$0xf]
      %v269 = vld [vmem:[%s243 + $0x10] sm:$0xf]
      %v270 = vld [vmem:[%s243 + $0x14] sm:$0xf]
      %v271 = vld [vmem:[%s243 + $0x18] sm:$0xf]
      %v272 = vld [vmem:[%s243 + $0x1c] sm:$0xf]
      %v273 = vld [vmem:[%s243 + $0x20] sm:$0xf]
      %v274 = vld [vmem:[%s243 + $0x24] sm:$0xf]
      %v275 = vld [vmem:[%s243 + $0x28] sm:$0xf]
      %v276 = vld [vmem:[%s243 + $0x2c] sm:$0xf]
      %v277 = vld [vmem:[%s243 + $0x30] sm:$0xf]
      %v278 = vld [vmem:[%s243 + $0x34] sm:$0xf]
      %v279 = vld [vmem:[%s243 + $0x38] sm:$0xf]
      %v280 = vld [vmem:[%s243 + $0x3c] sm:$0xf]
      %v281 = vld [vmem:[%s243 + $0x40] sm:$0xf]
      %v282 = vld [vmem:[%s243 + $0x44] sm:$0xf]
      %v283 = vld [vmem:[%s243 + $0x48] sm:$0xf]
      %v284 = vld [vmem:[%s243 + $0x4c] sm:$0xf]
      %v285 = vunpack.c.l.bf16 %v265
      %v286 = vunpack.c.l.bf16 %v266
      %v287 = vunpack.c.l.bf16 %v267
      %v288 = vunpack.c.l.bf16 %v268
      %v289 = vunpack.c.l.bf16 %v269
      %v290 = vunpack.c.l.bf16 %v270
      %v291 = vunpack.c.l.bf16 %v271
      %v292 = vunpack.c.l.bf16 %v272
      %v293 = vunpack.c.l.bf16 %v273
      %v294 = vunpack.c.l.bf16 %v274
      %v295 = vunpack.c.l.bf16 %v275
      %v296 = vunpack.c.l.bf16 %v276
      %v297 = vunpack.c.l.bf16 %v277
      %v298 = vunpack.c.l.bf16 %v278
      %v299 = vunpack.c.l.bf16 %v279
      %v300 = vunpack.c.l.bf16 %v280
      %v301 = vunpack.c.l.bf16 %v281
      %v302 = vunpack.c.l.bf16 %v282
      %v303 = vunpack.c.l.bf16 %v283
      %v304 = vunpack.c.l.bf16 %v284
      %v305 = vld [vmem:[%s1] sm:$0x1]
      %v307 = vlaneseq
      %v308 = vshrl.u32 %v307, 7
      %v309 = vsub.s32 0, %v308
      %v310 = vrot.slane %v305, %v309
      %v312 = vmul.f32 %v285, %v310
      %v313 = vmul.f32 %v286, %v310
      %v314 = vmul.f32 %v287, %v310
      %v315 = vmul.f32 %v288, %v310
      %v316 = vmul.f32 %v289, %v310
      %v317 = vmul.f32 %v290, %v310
      %v318 = vmul.f32 %v291, %v310
      %v319 = vmul.f32 %v292, %v310
      %v320 = vmul.f32 %v293, %v310
      %v321 = vmul.f32 %v294, %v310
      %v322 = vmul.f32 %v295, %v310
      %v323 = vmul.f32 %v296, %v310
      %v324 = vmul.f32 %v297, %v310
      %v325 = vmul.f32 %v298, %v310
      %v326 = vmul.f32 %v299, %v310
      %v327 = vmul.f32 %v300, %v310
      %v328 = vmul.f32 %v301, %v310
      %v329 = vmul.f32 %v302, %v310
      %v330 = vmul.f32 %v303, %v310
      %v331 = vmul.f32 %v304, %v310
      %v332 = vld [vmem:[%s2] sm:$0x1]
      %v334 = vlaneseq
      %v335 = vshrl.u32 %v334, 7
      %v336 = vsub.s32 0, %v335
      %v337 = vrot.slane %v332, %v336
      %v339 = vadd.f32 %v312, %v337
      %v340 = vadd.f32 %v313, %v337
      %v341 = vadd.f32 %v314, %v337
      %v342 = vadd.f32 %v315, %v337
      %v343 = vadd.f32 %v316, %v337
      %v344 = vadd.f32 %v317, %v337
      %v345 = vadd.f32 %v318, %v337
      %v346 = vadd.f32 %v319, %v337
      %v347 = vadd.f32 %v320, %v337
      %v348 = vadd.f32 %v321, %v337
      %v349 = vadd.f32 %v322, %v337
      %v350 = vadd.f32 %v323, %v337
      %v351 = vadd.f32 %v324, %v337
      %v352 = vadd.f32 %v325, %v337
      %v353 = vadd.f32 %v326, %v337
      %v354 = vadd.f32 %v327, %v337
      %v355 = vadd.f32 %v328, %v337
      %v356 = vadd.f32 %v329, %v337
      %v357 = vadd.f32 %v330, %v337
      %v358 = vadd.f32 %v331, %v337
      %v359 = vmax.f32 %v339, 0.0
      %v360 = vmax.f32 %v340, 0.0
      %v361 = vmax.f32 %v341, 0.0
      %v362 = vmax.f32 %v342, 0.0
      %v363 = vmax.f32 %v343, 0.0
      %v364 = vmax.f32 %v344, 0.0
      %v365 = vmax.f32 %v345, 0.0
      %v366 = vmax.f32 %v346, 0.0
      %v367 = vmax.f32 %v347, 0.0
      %v368 = vmax.f32 %v348, 0.0
      %v369 = vmax.f32 %v349, 0.0
      %v370 = vmax.f32 %v350, 0.0
      %v371 = vmax.f32 %v351, 0.0
      %v372 = vmax.f32 %v352, 0.0
      %v373 = vmax.f32 %v353, 0.0
      %v374 = vmax.f32 %v354, 0.0
      %v375 = vmax.f32 %v355, 0.0
      %v376 = vmax.f32 %v356, 0.0
      %v377 = vmax.f32 %v357, 0.0
      %v378 = vmax.f32 %v358, 0.0
      %vm379 = vcmask 64512
      %380 = vst.msk [vmem:[%s254] sm:$0xff] %vm379, %v359
      %381 = vst.msk [vmem:[%s254 + $0x8] sm:$0xff] %vm379, %v360
      %382 = vst.msk [vmem:[%s254 + $0x10] sm:$0xff] %vm379, %v361
      %383 = vst.msk [vmem:[%s254 + $0x18] sm:$0xff] %vm379, %v362
      %384 = vst.msk [vmem:[%s254 + $0x20] sm:$0xff] %vm379, %v363
      %385 = vst.msk [vmem:[%s254 + $0x28] sm:$0xff] %vm379, %v364
      %386 = vst.msk [vmem:[%s254 + $0x30] sm:$0xff] %vm379, %v365
      %387 = vst.msk [vmem:[%s254 + $0x38] sm:$0xff] %vm379, %v366
      %388 = vst.msk [vmem:[%s254 + $0x40] sm:$0xff] %vm379, %v367
      %389 = vst.msk [vmem:[%s254 + $0x48] sm:$0xff] %vm379, %v368
      %390 = vst.msk [vmem:[%s254 + $0x50] sm:$0xff] %vm379, %v369
      %391 = vst.msk [vmem:[%s254 + $0x58] sm:$0xff] %vm379, %v370
      %392 = vst.msk [vmem:[%s254 + $0x60] sm:$0xff] %vm379, %v371
      %393 = vst.msk [vmem:[%s254 + $0x68] sm:$0xff] %vm379, %v372
      %394 = vst.msk [vmem:[%s254 + $0x70] sm:$0xff] %vm379, %v373
      %395 = vst.msk [vmem:[%s254 + $0x78] sm:$0xff] %vm379, %v374
      %396 = vst.msk [vmem:[%s254 + $0x80] sm:$0xff] %vm379, %v375
      %397 = vst.msk [vmem:[%s254 + $0x88] sm:$0xff] %vm379, %v376
      %398 = vst.msk [vmem:[%s254 + $0x90] sm:$0xff] %vm379, %v377
      %399 = vst.msk [vmem:[%s254 + $0x98] sm:$0xff] %vm379, %v378
      %v400 = vmax.f32 %v359, %v369
      %v401 = vmax.f32 %v360, %v370
      %v402 = vmax.f32 %v361, %v371
      %v403 = vmax.f32 %v362, %v372
      %v404 = vmax.f32 %v363, %v373
      %v405 = vmax.f32 %v364, %v374
      %v406 = vmax.f32 %v365, %v375
      %v407 = vmax.f32 %v366, %v376
      %v408 = vmax.f32 %v367, %v377
      %v409 = vmax.f32 %v368, %v378
      %vm412 = vcmask 1045504
      %v413 = vrot.slane %v401, 2
      %v414 = vrot.slane %v402, 2
      %v415 = vsel %vm412, %v413, %v414
      %v418 = vmax.f32 %v400, %v415
      %v419 = vmax.f32 %v401, %v414
      %420 = vst.msk [vmem:[%s264] sm:$0xff] %vm379, %v418
      %vm421 = vcmask 58368
      %422 = vst.msk [vmem:[%s264 + $0x8] sm:$0x3] %vm421, %v419
      %v425 = vrot.slane %v403, 2
      %v426 = vrot.slane %v404, 2
      %v427 = vsel %vm412, %v425, %v426
      %v430 = vmax.f32 %v402, %v427
      %v431 = vmax.f32 %v403, %v426
      %s432 = scalar_lea.vmem %s264, 16
      %vm433 = vcmask 64516
      %434 = vst.msk [vmem:[%s432 - $0x4] sm:$0xf0] %vm433, %v430
      %vm435 = vcmask 62464
      %436 = vst.msk [vmem:[%s432 + $0x4] sm:$0x3f] %vm435, %v431
      %v439 = vrot.slane %v406, 2
      %v440 = vrot.slane %v407, 2
      %v441 = vsel %vm412, %v439, %v440
      %v444 = vmax.f32 %v405, %v441
      %v445 = vmax.f32 %v406, %v440
      %s446 = scalar_lea.vmem %s264, 32
      %447 = vst.msk [vmem:[%s446] sm:$0xff] %vm379, %v444
      %448 = vst.msk [vmem:[%s446 + $0x8] sm:$0x3] %vm421, %v445
      %v451 = vrot.slane %v408, 2
      %v452 = vrot.slane %v409, 2
      %v453 = vsel %vm412, %v451, %v452
      %v456 = vmax.f32 %v407, %v453
      %v457 = vmax.f32 %v408, %v452
      %s458 = scalar_lea.vmem %s264, 48
      %459 = vst.msk [vmem:[%s458 - $0x4] sm:$0xf0] %vm433, %v456
      %460 = vst.msk [vmem:[%s458 + $0x4] sm:$0x3f] %vm435, %v457
      %s461 = smul.u32 2, %s21
      %p462 = scmp.lt.s32.totalorder %s20, 1
      %s463 = scalar_select %p462, %s20, 1
      %p464 = scmp.lt.s32.totalorder %s461, 7
      %s465 = scalar_select %p464, %s461, 7
      %s466 = smul.addr %s465, 10
      %s467 = smul.addr %s463, 80
      %s468 = sadd.s32 %s466, %s467
      %s469 = smul.addr %s468, 8
      %s470 = scalar_lea.vmem %s3, %s469
      %p471 = scmp.lt.s32.totalorder %s20, 1
      %s472 = scalar_select %p471, %s20, 1
      %p473 = scmp.lt.s32.totalorder %s21, 3
      %s474 = scalar_select %p473, %s21, 3
      %s475 = smul.addr %s474, 8
      %s476 = smul.addr %s472, 32
      %s477 = sadd.s32 %s475, %s476
      %s478 = smul.addr %s477, 8
      %s479 = scalar_lea.vmem %s4, %s478
      // Predicated region
      $region33: #{down_block_forward.7} parent=31 // pred_check
        %p480 = pneg %p118
      $region34: #{down_block_forward.7} parent=31 // pred_check_branch
        %482 = sbr.rel (%p480) target = $region36
      $region35: #{down_block_forward.7} parent=31 // pred_region
        %s483 = smul.u32 2, %s21
      $region36: #{down_block_forward.7} parent=31 // pred_fallthru
        _
      // Predicated region
      $region37: #{down_block_forward.7} parent=31 // pred_check
        %p484 = pneg %p146
      $region38: #{down_block_forward.7} parent=31 // pred_check_branch
        %486 = sbr.rel (%p484) target = $region40
      $region39: #{down_block_forward.7} parent=31 // pred_region
        _
      $region40: #{down_block_forward.7} parent=31 // pred_fallthru
        _
    $region32: #{down_block_forward.7} parent=5 // pred_fallthru
      _
    %p487 = scmp.le.s32.totalorder 2, %s11
    // Predicated region
    $region41: #{down_block_forward.7} parent=5 // pred_check
      %p488 = pneg %p487
    $region42: #{down_block_forward.7} parent=5 // pred_check_branch
      %490 = sbr.rel (%p488) target = $region44
    $region43: #{down_block_forward.7} parent=5 // pred_region
      %s491 = ssub.s32 %s11, 2
      // Predicated region
      $region45: #{down_block_forward.7} parent=43 // pred_check
        %p492 = pneg %p124
      $region46: #{down_block_forward.7} parent=43 // pred_check_branch
        %494 = sbr.rel (%p492) target = $region48
      $region47: #{down_block_forward.7} parent=43 // pred_region
        %s495 = smul.u32 2, %s23
        %p496 = scmp.lt.s32.totalorder %s22, 1
        %s497 = scalar_select %p496, %s22, 1
        %p498 = scmp.lt.s32.totalorder %s495, 7
        %s499 = scalar_select %p498, %s495, 7
        %s500 = smul.addr %s499, 10
        %s501 = smul.addr %s497, 80
        %s502 = sadd.s32 %s500, %s501
        %s503 = smul.addr %s502, 8
        %s504 = scalar_lea.vmem %s3, %s503
      $region48: #{down_block_forward.7} parent=43 // pred_fallthru
        _
      // Predicated region
      $region49: #{down_block_forward.7} parent=43 // pred_check
        %p505 = pneg %p152
      $region50: #{down_block_forward.7} parent=43 // pred_check_branch
        %507 = sbr.rel (%p505) target = $region52
      $region51: #{down_block_forward.7} parent=43 // pred_region
        %p508 = scmp.lt.s32.totalorder %s22, 1
        %s509 = scalar_select %p508, %s22, 1
        %p510 = scmp.lt.s32.totalorder %s23, 3
        %s511 = scalar_select %p510, %s23, 3
        %s512 = smul.addr %s511, 8
        %s513 = smul.addr %s509, 32
        %s514 = sadd.s32 %s512, %s513
        %s515 = smul.addr %s514, 8
        %s516 = scalar_lea.vmem %s4, %s515
      $region52: #{down_block_forward.7} parent=43 // pred_fallthru
        _
    $region44: #{down_block_forward.7} parent=5 // pred_fallthru
      _
  $region6: #{down_block_forward.7} parent=0 // loop_footer
    %s15 = sadd.s32 1, %s11
  $region7: #{down_block_forward.7} parent=0 // loop_footer_branch
    %10 = sbr.rel target = $region3
  $region8: #{down_block_forward.7} parent=0 // loop_exit
    _

// kernel: down_block_forward.5
$region0: #{down_block_forward.5}
  #allocation0 [shape = 'u32[]', space=smem, size = 0x4, offset = 0x4, fixed_abs, tag = 'smem constant byte address 0x4 - core index']
  #allocation1 [shape = 'u32[144,128]{1,0:T(1,128)}', space=vmem, size = 0x12000, scoped, tag = 'internal scratch']
  %s0 = inlined_call_operand.vmem [shape: bf16[2,8,80,8], index: 0, kind: input, shape index: {}]
  %s1 = inlined_call_operand.vmem [shape: f32[1,8], index: 1, kind: input, shape index: {}]
  %s2 = inlined_call_operand.vmem [shape: f32[1,8], index: 2, kind: input, shape index: {}]
  %s3 = inlined_call_operand.vmem [shape: bf16[2,10,104,8], index: 3, kind: output, shape index: {}]
  %s4 = sld [smem:[#allocation0]]
  $region53: #{down_block_forward.5} parent=0
    _
  %s6 = ssub.s32 1, %s4
  %s7 = scalar_select 0, %s6, %s4
  loop: start=0, step=1, limit=22
  $region2: #{down_block_forward.5} parent=0 // loop_pre_header
    _
  $region3: #{down_block_forward.5} parent=0 // loop_header
    %s9 = sphi 0, %s13
    %p10 = scmp.ge.s32.totalorder %s9, 22
    %s16 = sphi 0, %s28
    %s17 = sphi 0, %s24
    %s18 = sphi 0, %s16
    %s19 = sphi 0, %s17
    %s20 = sphi 0, %s18
    %s21 = sphi 0, %s19
    %s43 = sphi 0, %s45
    %s46 = sphi 0, %s43
    %s47 = sphi 0, %s46
    %s63 = sphi 0, %s47
    %s67 = sphi 0, %s67
    %s69 = sphi 0, %s67
    %s70 = sphi 0, %s69
    %s84 = sphi 0, %s70
    %s88 = sphi 0, %s88
    %s90 = sphi 0, %s88
    %s91 = sphi 0, %s90
    %s105 = sphi 0, %s91
    %s113 = sphi 0, %s115
    %s116 = sphi 0, %s113
    %s117 = sphi 0, %s116
    %s133 = sphi 0, %s117
  $region4: #{down_block_forward.5} parent=0 // loop_header_branch
    %12 = sbr.rel (%p10) target = $region8
  $region5: #{down_block_forward.5} parent=0 // loop_body
    %s14 = ssub.s32 %s9, 1
    %s15 = ssub.s32 %s9, 2
    %s22 = sadd.s32 1, %s17
    %p23 = scmp.ge.s32.totalorder %s22, 10
    %s24 = scalar_select %p23, 0, %s22
    %s25 = sadd.s32 1, %s16
    %s26 = scalar_select %p23, %s25, %s16
    %p27 = scmp.ge.s32.totalorder %s26, 2
    %s28 = scalar_select %p27, 0, %s26
    %s29 = ssub.s32 %s17, 1
    %p30 = scmp.gt.s32.totalorder %s29, 0
    %s31 = scalar_select %p30, %s29, 0
    %p32 = scmp.lt.s32.totalorder %s31, 7
    %s33 = scalar_select %p32, %s31, 7
    %s34 = ssub.s32 %s24, 1
    %p35 = scmp.gt.s32.totalorder %s34, 0
    %s36 = scalar_select %p35, %s34, 0
    %p37 = scmp.lt.s32.totalorder %s36, 7
    %s38 = scalar_select %p37, %s36, 7
    %s39 = ssub.s32 %s16, %s28
    %s40 = ssub.s32 %s33, %s38
    %s41 = sor.u32 %s39, %s40
    %p42 = scmp.eq.s32.totalorder %s41, 0
    %s44 = sadd.s32 %s43, 1
    %s45 = scalar_select %p42, %s43, %s44
    %p48 = pneg %p42
    %p49 = scmp.eq.s32.totalorder %s9, 19
    %p50 = por %p48, %p49
    %p51 = scmp.ne.s32.totalorder %s43, %s46
    %p52 = scmp.eq.s32.totalorder %s9, 0
    %p53 = por %p51, %p52
    %p54 = scmp.ne.s32.totalorder %s43, %s46
    %p55 = scmp.eq.s32.totalorder %s14, 19
    %p56 = por %p54, %p55
    %p57 = scmp.ne.s32.totalorder %s46, %s47
    %p58 = scmp.eq.s32.totalorder %s14, 0
    %p59 = por %p57, %p58
    %p60 = scmp.ne.s32.totalorder %s46, %s47
    %p61 = scmp.eq.s32.totalorder %s15, 19
    %p62 = por %p60, %p61
    %p64 = scmp.ne.s32.totalorder %s47, %s63
    %p65 = scmp.eq.s32.totalorder %s15, 0
    %p66 = por %p64, %p65
    %s68 = sadd.s32 %s67, 1
    %p71 = scmp.eq.s32.totalorder %s9, 19
    %p72 = scmp.ne.s32.totalorder %s67, %s69
    %p73 = scmp.eq.s32.totalorder %s9, 0
    %p74 = por %p72, %p73
    %p75 = scmp.ne.s32.totalorder %s67, %s69
    %p76 = scmp.eq.s32.totalorder %s14, 19
    %p77 = por %p75, %p76
    %p78 = scmp.ne.s32.totalorder %s69, %s70
    %p79 = scmp.eq.s32.totalorder %s14, 0
    %p80 = por %p78, %p79
    %p81 = scmp.ne.s32.totalorder %s69, %s70
    %p82 = scmp.eq.s32.totalorder %s15, 19
    %p83 = por %p81, %p82
    %p85 = scmp.ne.s32.totalorder %s70, %s84
    %p86 = scmp.eq.s32.totalorder %s15, 0
    %p87 = por %p85, %p86
    %s89 = sadd.s32 %s88, 1
    %p92 = scmp.eq.s32.totalorder %s9, 19
    %p93 = scmp.ne.s32.totalorder %s88, %s90
    %p94 = scmp.eq.s32.totalorder %s9, 0
    %p95 = por %p93, %p94
    %p96 = scmp.ne.s32.totalorder %s88, %s90
    %p97 = scmp.eq.s32.totalorder %s14, 19
    %p98 = por %p96, %p97
    %p99 = scmp.ne.s32.totalorder %s90, %s91
    %p100 = scmp.eq.s32.totalorder %s14, 0
    %p101 = por %p99, %p100
    %p102 = scmp.ne.s32.totalorder %s90, %s91
    %p103 = scmp.eq.s32.totalorder %s15, 19
    %p104 = por %p102, %p103
    %p106 = scmp.ne.s32.totalorder %s91, %s105
    %p107 = scmp.eq.s32.totalorder %s15, 0
    %p108 = por %p106, %p107
    %s109 = ssub.s32 %s16, %s28
    %s110 = ssub.s32 %s17, %s24
    %s111 = sor.u32 %s109, %s110
    %p112 = scmp.eq.s32.totalorder %s111, 0
    %s114 = sadd.s32 %s113, 1
    %s115 = scalar_select %p112, %s113, %s114
    %p118 = pneg %p112
    %p119 = scmp.eq.s32.totalorder %s9, 19
    %p120 = por %p118, %p119
    %p121 = scmp.ne.s32.totalorder %s113, %s116
    %p122 = scmp.eq.s32.totalorder %s9, 0
    %p123 = por %p121, %p122
    %p124 = scmp.ne.s32.totalorder %s113, %s116
    %p125 = scmp.eq.s32.totalorder %s14, 19
    %p126 = por %p124, %p125
    %p127 = scmp.ne.s32.totalorder %s116, %s117
    %p128 = scmp.eq.s32.totalorder %s14, 0
    %p129 = por %p127, %p128
    %p130 = scmp.ne.s32.totalorder %s116, %s117
    %p131 = scmp.eq.s32.totalorder %s15, 19
    %p132 = por %p130, %p131
    %p134 = scmp.ne.s32.totalorder %s117, %s133
    %p135 = scmp.eq.s32.totalorder %s15, 0
    %p136 = por %p134, %p135
    %p137 = scmp.le.s32.totalorder 1, %s9
    %p138 = scmp.lt.s32.totalorder %s9, 21
    %p139 = pnand %p137, %p138
    %p140 = pneg %p139
    // Predicated region
    $region9: #{down_block_forward.5} parent=5 // pred_check
      _
    $region10: #{down_block_forward.5} parent=5 // pred_check_branch
      %142 = sbr.rel (%p139) target = $region12
    $region11: #{down_block_forward.5} parent=5 // pred_region
      %s143 = ssub.s32 %s9, 1
      // Predicated region
      $region13: #{down_block_forward.5} parent=11 // pred_check
        %p144 = pneg %p80
      $region14: #{down_block_forward.5} parent=11 // pred_check_branch
        %146 = sbr.rel (%p144) target = $region16
      $region15: #{down_block_forward.5} parent=11 // pred_region
        _
      $region16: #{down_block_forward.5} parent=11 // pred_fallthru
        _
      // Predicated region
      $region17: #{down_block_forward.5} parent=11 // pred_check
        %p147 = pneg %p101
      $region18: #{down_block_forward.5} parent=11 // pred_check_branch
        %149 = sbr.rel (%p147) target = $region20
      $region19: #{down_block_forward.5} parent=11 // pred_region
        _
      $region20: #{down_block_forward.5} parent=11 // pred_fallthru
        _
    $region12: #{down_block_forward.5} parent=5 // pred_fallthru
      _
    %p150 = scmp.lt.s32.totalorder %s9, 20
    // Predicated region
    $region21: #{down_block_forward.5} parent=5 // pred_check
      %p151 = pneg %p150
    $region22: #{down_block_forward.5} parent=5 // pred_check_branch
      %153 = sbr.rel (%p151) target = $region24
    $region23: #{down_block_forward.5} parent=5 // pred_region
      // Predicated region
      $region25: #{down_block_forward.5} parent=23 // pred_check
        %p154 = pneg %p53
      $region26: #{down_block_forward.5} parent=23 // pred_check_branch
        %156 = sbr.rel (%p154) target = $region28
      $region27: #{down_block_forward.5} parent=23 // pred_region
        %s157 = ssub.s32 %s17, 1
        %p158 = scmp.gt.s32.totalorder %s157, 0
        %s159 = scalar_select %p158, %s157, 0
        %p160 = scmp.lt.s32.totalorder %s159, 7
        %s161 = scalar_select %p160, %s159, 7
        %p162 = scmp.lt.s32.totalorder %s16, 1
        %s163 = scalar_select %p162, %s16, 1
        %p164 = scmp.lt.s32.totalorder %s161, 7
        %s165 = scalar_select %p164, %s161, 7
        %s166 = smul.addr %s165, 10
        %s167 = smul.addr %s163, 80
        %s168 = sadd.s32 %s166, %s167
        %s169 = smul.addr %s168, 4
        %s170 = scalar_lea.vmem %s0, %s169
        %s171 = ssub.s32 %s17, 1
        %p172 = scmp.gt.s32.totalorder %s171, 0
        %s173 = scalar_select %p172, %s171, 0
        %p174 = scmp.lt.s32.totalorder %s173, 7
        %s175 = scalar_select %p174, %s173, 7
      $region28: #{down_block_forward.5} parent=23 // pred_fallthru
        _
    $region24: #{down_block_forward.5} parent=5 // pred_fallthru
      _
    %p176 = scmp.le.s32.totalorder 1, %s9
    %p177 = scmp.lt.s32.totalorder %s9, 21
    %p178 = pnand %p176, %p177
    %p179 = pneg %p178
    // Predicated region
    $region29: #{down_block_forward.5} parent=5 // pred_check
      _
    $region30: #{down_block_forward.5} parent=5 // pred_check_branch
      %181 = sbr.rel (%p178) target = $region32
    $region31: #{down_block_forward.5} parent=5 // pred_region
      %s182 = ssub.s32 %s9, 1
      %s183 = ssub.s32 %s19, 1
      %p184 = scmp.gt.s32.totalorder %s183, 0
      %s185 = scalar_select %p184, %s183, 0
      %p186 = scmp.lt.s32.totalorder %s185, 7
      %s187 = scalar_select %p186, %s185, 7
      %p188 = scmp.lt.s32.totalorder %s18, 1
      %s189 = scalar_select %p188, %s18, 1
      %p190 = scmp.lt.s32.totalorder %s187, 7
      %s191 = scalar_select %p190, %s187, 7
      %s192 = smul.addr %s191, 10
      %s193 = smul.addr %s189, 80
      %s194 = sadd.s32 %s192, %s193
      %s195 = smul.addr %s194, 4
      %s196 = scalar_lea.vmem %s0, %s195
      %p197 = pneg %p59
      %p198 = pneg %p56
      %p199 = pneg %p80
      %p200 = pneg %p77
      %p201 = pneg %p101
      %p202 = pneg %p98
      %p203 = pneg %p129
      %p204 = pneg %p126
      %p205 = scmp.lt.s32.totalorder %s18, 1
      %s206 = scalar_select %p205, %s18, 1
      %p207 = scmp.lt.s32.totalorder %s19, 9
      %s208 = scalar_select %p207, %s19, 9
      %s209 = smul.addr %s208, 13
      %s210 = smul.addr %s206, 130
      %s211 = sadd.s32 %s209, %s210
      %s212 = smul.addr %s211, 4
      %s213 = scalar_lea.vmem %s3, %s212
      %s214 = ssub.s32 %s19, 1
      %p215 = scmp.gt.s32.totalorder %s214, 0
      %s216 = scalar_select %p215, %s214, 0
      %p217 = scmp.lt.s32.totalorder %s216, 7
      %s218 = scalar_select %p217, %s216, 7
      %p219 = scmp.lt.s32.totalorder %s18, 1
      %s220 = scalar_select %p219, %s18, 1
      %p221 = scmp.lt.s32.totalorder %s218, 7
      %s222 = scalar_select %p221, %s218, 7
      %s223 = smul.addr %s222, 10
      %s224 = smul.addr %s220, 80
      %s225 = sadd.s32 %s223, %s224
      %s226 = smul.addr %s225, 4
      %s227 = scalar_lea.vmem %s0, %s226
      %s228 = ssub.s32 %s19, 1
      %p229 = scmp.gt.s32.totalorder %s228, 0
      %s230 = scalar_select %p229, %s228, 0
      %p231 = scmp.lt.s32.totalorder %s230, 7
      %s232 = scalar_select %p231, %s230, 7
      %p233 = scmp.lt.s32.totalorder %s18, 1
      %s234 = scalar_select %p233, %s18, 1
      %p235 = scmp.lt.s32.totalorder %s19, 9
      %s236 = scalar_select %p235, %s19, 9
      %s237 = smul.addr %s236, 13
      %s238 = smul.addr %s234, 130
      %s239 = sadd.s32 %s237, %s238
      %s240 = smul.addr %s239, 4
      %s241 = scalar_lea.vmem %s3, %s240
      %p243 = scmp.ge.s32.totalorder %s19, 1
      %p244 = scmp.lt.s32.totalorder %s19, 9
      %p245 = pnand %p243, %p244
      %p246 = pneg %p245
      // Predicated region
      $region33: #{down_block_forward.5} parent=31 // pred_check
        _
      $region34: #{down_block_forward.5} parent=31 // pred_check_branch
        %248 = sbr.rel (%p245) target = $region36
      $region35: #{down_block_forward.5} parent=31 // pred_region
        %v249 = vld [vmem:[%s227] sm:$0xf]
        %v250 = vld [vmem:[%s227 + $0x4] sm:$0xf]
        %v251 = vld [vmem:[%s227 + $0x8] sm:$0xf]
        %v252 = vld [vmem:[%s227 + $0xc] sm:$0xf]
        %v253 = vld [vmem:[%s227 + $0x10] sm:$0xf]
        %v254 = vld [vmem:[%s227 + $0x14] sm:$0xf]
        %v255 = vld [vmem:[%s227 + $0x18] sm:$0xf]
        %v256 = vld [vmem:[%s227 + $0x1c] sm:$0xf]
        %v257 = vld [vmem:[%s227 + $0x20] sm:$0xf]
        %v258 = vld [vmem:[%s227 + $0x24] sm:$0xf]
        %v259 = vunpack.c.l.bf16 %v249
        %v260 = vunpack.c.l.bf16 %v250
        %v261 = vunpack.c.l.bf16 %v251
        %v262 = vunpack.c.l.bf16 %v252
        %v263 = vunpack.c.l.bf16 %v253
        %v264 = vunpack.c.l.bf16 %v254
        %v265 = vunpack.c.l.bf16 %v255
        %v266 = vunpack.c.l.bf16 %v256
        %v267 = vunpack.c.l.bf16 %v257
        %v268 = vunpack.c.l.bf16 %v258
        %v269 = vld [vmem:[%s1] sm:$0x1]
        %v271 = vlaneseq
        %v272 = vshrl.u32 %v271, 7
        %v273 = vsub.s32 0, %v272
        %v274 = vrot.slane %v269, %v273
        %v276 = vmul.f32 %v259, %v274
        %v277 = vmul.f32 %v260, %v274
        %v278 = vmul.f32 %v261, %v274
        %v279 = vmul.f32 %v262, %v274
        %v280 = vmul.f32 %v263, %v274
        %v281 = vmul.f32 %v264, %v274
        %v282 = vmul.f32 %v265, %v274
        %v283 = vmul.f32 %v266, %v274
        %v284 = vmul.f32 %v267, %v274
        %v285 = vmul.f32 %v268, %v274
        %v286 = vld [vmem:[%s2] sm:$0x1]
        %v288 = vlaneseq
        %v289 = vshrl.u32 %v288, 7
        %v290 = vsub.s32 0, %v289
        %v291 = vrot.slane %v286, %v290
        %v293 = vadd.f32 %v276, %v291
        %v294 = vadd.f32 %v277, %v291
        %v295 = vadd.f32 %v278, %v291
        %v296 = vadd.f32 %v279, %v291
        %v297 = vadd.f32 %v280, %v291
        %v298 = vadd.f32 %v281, %v291
        %v299 = vadd.f32 %v282, %v291
        %v300 = vadd.f32 %v283, %v291
        %v301 = vadd.f32 %v284, %v291
        %v302 = vadd.f32 %v285, %v291
        %v303 = vmax.f32 %v293, 0.0
        %v304 = vmax.f32 %v294, 0.0
        %v305 = vmax.f32 %v295, 0.0
        %v306 = vmax.f32 %v296, 0.0
        %v307 = vmax.f32 %v297, 0.0
        %v308 = vmax.f32 %v298, 0.0
        %v309 = vmax.f32 %v299, 0.0
        %v310 = vmax.f32 %v300, 0.0
        %v311 = vmax.f32 %v301, 0.0
        %v312 = vmax.f32 %v302, 0.0
        %v313 = vlaneseq
        %v314 = vshrl.u32 %v313, 7
        %v315 = vadd.s32 %v314, 8
        %v316 = vadd.s32 %v314, 16
        %v317 = vadd.s32 %v314, 24
        %v318 = vadd.s32 %v314, 32
        %v319 = vadd.s32 %v314, 40
        %v320 = vadd.s32 %v314, 48
        %v321 = vadd.s32 %v314, 56
        %v322 = vadd.s32 %v314, 64
        %v323 = vadd.s32 %v314, 72
        %vm324 = vcmp.lt.s32.totalorder %v314, 0
        %v325 = vsub.s32 0, %v314
        %v326 = vsel %vm324, %v325, %v314
        %v327 = vmul.u32.u64.compose %v326, 3435973837
        %v328 = vextract.low.u32 %v327
        %v329 = vextract.high.u32 %v327
        %v330 = vshrl.u32 %v329, 3
        %v331 = vmul.u32 %v330, 10
        %v332 = vsub.s32 %v326, %v331
        %v333 = vsub.s32 0, %v332
        %v334 = vsel %vm324, %v333, %v332
        %vm335 = vcmp.lt.s32.totalorder %v315, 0
        %v336 = vsub.s32 0, %v315
        %v337 = vsel %vm335, %v336, %v315
        %v338 = vmul.u32.u64.compose %v337, 3435973837
        %v339 = vextract.low.u32 %v338
        %v340 = vextract.high.u32 %v338
        %v341 = vshrl.u32 %v340, 3
        %v342 = vmul.u32 %v341, 10
        %v343 = vsub.s32 %v337, %v342
        %v344 = vsub.s32 0, %v343
        %v345 = vsel %vm335, %v344, %v343
        %vm346 = vcmp.lt.s32.totalorder %v316, 0
        %v347 = vsub.s32 0, %v316
        %v348 = vsel %vm346, %v347, %v316
        %v349 = vmul.u32.u64.compose %v348, 3435973837
        %v350 = vextract.low.u32 %v349
        %v351 = vextract.high.u32 %v349
        %v352 = vshrl.u32 %v351, 3
        %v353 = vmul.u32 %v352, 10
        %v354 = vsub.s32 %v348, %v353
        %v355 = vsub.s32 0, %v354
        %v356 = vsel %vm346, %v355, %v354
        %vm357 = vcmp.lt.s32.totalorder %v317, 0
        %v358 = vsub.s32 0, %v317
        %v359 = vsel %vm357, %v358, %v317
        %v360 = vmul.u32.u64.compose %v359, 3435973837
        %v361 = vextract.low.u32 %v360
        %v362 = vextract.high.u32 %v360
        %v363 = vshrl.u32 %v362, 3
        %v364 = vmul.u32 %v363, 10
        %v365 = vsub.s32 %v359, %v364
        %v366 = vsub.s32 0, %v365
        %v367 = vsel %vm357, %v366, %v365
        %vm368 = vcmp.lt.s32.totalorder %v318, 0
        %v369 = vsub.s32 0, %v318
        %v370 = vsel %vm368, %v369, %v318
        %v371 = vmul.u32.u64.compose %v370, 3435973837
        %v372 = vextract.low.u32 %v371
        %v373 = vextract.high.u32 %v371
        %v374 = vshrl.u32 %v373, 3
        %v375 = vmul.u32 %v374, 10
        %v376 = vsub.s32 %v370, %v375
        %v377 = vsub.s32 0, %v376
        %v378 = vsel %vm368, %v377, %v376
        %vm379 = vcmp.lt.s32.totalorder %v319, 0
        %v380 = vsub.s32 0, %v319
        %v381 = vsel %vm379, %v380, %v319
        %v382 = vmul.u32.u64.compose %v381, 3435973837
        %v383 = vextract.low.u32 %v382
        %v384 = vextract.high.u32 %v382
        %v385 = vshrl.u32 %v384, 3
        %v386 = vmul.u32 %v385, 10
        %v387 = vsub.s32 %v381, %v386
        %v388 = vsub.s32 0, %v387
        %v389 = vsel %vm379, %v388, %v387
        %vm390 = vcmp.lt.s32.totalorder %v320, 0
        %v391 = vsub.s32 0, %v320
        %v392 = vsel %vm390, %v391, %v320
        %v393 = vmul.u32.u64.compose %v392, 3435973837
        %v394 = vextract.low.u32 %v393
        %v395 = vextract.high.u32 %v393
        %v396 = vshrl.u32 %v395, 3
        %v397 = vmul.u32 %v396, 10
        %v398 = vsub.s32 %v392, %v397
        %v399 = vsub.s32 0, %v398
        %v400 = vsel %vm390, %v399, %v398
        %vm401 = vcmp.lt.s32.totalorder %v321, 0
        %v402 = vsub.s32 0, %v321
        %v403 = vsel %vm401, %v402, %v321
        %v404 = vmul.u32.u64.compose %v403, 3435973837
        %v405 = vextract.low.u32 %v404
        %v406 = vextract.high.u32 %v404
        %v407 = vshrl.u32 %v406, 3
        %v408 = vmul.u32 %v407, 10
        %v409 = vsub.s32 %v403, %v408
        %v410 = vsub.s32 0, %v409
        %v411 = vsel %vm401, %v410, %v409
        %vm412 = vcmp.lt.s32.totalorder %v322, 0
        %v413 = vsub.s32 0, %v322
        %v414 = vsel %vm412, %v413, %v322
        %v415 = vmul.u32.u64.compose %v414, 3435973837
        %v416 = vextract.low.u32 %v415
        %v417 = vextract.high.u32 %v415
        %v418 = vshrl.u32 %v417, 3
        %v419 = vmul.u32 %v418, 10
        %v420 = vsub.s32 %v414, %v419
        %v421 = vsub.s32 0, %v420
        %v422 = vsel %vm412, %v421, %v420
        %vm423 = vcmp.lt.s32.totalorder %v323, 0
        %v424 = vsub.s32 0, %v323
        %v425 = vsel %vm423, %v424, %v323
        %v426 = vmul.u32.u64.compose %v425, 3435973837
        %v427 = vextract.low.u32 %v426
        %v428 = vextract.high.u32 %v426
        %v429 = vshrl.u32 %v428, 3
        %v430 = vmul.u32 %v429, 10
        %v431 = vsub.s32 %v425, %v430
        %v432 = vsub.s32 0, %v431
        %v433 = vsel %vm423, %v432, %v431
        %vm434 = vcmp.ne.s32.totalorder %v334, 0
        %vm435 = vcmp.ne.s32.totalorder %v345, 0
        %vm436 = vcmp.ne.s32.totalorder %v356, 0
        %vm437 = vcmp.ne.s32.totalorder %v367, 0
        %vm438 = vcmp.ne.s32.totalorder %v378, 0
        %vm439 = vcmp.ne.s32.totalorder %v389, 0
        %vm440 = vcmp.ne.s32.totalorder %v400, 0
        %vm441 = vcmp.ne.s32.totalorder %v411, 0
        %vm442 = vcmp.ne.s32.totalorder %v422, 0
        %vm443 = vcmp.ne.s32.totalorder %v433, 0
        %vm444 = vcmp.lt.s32.totalorder %v334, 0
        %vm445 = vcmp.lt.s32.totalorder %v345, 0
        %vm446 = vcmp.lt.s32.totalorder %v356, 0
        %vm447 = vcmp.lt.s32.totalorder %v367, 0
        %vm448 = vcmp.lt.s32.totalorder %v378, 0
        %vm449 = vcmp.lt.s32.totalorder %v389, 0
        %vm450 = vcmp.lt.s32.totalorder %v400, 0
        %vm451 = vcmp.lt.s32.totalorder %v411, 0
        %vm452 = vcmp.lt.s32.totalorder %v422, 0
        %vm453 = vcmp.lt.s32.totalorder %v433, 0
        %vm454 = vmand %vm444, %vm434
        %vm455 = vmand %vm445, %vm435
        %vm456 = vmand %vm446, %vm436
        %vm457 = vmand %vm447, %vm437
        %vm458 = vmand %vm448, %vm438
        %vm459 = vmand %vm449, %vm439
        %vm460 = vmand %vm450, %vm440
        %vm461 = vmand %vm451, %vm441
        %vm462 = vmand %vm452, %vm442
        %vm463 = vmand %vm453, %vm443
        %v464 = vadd.s32 %v334, 10
        %v465 = vadd.s32 %v345, 10
        %v466 = vadd.s32 %v356, 10
        %v467 = vadd.s32 %v367, 10
        %v468 = vadd.s32 %v378, 10
        %v469 = vadd.s32 %v389, 10
        %v470 = vadd.s32 %v400, 10
        %v471 = vadd.s32 %v411, 10
        %v472 = vadd.s32 %v422, 10
        %v473 = vadd.s32 %v433, 10
        %v474 = vsel %vm454, %v464, %v334
        %v475 = vsel %vm455, %v465, %v345
        %v476 = vsel %vm456, %v466, %v356
        %v477 = vsel %vm457, %v467, %v367
        %v478 = vsel %vm458, %v468, %v378
        %v479 = vsel %vm459, %v469, %v389
        %v480 = vsel %vm460, %v470, %v400
        %v481 = vsel %vm461, %v471, %v411
        %v482 = vsel %vm462, %v472, %v422
        %v483 = vsel %vm463, %v473, %v433
        %vm484 = vcmp.lt.s32.totalorder %v474, 8
        %vm485 = vcmp.lt.s32.totalorder %v475, 8
        %vm486 = vcmp.lt.s32.totalorder %v476, 8
        %vm487 = vcmp.lt.s32.totalorder %v477, 8
        %vm488 = vcmp.lt.s32.totalorder %v478, 8
        %vm489 = vcmp.lt.s32.totalorder %v479, 8
        %vm490 = vcmp.lt.s32.totalorder %v480, 8
        %vm491 = vcmp.lt.s32.totalorder %v481, 8
        %vm492 = vcmp.lt.s32.totalorder %v482, 8
        %vm493 = vcmp.lt.s32.totalorder %v483, 8
        %v494 = vsel %vm484, 1, 0
        %v495 = vsel %vm485, 1, 0
        %v496 = vsel %vm486, 1, 0
        %v497 = vsel %vm487, 1, 0
        %v498 = vsel %vm488, 1, 0
        %v499 = vsel %vm489, 1, 0
        %v500 = vsel %vm490, 1, 0
        %v501 = vsel %vm491, 1, 0
        %v502 = vsel %vm492, 1, 0
        %v503 = vsel %vm493, 1, 0
        %vm504 = vcmp.eq.s32.totalorder %v494, 1
        %vm505 = vcmp.eq.s32.totalorder %v495, 1
        %vm506 = vcmp.eq.s32.totalorder %v496, 1
        %vm507 = vcmp.eq.s32.totalorder %v497, 1
        %vm508 = vcmp.eq.s32.totalorder %v498, 1
        %vm509 = vcmp.eq.s32.totalorder %v499, 1
        %vm510 = vcmp.eq.s32.totalorder %v500, 1
        %vm511 = vcmp.eq.s32.totalorder %v501, 1
        %vm512 = vcmp.eq.s32.totalorder %v502, 1
        %vm513 = vcmp.eq.s32.totalorder %v503, 1
        %v514 = vsel %vm504, %v303, 0.0
        %v515 = vsel %vm505, %v304, 0.0
        %v516 = vsel %vm506, %v305, 0.0
        %v517 = vsel %vm507, %v306, 0.0
        %v518 = vsel %vm508, %v307, 0.0
        %v519 = vsel %vm509, %v308, 0.0
        %v520 = vsel %vm510, %v309, 0.0
        %v521 = vsel %vm511, %v310, 0.0
        %v522 = vsel %vm512, %v311, 0.0
        %v523 = vsel %vm513, %v312, 0.0
        %vm524 = vcmask 60416
        %525 = vst.msk [vmem:[%s241] sm:$0xf] %vm524, 0
        %vm526 = vcmask 58368
        %vm527 = vsmask.f32 1280
        %vm528 = vmand %vm526, %vm527
        %v529 = vld [vmem:[%s241 + $0x4] sm:$0x3]
        %v530 = vsel %vm528, 0, %v529
        %531 = vst [vmem:[%s241 + $0x4] sm:$0x3] %v530
        %v532 = vpack.c.bf16 %v515, %v514
        %v533 = vpack.c.bf16 %v517, %v516
        %v534 = vpack.c.bf16 %v519, %v518
        %v535 = vpack.c.bf16 %v521, %v520
        %v536 = vpack.c.bf16 %v523, %v522
        %v542 = vunpack.c.l.b16 %v532
        %v543 = vunpack.c.h.b16 %v532
        %v544 = vunpack.c.l.b16 %v533
        %v545 = vunpack.c.h.b16 %v533
        %v546 = vunpack.c.l.b16 %v534
        %v547 = vunpack.c.h.b16 %v534
        %v548 = vunpack.c.l.b16 %v535
        %v549 = vunpack.c.h.b16 %v535
        %v550 = vunpack.c.l.b16 %v536
        %v551 = vunpack.c.h.b16 %v536
        %v552 = vpack.c.b16 %v542, %v542
        %v553 = vpack.c.b16 %v543, %v543
        %v554 = vpack.c.b16 %v544, %v544
        %v555 = vpack.c.b16 %v545, %v545
        %v556 = vpack.c.b16 %v546, %v546
        %v557 = vpack.c.b16 %v547, %v547
        %v558 = vpack.c.b16 %v548, %v548
        %v559 = vpack.c.b16 %v549, %v549
        %v560 = vpack.c.b16 %v550, %v550
        %v561 = vpack.c.b16 %v551, %v551
        %vm562 = vsmask.f32 5392
        %vm563 = vmor %vm527, %vm562
        %v565 = vshrl.u32 %v552, 16
        %v567 = vrot.slane %v565, 6
        %v568 = vshll.u32 %v552, 16
        %v570 = vrot.slane %v568, 7
        %v571 = vor.u32 %v567, %v570
        %v572 = vrot.slane %v571, 4
        %v574 = vshrl.u32 %v553, 16
        %v576 = vrot.slane %v574, 6
        %v577 = vshll.u32 %v553, 16
        %v579 = vrot.slane %v577, 7
        %v580 = vor.u32 %v576, %v579
        %v581 = vsel %vm563, %v572, %v580
        %v582 = vrot.slane %v580, 4
        %v584 = vshrl.u32 %v554, 16
        %v586 = vrot.slane %v584, 6
        %v587 = vshll.u32 %v554, 16
        %v589 = vrot.slane %v587, 7
        %v590 = vor.u32 %v586, %v589
        %v591 = vsel %vm563, %v582, %v590
        %v592 = vrot.slane %v590, 4
        %v594 = vshrl.u32 %v555, 16
        %v596 = vrot.slane %v594, 6
        %v597 = vshll.u32 %v555, 16
        %v599 = vrot.slane %v597, 7
        %v600 = vor.u32 %v596, %v599
        %v601 = vsel %vm563, %v592, %v600
        %v602 = vrot.slane %v600, 4
        %v604 = vshrl.u32 %v556, 16
        %v606 = vrot.slane %v604, 6
        %v607 = vshll.u32 %v556, 16
        %v609 = vrot.slane %v607, 7
        %v610 = vor.u32 %v606, %v609
        %v611 = vsel %vm563, %v602, %v610
        %v612 = vrot.slane %v610, 4
        %v614 = vshrl.u32 %v557, 16
        %v616 = vrot.slane %v614, 6
        %v617 = vshll.u32 %v557, 16
        %v619 = vrot.slane %v617, 7
        %v620 = vor.u32 %v616, %v619
        %v621 = vsel %vm563, %v612, %v620
        %v622 = vrot.slane %v620, 4
        %v624 = vshrl.u32 %v558, 16
        %v626 = vrot.slane %v624, 6
        %v627 = vshll.u32 %v558, 16
        %v629 = vrot.slane %v627, 7
        %v630 = vor.u32 %v626, %v629
        %v631 = vsel %vm563, %v622, %v630
        %v632 = vrot.slane %v630, 4
        %v634 = vshrl.u32 %v559, 16
        %v636 = vrot.slane %v634, 6
        %v637 = vshll.u32 %v559, 16
        %v639 = vrot.slane %v637, 7
        %v640 = vor.u32 %v636, %v639
        %v641 = vsel %vm563, %v632, %v640
        %v642 = vrot.slane %v640, 4
        %v644 = vshrl.u32 %v560, 16
        %v646 = vrot.slane %v644, 6
        %v647 = vshll.u32 %v560, 16
        %v649 = vrot.slane %v647, 7
        %v650 = vor.u32 %v646, %v649
        %v651 = vsel %vm563, %v642, %v650
        %v652 = vrot.slane %v650, 4
        %v654 = vshrl.u32 %v561, 16
        %v656 = vrot.slane %v654, 6
        %v657 = vshll.u32 %v561, 16
        %v659 = vrot.slane %v657, 7
        %v660 = vor.u32 %v656, %v659
        %v661 = vsel %vm563, %v652, %v660
        %v662 = vrot.slane %v660, 4
        %vm674 = vcmask 60417
        %vm675 = vsmask.f32 7942
        %vm676 = vmand %vm674, %vm675
        %v677 = vld [vmem:[%s241 + $0x4] sm:$0xe]
        %v678 = vsel %vm676, %v571, %v677
        %679 = vst [vmem:[%s241 + $0x4] sm:$0xe] %v678
        %680 = vst.msk [vmem:[%s241 + $0x8] sm:$0xf] %vm524, %v581
        %681 = vst.msk [vmem:[%s241 + $0xc] sm:$0xf] %vm524, %v591
        %682 = vst.msk [vmem:[%s241 + $0x10] sm:$0xf] %vm524, %v601
        %683 = vst.msk [vmem:[%s241 + $0x14] sm:$0xf] %vm524, %v611
        %684 = vst.msk [vmem:[%s241 + $0x18] sm:$0xf] %vm524, %v621
        %685 = vst.msk [vmem:[%s241 + $0x1c] sm:$0xf] %vm524, %v631
        %686 = vst.msk [vmem:[%s241 + $0x20] sm:$0xf] %vm524, %v641
        %687 = vst.msk [vmem:[%s241 + $0x24] sm:$0xf] %vm524, %v651
        %688 = vst.msk [vmem:[%s241 + $0x28] sm:$0xf] %vm524, %v661
        %v689 = vld [vmem:[%s241 + $0x2c] sm:$0x3]
        %v690 = vsel %vm528, %v662, %v689
        %691 = vst [vmem:[%s241 + $0x2c] sm:$0x3] %v690
        %v692 = vld [vmem:[%s241 + $0x2c] sm:$0xe]
        %v693 = vsel %vm676, 0, %v692
        %694 = vst [vmem:[%s241 + $0x2c] sm:$0xe] %v693
        %695 = vst.msk [vmem:[%s241 + $0x30] sm:$0xf] %vm524, 0
      $region36: #{down_block_forward.5} parent=31 // pred_fallthru
        _
      %p696 = pneg %p246
      // Predicated region
      $region37: #{down_block_forward.5} parent=31 // pred_check
        _
      $region38: #{down_block_forward.5} parent=31 // pred_check_branch
        %698 = sbr.rel (%p246) target = $region40
      $region39: #{down_block_forward.5} parent=31 // pred_region
        %vm699 = vcmask 60416
        %700 = vst.msk [vmem:[%s241] sm:$0xf] %vm699, 0
        %701 = vst.msk [vmem:[%s241 + $0x4] sm:$0xf] %vm699, 0
        %702 = vst.msk [vmem:[%s241 + $0x8] sm:$0xf] %vm699, 0
        %703 = vst.msk [vmem:[%s241 + $0xc] sm:$0xf] %vm699, 0
        %704 = vst.msk [vmem:[%s241 + $0x10] sm:$0xf] %vm699, 0
        %705 = vst.msk [vmem:[%s241 + $0x14] sm:$0xf] %vm699, 0
        %706 = vst.msk [vmem:[%s241 + $0x18] sm:$0xf] %vm699, 0
        %707 = vst.msk [vmem:[%s241 + $0x1c] sm:$0xf] %vm699, 0
        %708 = vst.msk [vmem:[%s241 + $0x20] sm:$0xf] %vm699, 0
        %709 = vst.msk [vmem:[%s241 + $0x24] sm:$0xf] %vm699, 0
        %710 = vst.msk [vmem:[%s241 + $0x28] sm:$0xf] %vm699, 0
        %711 = vst.msk [vmem:[%s241 + $0x2c] sm:$0xf] %vm699, 0
        %712 = vst.msk [vmem:[%s241 + $0x30] sm:$0xf] %vm699, 0
      $region40: #{down_block_forward.5} parent=31 // pred_fallthru
        _
      %p713 = scmp.lt.s32.totalorder %s18, 1
      %s714 = scalar_select %p713, %s18, 1
      %p715 = scmp.lt.s32.totalorder %s19, 9
      %s716 = scalar_select %p715, %s19, 9
      %s717 = smul.addr %s716, 13
      %s718 = smul.addr %s714, 130
      %s719 = sadd.s32 %s717, %s718
      %s720 = smul.addr %s719, 4
      %s721 = scalar_lea.vmem %s3, %s720
      // Predicated region
      $region41: #{down_block_forward.5} parent=31 // pred_check
        %p722 = pneg %p126
      $region42: #{down_block_forward.5} parent=31 // pred_check_branch
        %724 = sbr.rel (%p722) target = $region44
      $region43: #{down_block_forward.5} parent=31 // pred_region
        _
      $region44: #{down_block_forward.5} parent=31 // pred_fallthru
        _
    $region32: #{down_block_forward.5} parent=5 // pred_fallthru
      _
    %p725 = scmp.le.s32.totalorder 2, %s9
    // Predicated region
    $region45: #{down_block_forward.5} parent=5 // pred_check
      %p726 = pneg %p725
    $region46: #{down_block_forward.5} parent=5 // pred_check_branch
      %728 = sbr.rel (%p726) target = $region48
    $region47: #{down_block_forward.5} parent=5 // pred_region
      %s729 = ssub.s32 %s9, 2
      // Predicated region
      $region49: #{down_block_forward.5} parent=47 // pred_check
        %p730 = pneg %p132
      $region50: #{down_block_forward.5} parent=47 // pred_check_branch
        %732 = sbr.rel (%p730) target = $region52
      $region51: #{down_block_forward.5} parent=47 // pred_region
        %p733 = scmp.lt.s32.totalorder %s20, 1
        %s734 = scalar_select %p733, %s20, 1
        %p735 = scmp.lt.s32.totalorder %s21, 9
        %s736 = scalar_select %p735, %s21, 9
        %s737 = smul.addr %s736, 13
        %s738 = smul.addr %s734, 130
        %s739 = sadd.s32 %s737, %s738
        %s740 = smul.addr %s739, 4
        %s741 = scalar_lea.vmem %s3, %s740
      $region52: #{down_block_forward.5} parent=47 // pred_fallthru
        _
    $region48: #{down_block_forward.5} parent=5 // pred_fallthru
      _
  $region6: #{down_block_forward.5} parent=0 // loop_footer
    %s13 = sadd.s32 1, %s9
  $region7: #{down_block_forward.5} parent=0 // loop_footer_branch
    %8 = sbr.rel target = $region3
  $region8: #{down_block_forward.5} parent=0 // loop_exit
    _

// kernel: down_block_forward.4
$region0: #{down_block_forward.4}
  #allocation0 [shape = 'u32[]', space=smem, size = 0x4, offset = 0x4, fixed_abs, tag = 'smem constant byte address 0x4 - core index']
  #allocation1 [shape = 'u32[144,128]{1,0:T(1,128)}', space=vmem, size = 0x12000, scoped, tag = 'internal scratch']
  #allocation2 [shape = 'bf16[80,72]{1,0:T(16,128)(2,1)}', space=vmem, size = 0x5000, scoped, tag = 'scratch operand']
  %s0 = inlined_call_operand.vmem [shape: bf16[2,10,104,8], index: 0, kind: input, shape index: {}, may-alias: {0,1,2}]
  %s1 = inlined_call_operand.vmem [shape: bf16[2,10,104,8], index: 1, kind: input, shape index: {}, may-alias: {0,1,2}]
  %s2 = inlined_call_operand.vmem [shape: bf16[2,10,104,8], index: 2, kind: input, shape index: {}, may-alias: {0,1,2}]
  %s3 = inlined_call_operand.vmem [shape: bf16[3,72,8], index: 3, kind: input, shape index: {}]
  %s4 = inlined_call_operand.vmem [shape: bf16[2,8,80,8], index: 4, kind: output, shape index: {0}]
  %s5 = inlined_call_operand.vmem [shape: f32[2,8,2,8], index: 5, kind: output, shape index: {1}]
  %6 = xla_tuple %s4, %s5
  %s7 = sld [smem:[#allocation0]]
  $region57: #{down_block_forward.4} parent=0
    _
  %s9 = ssub.s32 1, %s7
  %s10 = scalar_select 0, %s9, %s7
  loop: start=0, step=1, limit=18
  $region2: #{down_block_forward.4} parent=0 // loop_pre_header
    _
  $region3: #{down_block_forward.4} parent=0 // loop_header
    %s12 = sphi 0, %s16
    %p13 = scmp.ge.s32.totalorder %s12, 18
    %s19 = sphi 0, %s31
    %s20 = sphi 0, %s27
    %s21 = sphi 0, %s19
    %s22 = sphi 0, %s20
    %s23 = sphi 0, %s21
    %s24 = sphi 0, %s22
    %s36 = sphi 0, %s38
    %s39 = sphi 0, %s36
    %s40 = sphi 0, %s39
    %s56 = sphi 0, %s40
    %s66 = sphi 0, %s68
    %s69 = sphi 0, %s66
    %s70 = sphi 0, %s69
    %s86 = sphi 0, %s70
    %s96 = sphi 0, %s98
    %s99 = sphi 0, %s96
    %s100 = sphi 0, %s99
    %s116 = sphi 0, %s100
    %s120 = sphi 0, %s120
    %s122 = sphi 0, %s120
    %s123 = sphi 0, %s122
    %s137 = sphi 0, %s123
    %s145 = sphi 0, %s147
    %s148 = sphi 0, %s145
    %s149 = sphi 0, %s148
    %s165 = sphi 0, %s149
    %s173 = sphi 0, %s175
    %s176 = sphi 0, %s173
    %s177 = sphi 0, %s176
    %s193 = sphi 0, %s177
  $region4: #{down_block_forward.4} parent=0 // loop_header_branch
    %15 = sbr.rel (%p13) target = $region8
  $region5: #{down_block_forward.4} parent=0 // loop_body
    %s17 = ssub.s32 %s12, 1
    %s18 = ssub.s32 %s12, 2
    %s25 = sadd.s32 1, %s20
    %p26 = scmp.ge.s32.totalorder %s25, 8
    %s27 = scalar_select %p26, 0, %s25
    %s28 = sadd.s32 1, %s19
    %s29 = scalar_select %p26, %s28, %s19
    %p30 = scmp.ge.s32.totalorder %s29, 2
    %s31 = scalar_select %p30, 0, %s29
    %s32 = ssub.s32 %s19, %s31
    %s33 = ssub.s32 %s20, %s27
    %s34 = sor.u32 %s32, %s33
    %p35 = scmp.eq.s32.totalorder %s34, 0
    %s37 = sadd.s32 %s36, 1
    %s38 = scalar_select %p35, %s36, %s37
    %p41 = pneg %p35
    %p42 = scmp.eq.s32.totalorder %s12, 15
    %p43 = por %p41, %p42
    %p44 = scmp.ne.s32.totalorder %s36, %s39
    %p45 = scmp.eq.s32.totalorder %s12, 0
    %p46 = por %p44, %p45
    %p47 = scmp.ne.s32.totalorder %s36, %s39
    %p48 = scmp.eq.s32.totalorder %s17, 15
    %p49 = por %p47, %p48
    %p50 = scmp.ne.s32.totalorder %s39, %s40
    %p51 = scmp.eq.s32.totalorder %s17, 0
    %p52 = por %p50, %p51
    %p53 = scmp.ne.s32.totalorder %s39, %s40
    %p54 = scmp.eq.s32.totalorder %s18, 15
    %p55 = por %p53, %p54
    %p57 = scmp.ne.s32.totalorder %s40, %s56
    %p58 = scmp.eq.s32.totalorder %s18, 0
    %p59 = por %p57, %p58
    %s60 = sadd.s32 %s20, 1
    %s61 = sadd.s32 %s27, 1
    %s62 = ssub.s32 %s19, %s31
    %s63 = ssub.s32 %s60, %s61
    %s64 = sor.u32 %s62, %s63
    %p65 = scmp.eq.s32.totalorder %s64, 0
    %s67 = sadd.s32 %s66, 1
    %s68 = scalar_select %p65, %s66, %s67
    %p71 = pneg %p65
    %p72 = scmp.eq.s32.totalorder %s12, 15
    %p73 = por %p71, %p72
    %p74 = scmp.ne.s32.totalorder %s66, %s69
    %p75 = scmp.eq.s32.totalorder %s12, 0
    %p76 = por %p74, %p75
    %p77 = scmp.ne.s32.totalorder %s66, %s69
    %p78 = scmp.eq.s32.totalorder %s17, 15
    %p79 = por %p77, %p78
    %p80 = scmp.ne.s32.totalorder %s69, %s70
    %p81 = scmp.eq.s32.totalorder %s17, 0
    %p82 = por %p80, %p81
    %p83 = scmp.ne.s32.totalorder %s69, %s70
    %p84 = scmp.eq.s32.totalorder %s18, 15
    %p85 = por %p83, %p84
    %p87 = scmp.ne.s32.totalorder %s70, %s86
    %p88 = scmp.eq.s32.totalorder %s18, 0
    %p89 = por %p87, %p88
    %s90 = sadd.s32 %s20, 2
    %s91 = sadd.s32 %s27, 2
    %s92 = ssub.s32 %s19, %s31
    %s93 = ssub.s32 %s90, %s91
    %s94 = sor.u32 %s92, %s93
    %p95 = scmp.eq.s32.totalorder %s94, 0
    %s97 = sadd.s32 %s96, 1
    %s98 = scalar_select %p95, %s96, %s97
    %p101 = pneg %p95
    %p102 = scmp.eq.s32.totalorder %s12, 15
    %p103 = por %p101, %p102
    %p104 = scmp.ne.s32.totalorder %s96, %s99
    %p105 = scmp.eq.s32.totalorder %s12, 0
    %p106 = por %p104, %p105
    %p107 = scmp.ne.s32.totalorder %s96, %s99
    %p108 = scmp.eq.s32.totalorder %s17, 15
    %p109 = por %p107, %p108
    %p110 = scmp.ne.s32.totalorder %s99, %s100
    %p111 = scmp.eq.s32.totalorder %s17, 0
    %p112 = por %p110, %p111
    %p113 = scmp.ne.s32.totalorder %s99, %s100
    %p114 = scmp.eq.s32.totalorder %s18, 15
    %p115 = por %p113, %p114
    %p117 = scmp.ne.s32.totalorder %s100, %s116
    %p118 = scmp.eq.s32.totalorder %s18, 0
    %p119 = por %p117, %p118
    %s121 = sadd.s32 %s120, 1
    %p124 = scmp.eq.s32.totalorder %s12, 15
    %p125 = scmp.ne.s32.totalorder %s120, %s122
    %p126 = scmp.eq.s32.totalorder %s12, 0
    %p127 = por %p125, %p126
    %p128 = scmp.ne.s32.totalorder %s120, %s122
    %p129 = scmp.eq.s32.totalorder %s17, 15
    %p130 = por %p128, %p129
    %p131 = scmp.ne.s32.totalorder %s122, %s123
    %p132 = scmp.eq.s32.totalorder %s17, 0
    %p133 = por %p131, %p132
    %p134 = scmp.ne.s32.totalorder %s122, %s123
    %p135 = scmp.eq.s32.totalorder %s18, 15
    %p136 = por %p134, %p135
    %p138 = scmp.ne.s32.totalorder %s123, %s137
    %p139 = scmp.eq.s32.totalorder %s18, 0
    %p140 = por %p138, %p139
    %s141 = ssub.s32 %s19, %s31
    %s142 = ssub.s32 %s20, %s27
    %s143 = sor.u32 %s141, %s142
    %p144 = scmp.eq.s32.totalorder %s143, 0
    %s146 = sadd.s32 %s145, 1
    %s147 = scalar_select %p144, %s145, %s146
    %p150 = pneg %p144
    %p151 = scmp.eq.s32.totalorder %s12, 15
    %p152 = por %p150, %p151
    %p153 = scmp.ne.s32.totalorder %s145, %s148
    %p154 = scmp.eq.s32.totalorder %s12, 0
    %p155 = por %p153, %p154
    %p156 = scmp.ne.s32.totalorder %s145, %s148
    %p157 = scmp.eq.s32.totalorder %s17, 15
    %p158 = por %p156, %p157
    %p159 = scmp.ne.s32.totalorder %s148, %s149
    %p160 = scmp.eq.s32.totalorder %s17, 0
    %p161 = por %p159, %p160
    %p162 = scmp.ne.s32.totalorder %s148, %s149
    %p163 = scmp.eq.s32.totalorder %s18, 15
    %p164 = por %p162, %p163
    %p166 = scmp.ne.s32.totalorder %s149, %s165
    %p167 = scmp.eq.s32.totalorder %s18, 0
    %p168 = por %p166, %p167
    %s169 = ssub.s32 %s19, %s31
    %s170 = ssub.s32 %s20, %s27
    %s171 = sor.u32 %s169, %s170
    %p172 = scmp.eq.s32.totalorder %s171, 0
    %s174 = sadd.s32 %s173, 1
    %s175 = scalar_select %p172, %s173, %s174
    %p178 = pneg %p172
    %p179 = scmp.eq.s32.totalorder %s12, 15
    %p180 = por %p178, %p179
    %p181 = scmp.ne.s32.totalorder %s173, %s176
    %p182 = scmp.eq.s32.totalorder %s12, 0
    %p183 = por %p181, %p182
    %p184 = scmp.ne.s32.totalorder %s173, %s176
    %p185 = scmp.eq.s32.totalorder %s17, 15
    %p186 = por %p184, %p185
    %p187 = scmp.ne.s32.totalorder %s176, %s177
    %p188 = scmp.eq.s32.totalorder %s17, 0
    %p189 = por %p187, %p188
    %p190 = scmp.ne.s32.totalorder %s176, %s177
    %p191 = scmp.eq.s32.totalorder %s18, 15
    %p192 = por %p190, %p191
    %p194 = scmp.ne.s32.totalorder %s177, %s193
    %p195 = scmp.eq.s32.totalorder %s18, 0
    %p196 = por %p194, %p195
    %p197 = scmp.le.s32.totalorder 1, %s12
    %p198 = scmp.lt.s32.totalorder %s12, 17
    %p199 = pnand %p197, %p198
    %p200 = pneg %p199
    // Predicated region
    $region9: #{down_block_forward.4} parent=5 // pred_check
      _
    $region10: #{down_block_forward.4} parent=5 // pred_check_branch
      %202 = sbr.rel (%p199) target = $region12
    $region11: #{down_block_forward.4} parent=5 // pred_region
      %s203 = ssub.s32 %s12, 1
      // Predicated region
      $region13: #{down_block_forward.4} parent=11 // pred_check
        %p204 = pneg %p133
      $region14: #{down_block_forward.4} parent=11 // pred_check_branch
        %206 = sbr.rel (%p204) target = $region16
      $region15: #{down_block_forward.4} parent=11 // pred_region
        _
      $region16: #{down_block_forward.4} parent=11 // pred_fallthru
        _
    $region12: #{down_block_forward.4} parent=5 // pred_fallthru
      _
    %p207 = scmp.lt.s32.totalorder %s12, 16
    // Predicated region
    $region17: #{down_block_forward.4} parent=5 // pred_check
      %p208 = pneg %p207
    $region18: #{down_block_forward.4} parent=5 // pred_check_branch
      %210 = sbr.rel (%p208) target = $region20
    $region19: #{down_block_forward.4} parent=5 // pred_region
      // Predicated region
      $region21: #{down_block_forward.4} parent=19 // pred_check
        %p211 = pneg %p46
      $region22: #{down_block_forward.4} parent=19 // pred_check_branch
        %213 = sbr.rel (%p211) target = $region24
      $region23: #{down_block_forward.4} parent=19 // pred_region
        %p214 = scmp.lt.s32.totalorder %s19, 1
        %s215 = scalar_select %p214, %s19, 1
        %p216 = scmp.lt.s32.totalorder %s20, 9
        %s217 = scalar_select %p216, %s20, 9
        %s218 = smul.addr %s217, 13
        %s219 = smul.addr %s215, 130
        %s220 = sadd.s32 %s218, %s219
        %s221 = smul.addr %s220, 4
        %s222 = scalar_lea.vmem %s0, %s221
      $region24: #{down_block_forward.4} parent=19 // pred_fallthru
        _
      // Predicated region
      $region25: #{down_block_forward.4} parent=19 // pred_check
        %p223 = pneg %p76
      $region26: #{down_block_forward.4} parent=19 // pred_check_branch
        %225 = sbr.rel (%p223) target = $region28
      $region27: #{down_block_forward.4} parent=19 // pred_region
        %s226 = sadd.s32 %s20, 1
        %p227 = scmp.lt.s32.totalorder %s19, 1
        %s228 = scalar_select %p227, %s19, 1
        %p229 = scmp.lt.s32.totalorder %s226, 9
        %s230 = scalar_select %p229, %s226, 9
        %s231 = smul.addr %s230, 13
        %s232 = smul.addr %s228, 130
        %s233 = sadd.s32 %s231, %s232
        %s234 = smul.addr %s233, 4
        %s235 = scalar_lea.vmem %s1, %s234
        %s236 = sadd.s32 %s20, 1
      $region28: #{down_block_forward.4} parent=19 // pred_fallthru
        _
      // Predicated region
      $region29: #{down_block_forward.4} parent=19 // pred_check
        %p237 = pneg %p106
      $region30: #{down_block_forward.4} parent=19 // pred_check_branch
        %239 = sbr.rel (%p237) target = $region32
      $region31: #{down_block_forward.4} parent=19 // pred_region
        %s240 = sadd.s32 %s20, 2
        %p241 = scmp.lt.s32.totalorder %s19, 1
        %s242 = scalar_select %p241, %s19, 1
        %p243 = scmp.lt.s32.totalorder %s240, 9
        %s244 = scalar_select %p243, %s240, 9
        %s245 = smul.addr %s244, 13
        %s246 = smul.addr %s242, 130
        %s247 = sadd.s32 %s245, %s246
        %s248 = smul.addr %s247, 4
        %s249 = scalar_lea.vmem %s2, %s248
        %s250 = sadd.s32 %s20, 2
      $region32: #{down_block_forward.4} parent=19 // pred_fallthru
        _
    $region20: #{down_block_forward.4} parent=5 // pred_fallthru
      _
    %p251 = scmp.le.s32.totalorder 1, %s12
    %p252 = scmp.lt.s32.totalorder %s12, 17
    %p253 = pnand %p251, %p252
    %p254 = pneg %p253
    // Predicated region
    $region33: #{down_block_forward.4} parent=5 // pred_check
      _
    $region34: #{down_block_forward.4} parent=5 // pred_check_branch
      %256 = sbr.rel (%p253) target = $region36
    $region35: #{down_block_forward.4} parent=5 // pred_region
      %s257 = ssub.s32 %s12, 1
      %p258 = scmp.lt.s32.totalorder %s21, 1
      %s259 = scalar_select %p258, %s21, 1
      %p260 = scmp.lt.s32.totalorder %s22, 9
      %s261 = scalar_select %p260, %s22, 9
      %s262 = smul.addr %s261, 13
      %s263 = smul.addr %s259, 130
      %s264 = sadd.s32 %s262, %s263
      %s265 = smul.addr %s264, 4
      %s266 = scalar_lea.vmem %s0, %s265
      %p267 = pneg %p52
      %p268 = pneg %p49
      %s269 = sadd.s32 %s22, 1
      %p270 = scmp.lt.s32.totalorder %s21, 1
      %s271 = scalar_select %p270, %s21, 1
      %p272 = scmp.lt.s32.totalorder %s269, 9
      %s273 = scalar_select %p272, %s269, 9
      %s274 = smul.addr %s273, 13
      %s275 = smul.addr %s271, 130
      %s276 = sadd.s32 %s274, %s275
      %s277 = smul.addr %s276, 4
      %s278 = scalar_lea.vmem %s1, %s277
      %p279 = pneg %p82
      %p280 = pneg %p79
      %s281 = sadd.s32 %s22, 2
      %p282 = scmp.lt.s32.totalorder %s21, 1
      %s283 = scalar_select %p282, %s21, 1
      %p284 = scmp.lt.s32.totalorder %s281, 9
      %s285 = scalar_select %p284, %s281, 9
      %s286 = smul.addr %s285, 13
      %s287 = smul.addr %s283, 130
      %s288 = sadd.s32 %s286, %s287
      %s289 = smul.addr %s288, 4
      %s290 = scalar_lea.vmem %s2, %s289
      %p291 = pneg %p112
      %p292 = pneg %p109
      %p293 = pneg %p133
      %p294 = pneg %p130
      %p295 = pneg %p161
      %p296 = pneg %p158
      %p297 = scmp.lt.s32.totalorder %s21, 1
      %s298 = scalar_select %p297, %s21, 1
      %p299 = scmp.lt.s32.totalorder %s22, 7
      %s300 = scalar_select %p299, %s22, 7
      %s301 = smul.addr %s300, 10
      %s302 = smul.addr %s298, 80
      %s303 = sadd.s32 %s301, %s302
      %s304 = smul.addr %s303, 4
      %s305 = scalar_lea.vmem %s4, %s304
      %p306 = pneg %p189
      %p307 = pneg %p186
      %p308 = scmp.lt.s32.totalorder %s21, 1
      %s309 = scalar_select %p308, %s21, 1
      %p310 = scmp.lt.s32.totalorder %s22, 7
      %s311 = scalar_select %p310, %s22, 7
      %s312 = smul.addr %s309, 8
      %s313 = sadd.s32 %s311, %s312
      %s314 = smul.addr %s313, 2
      %s315 = scalar_lea.vmem %s5, %s314
      %p316 = scmp.lt.s32.totalorder %s21, 1
      %s317 = scalar_select %p316, %s21, 1
      %p318 = scmp.lt.s32.totalorder %s22, 9
      %s319 = scalar_select %p318, %s22, 9
      %s320 = smul.addr %s319, 13
      %s321 = smul.addr %s317, 130
      %s322 = sadd.s32 %s320, %s321
      %s323 = smul.addr %s322, 4
      %s324 = scalar_lea.vmem %s0, %s323
      %s325 = sadd.s32 %s22, 1
      %p326 = scmp.lt.s32.totalorder %s21, 1
      %s327 = scalar_select %p326, %s21, 1
      %p328 = scmp.lt.s32.totalorder %s325, 9
      %s329 = scalar_select %p328, %s325, 9
      %s330 = smul.addr %s329, 13
      %s331 = smul.addr %s327, 130
      %s332 = sadd.s32 %s330, %s331
      %s333 = smul.addr %s332, 4
      %s334 = scalar_lea.vmem %s1, %s333
      %s335 = sadd.s32 %s22, 1
      %s336 = sadd.s32 %s22, 2
      %p337 = scmp.lt.s32.totalorder %s21, 1
      %s338 = scalar_select %p337, %s21, 1
      %p339 = scmp.lt.s32.totalorder %s336, 9
      %s340 = scalar_select %p339, %s336, 9
      %s341 = smul.addr %s340, 13
      %s342 = smul.addr %s338, 130
      %s343 = sadd.s32 %s341, %s342
      %s344 = smul.addr %s343, 4
      %s345 = scalar_lea.vmem %s2, %s344
      %s346 = sadd.s32 %s22, 2
      %p347 = scmp.lt.s32.totalorder %s21, 1
      %s348 = scalar_select %p347, %s21, 1
      %p349 = scmp.lt.s32.totalorder %s22, 7
      %s350 = scalar_select %p349, %s22, 7
      %s351 = smul.addr %s350, 10
      %s352 = smul.addr %s348, 80
      %s353 = sadd.s32 %s351, %s352
      %s354 = smul.addr %s353, 4
      %s355 = scalar_lea.vmem %s4, %s354
      %p356 = scmp.lt.s32.totalorder %s21, 1
      %s357 = scalar_select %p356, %s21, 1
      %p358 = scmp.lt.s32.totalorder %s22, 7
      %s359 = scalar_select %p358, %s22, 7
      %s360 = smul.addr %s357, 8
      %s361 = sadd.s32 %s359, %s360
      %s362 = smul.addr %s361, 2
      %s363 = scalar_lea.vmem %s5, %s362
      %v365 = vld [vmem:[%s324] sm:$0xf]
      %v366 = vld [vmem:[%s324 + $0x4] sm:$0xf]
      %v367 = vld [vmem:[%s324 + $0x8] sm:$0xf]
      %v368 = vld [vmem:[%s324 + $0xc] sm:$0xf]
      %v369 = vld [vmem:[%s324 + $0x10] sm:$0xf]
      %v370 = vld [vmem:[%s324 + $0x14] sm:$0xf]
      %v371 = vld [vmem:[%s324 + $0x18] sm:$0xf]
      %v372 = vld [vmem:[%s324 + $0x1c] sm:$0xf]
      %v373 = vld [vmem:[%s324 + $0x20] sm:$0xf]
      %v374 = vld [vmem:[%s324 + $0x24] sm:$0xf]
      %v385 = vunpack.c.l.b16 %v365
      %v386 = vunpack.c.l.b16 %v366
      %v387 = vunpack.c.l.b16 %v367
      %v388 = vunpack.c.l.b16 %v368
      %v389 = vunpack.c.l.b16 %v369
      %v390 = vunpack.c.l.b16 %v370
      %v391 = vunpack.c.l.b16 %v371
      %v392 = vunpack.c.l.b16 %v372
      %v393 = vunpack.c.l.b16 %v373
      %v394 = vunpack.c.l.b16 %v374
      %v395 = vpack.c.b16 %v386, %v385
      %v396 = vpack.c.b16 %v388, %v387
      %v397 = vpack.c.b16 %v390, %v389
      %v398 = vpack.c.b16 %v392, %v391
      %v399 = vpack.c.b16 %v394, %v393
      %vm405 = vcmask 64512
      %406 = vst.msk [vmem:[#allocation2] sm:$0xff] %vm405, %v395
      %407 = vst.msk [vmem:[#allocation2 + $0x8] sm:$0xff] %vm405, %v396
      %408 = vst.msk [vmem:[#allocation2 + $0x10] sm:$0xff] %vm405, %v397
      %409 = vst.msk [vmem:[#allocation2 + $0x18] sm:$0xff] %vm405, %v398
      %410 = vst.msk [vmem:[#allocation2 + $0x20] sm:$0xff] %vm405, %v399
      %v411 = vld [vmem:[%s324] sm:$0xf]
      %v412 = vld [vmem:[%s324 + $0x4] sm:$0xf]
      %v413 = vld [vmem:[%s324 + $0x8] sm:$0xf]
      %v414 = vld [vmem:[%s324 + $0xc] sm:$0xf]
      %v415 = vld [vmem:[%s324 + $0x10] sm:$0xf]
      %v416 = vld [vmem:[%s324 + $0x14] sm:$0xf]
      %v417 = vld [vmem:[%s324 + $0x18] sm:$0xf]
      %v418 = vld [vmem:[%s324 + $0x1c] sm:$0xf]
      %v419 = vld [vmem:[%s324 + $0x20] sm:$0xf]
      %v420 = vld [vmem:[%s324 + $0x24] sm:$0xf]
      %v421 = vld [vmem:[%s324 + $0x28] sm:$0x1]
      %v433 = vunpack.c.l.b16 %v411
      %v434 = vunpack.c.l.b16 %v412
      %v435 = vunpack.c.l.b16 %v413
      %v436 = vunpack.c.l.b16 %v414
      %v437 = vunpack.c.l.b16 %v415
      %v438 = vunpack.c.l.b16 %v416
      %v439 = vunpack.c.l.b16 %v417
      %v440 = vunpack.c.l.b16 %v418
      %v441 = vunpack.c.l.b16 %v419
      %v442 = vunpack.c.l.b16 %v420
      %v443 = vunpack.c.l.b16 %v421
      %v444 = vpack.c.b16 %v434, %v433
      %v445 = vpack.c.b16 %v436, %v435
      %v446 = vpack.c.b16 %v438, %v437
      %v447 = vpack.c.b16 %v440, %v439
      %v448 = vpack.c.b16 %v442, %v441
      %v449 = vpack.c.b16 %v443, %v443
      %vm450 = vsmask.f32 7424
      %v452 = vshrl.u32 %v444, 16
      %v454 = vshll.u32 %v444, 16
      %v456 = vrot.slane %v454, 1
      %v457 = vor.u32 %v452, %v456
      %v459 = vshll.u32 %v445, 16
      %v461 = vrot.slane %v459, 1
      %v462 = vsel %vm450, %v457, %v461
      %v463 = vshrl.u32 %v445, 16
      %v465 = vor.u32 %v463, %v461
      %v467 = vshll.u32 %v446, 16
      %v469 = vrot.slane %v467, 1
      %v470 = vsel %vm450, %v465, %v469
      %v471 = vshrl.u32 %v446, 16
      %v473 = vor.u32 %v471, %v469
      %v475 = vshll.u32 %v447, 16
      %v477 = vrot.slane %v475, 1
      %v478 = vsel %vm450, %v473, %v477
      %v479 = vshrl.u32 %v447, 16
      %v481 = vor.u32 %v479, %v477
      %v483 = vshll.u32 %v448, 16
      %v485 = vrot.slane %v483, 1
      %v486 = vsel %vm450, %v481, %v485
      %v487 = vshrl.u32 %v448, 16
      %v489 = vor.u32 %v487, %v485
      %v491 = vshll.u32 %v449, 16
      %v493 = vrot.slane %v491, 1
      %v494 = vsel %vm450, %v489, %v493
      %495 = vrot.lane.b32.xlu0 %v462, 8
      %v496 = vpop.permute.xlu0 %495
      %497 = vrot.lane.b32.xlu0 %v470, 8
      %v498 = vpop.permute.xlu0 %497
      %499 = vrot.lane.b32.xlu0 %v478, 8
      %v500 = vpop.permute.xlu0 %499
      %501 = vrot.lane.b32.xlu0 %v486, 8
      %v502 = vpop.permute.xlu0 %501
      %503 = vrot.lane.b32.xlu0 %v494, 8
      %v504 = vpop.permute.xlu0 %503
      %vm510 = vcmask 130112
      %511 = vst.msk [vmem:[#allocation2] sm:$0xff] %vm510, %v496
      %512 = vst.msk [vmem:[#allocation2 + $0x8] sm:$0xff] %vm510, %v498
      %513 = vst.msk [vmem:[#allocation2 + $0x10] sm:$0xff] %vm510, %v500
      %514 = vst.msk [vmem:[#allocation2 + $0x18] sm:$0xff] %vm510, %v502
      %515 = vst.msk [vmem:[#allocation2 + $0x20] sm:$0xff] %vm510, %v504
      %v516 = vld [vmem:[%s324] sm:$0xe]
      %v517 = vld [vmem:[%s324 + $0x4] sm:$0xf]
      %v518 = vld [vmem:[%s324 + $0x8] sm:$0xf]
      %v519 = vld [vmem:[%s324 + $0xc] sm:$0xf]
      %v520 = vld [vmem:[%s324 + $0x10] sm:$0xf]
      %v521 = vld [vmem:[%s324 + $0x14] sm:$0xf]
      %v522 = vld [vmem:[%s324 + $0x18] sm:$0xf]
      %v523 = vld [vmem:[%s324 + $0x1c] sm:$0xf]
      %v524 = vld [vmem:[%s324 + $0x20] sm:$0xf]
      %v525 = vld [vmem:[%s324 + $0x24] sm:$0xf]
      %v526 = vld [vmem:[%s324 + $0x28] sm:$0x1]
      %v538 = vunpack.c.l.b16 %v516
      %v539 = vunpack.c.l.b16 %v517
      %v540 = vunpack.c.l.b16 %v518
      %v541 = vunpack.c.l.b16 %v519
      %v542 = vunpack.c.l.b16 %v520
      %v543 = vunpack.c.l.b16 %v521
      %v544 = vunpack.c.l.b16 %v522
      %v545 = vunpack.c.l.b16 %v523
      %v546 = vunpack.c.l.b16 %v524
      %v547 = vunpack.c.l.b16 %v525
      %v548 = vunpack.c.l.b16 %v526
      %v549 = vpack.c.b16 %v539, %v538
      %v550 = vpack.c.b16 %v541, %v540
      %v551 = vpack.c.b16 %v543, %v542
      %v552 = vpack.c.b16 %v545, %v544
      %v553 = vpack.c.b16 %v547, %v546
      %v554 = vpack.c.b16 %v548, %v548
      %vm555 = vcmask 1046528
      %v556 = vrot.slane %v549, 1
      %v557 = vrot.slane %v550, 1
      %v558 = vsel %vm555, %v556, %v557
      %v559 = vrot.slane %v551, 1
      %v560 = vsel %vm555, %v557, %v559
      %v561 = vrot.slane %v552, 1
      %v562 = vsel %vm555, %v559, %v561
      %v563 = vrot.slane %v553, 1
      %v564 = vsel %vm555, %v561, %v563
      %v565 = vrot.slane %v554, 1
      %v566 = vsel %vm555, %v563, %v565
      %567 = vrot.lane.b32.xlu0 %v558, 16
      %v568 = vpop.permute.xlu0 %567
      %569 = vrot.lane.b32.xlu0 %v560, 16
      %v570 = vpop.permute.xlu0 %569
      %571 = vrot.lane.b32.xlu0 %v562, 16
      %v572 = vpop.permute.xlu0 %571
      %573 = vrot.lane.b32.xlu0 %v564, 16
      %v574 = vpop.permute.xlu0 %573
      %575 = vrot.lane.b32.xlu0 %v566, 16
      %v576 = vpop.permute.xlu0 %575
      %vm582 = vcmask 195712
      %583 = vst.msk [vmem:[#allocation2] sm:$0xff] %vm582, %v568
      %584 = vst.msk [vmem:[#allocation2 + $0x8] sm:$0xff] %vm582, %v570
      %585 = vst.msk [vmem:[#allocation2 + $0x10] sm:$0xff] %vm582, %v572
      %586 = vst.msk [vmem:[#allocation2 + $0x18] sm:$0xff] %vm582, %v574
      %587 = vst.msk [vmem:[#allocation2 + $0x20] sm:$0xff] %vm582, %v576
      %v588 = vld [vmem:[%s324 + $0x4] sm:$0xe]
      %v589 = vld [vmem:[%s324 + $0x8] sm:$0xf]
      %v590 = vld [vmem:[%s324 + $0xc] sm:$0xf]
      %v591 = vld [vmem:[%s324 + $0x10] sm:$0xf]
      %v592 = vld [vmem:[%s324 + $0x14] sm:$0xf]
      %v593 = vld [vmem:[%s324 + $0x18] sm:$0xf]
      %v594 = vld [vmem:[%s324 + $0x1c] sm:$0xf]
      %v595 = vld [vmem:[%s324 + $0x20] sm:$0xf]
      %v596 = vld [vmem:[%s324 + $0x24] sm:$0xf]
      %v597 = vld [vmem:[%s324 + $0x28] sm:$0xf]
      %v598 = vld [vmem:[%s324 + $0x2c] sm:$0x1]
      %v610 = vunpack.c.l.b16 %v588
      %v611 = vunpack.c.l.b16 %v589
      %v612 = vunpack.c.l.b16 %v590
      %v613 = vunpack.c.l.b16 %v591
      %v614 = vunpack.c.l.b16 %v592
      %v615 = vunpack.c.l.b16 %v593
      %v616 = vunpack.c.l.b16 %v594
      %v617 = vunpack.c.l.b16 %v595
      %v618 = vunpack.c.l.b16 %v596
      %v619 = vunpack.c.l.b16 %v597
      %v620 = vunpack.c.l.b16 %v598
      %v621 = vpack.c.b16 %v611, %v610
      %v622 = vpack.c.b16 %v613, %v612
      %v623 = vpack.c.b16 %v615, %v614
      %v624 = vpack.c.b16 %v617, %v616
      %v625 = vpack.c.b16 %v619, %v618
      %v626 = vpack.c.b16 %v620, %v620
      %v627 = vrot.slane %v621, 1
      %v628 = vrot.slane %v622, 1
      %v629 = vsel %vm555, %v627, %v628
      %v630 = vrot.slane %v623, 1
      %v631 = vsel %vm555, %v628, %v630
      %v632 = vrot.slane %v624, 1
      %v633 = vsel %vm555, %v630, %v632
      %v634 = vrot.slane %v625, 1
      %v635 = vsel %vm555, %v632, %v634
      %v636 = vrot.slane %v626, 1
      %v637 = vsel %vm555, %v634, %v636
      %638 = vrot.lane.b32.xlu0 %v629, 24
      %v639 = vpop.permute.xlu0 %638
      %640 = vrot.lane.b32.xlu0 %v631, 24
      %v641 = vpop.permute.xlu0 %640
      %642 = vrot.lane.b32.xlu0 %v633, 24
      %v643 = vpop.permute.xlu0 %642
      %644 = vrot.lane.b32.xlu0 %v635, 24
      %v645 = vpop.permute.xlu0 %644
      %646 = vrot.lane.b32.xlu0 %v637, 24
      %v647 = vpop.permute.xlu0 %646
      %vm653 = vcmask 261312
      %654 = vst.msk [vmem:[#allocation2] sm:$0xff] %vm653, %v639
      %655 = vst.msk [vmem:[#allocation2 + $0x8] sm:$0xff] %vm653, %v641
      %656 = vst.msk [vmem:[#allocation2 + $0x10] sm:$0xff] %vm653, %v643
      %657 = vst.msk [vmem:[#allocation2 + $0x18] sm:$0xff] %vm653, %v645
      %658 = vst.msk [vmem:[#allocation2 + $0x20] sm:$0xff] %vm653, %v647
      %v659 = vld [vmem:[%s324 + $0x4] sm:$0xe]
      %v660 = vld [vmem:[%s324 + $0x8] sm:$0xf]
      %v661 = vld [vmem:[%s324 + $0xc] sm:$0xf]
      %v662 = vld [vmem:[%s324 + $0x10] sm:$0xf]
      %v663 = vld [vmem:[%s324 + $0x14] sm:$0xf]
      %v664 = vld [vmem:[%s324 + $0x18] sm:$0xf]
      %v665 = vld [vmem:[%s324 + $0x1c] sm:$0xf]
      %v666 = vld [vmem:[%s324 + $0x20] sm:$0xf]
      %v667 = vld [vmem:[%s324 + $0x24] sm:$0xf]
      %v668 = vld [vmem:[%s324 + $0x28] sm:$0xf]
      %v669 = vld [vmem:[%s324 + $0x2c] sm:$0x3]
      %v681 = vunpack.c.l.b16 %v659
      %v682 = vunpack.c.l.b16 %v660
      %v683 = vunpack.c.l.b16 %v661
      %v684 = vunpack.c.l.b16 %v662
      %v685 = vunpack.c.l.b16 %v663
      %v686 = vunpack.c.l.b16 %v664
      %v687 = vunpack.c.l.b16 %v665
      %v688 = vunpack.c.l.b16 %v666
      %v689 = vunpack.c.l.b16 %v667
      %v690 = vunpack.c.l.b16 %v668
      %v691 = vunpack.c.l.b16 %v669
      %v692 = vpack.c.b16 %v682, %v681
      %v693 = vpack.c.b16 %v684, %v683
      %v694 = vpack.c.b16 %v686, %v685
      %v695 = vpack.c.b16 %v688, %v687
      %v696 = vpack.c.b16 %v690, %v689
      %v697 = vpack.c.b16 %v691, %v691
      %vm698 = vsmask.f32 6400
      %v700 = vshrl.u32 %v692, 16
      %v702 = vrot.slane %v700, 1
      %v703 = vshll.u32 %v692, 16
      %v705 = vrot.slane %v703, 2
      %v706 = vor.u32 %v702, %v705
      %v708 = vshrl.u32 %v693, 16
      %v710 = vrot.slane %v708, 1
      %v711 = vshll.u32 %v693, 16
      %v713 = vrot.slane %v711, 2
      %v714 = vor.u32 %v710, %v713
      %v715 = vsel %vm698, %v706, %v714
      %v717 = vshrl.u32 %v694, 16
      %v719 = vrot.slane %v717, 1
      %v720 = vshll.u32 %v694, 16
      %v722 = vrot.slane %v720, 2
      %v723 = vor.u32 %v719, %v722
      %v724 = vsel %vm698, %v714, %v723
      %v726 = vshrl.u32 %v695, 16
      %v728 = vrot.slane %v726, 1
      %v729 = vshll.u32 %v695, 16
      %v731 = vrot.slane %v729, 2
      %v732 = vor.u32 %v728, %v731
      %v733 = vsel %vm698, %v723, %v732
      %v735 = vshrl.u32 %v696, 16
      %v737 = vrot.slane %v735, 1
      %v738 = vshll.u32 %v696, 16
      %v740 = vrot.slane %v738, 2
      %v741 = vor.u32 %v737, %v740
      %v742 = vsel %vm698, %v732, %v741
      %v744 = vshrl.u32 %v697, 16
      %v746 = vrot.slane %v744, 1
      %v747 = vshll.u32 %v697, 16
      %v749 = vrot.slane %v747, 2
      %v750 = vor.u32 %v746, %v749
      %v751 = vsel %vm698, %v741, %v750
      %752 = vrot.lane.b32.xlu0 %v715, 32
      %v753 = vpop.permute.xlu0 %752
      %754 = vrot.lane.b32.xlu0 %v724, 32
      %v755 = vpop.permute.xlu0 %754
      %756 = vrot.lane.b32.xlu0 %v733, 32
      %v757 = vpop.permute.xlu0 %756
      %758 = vrot.lane.b32.xlu0 %v742, 32
      %v759 = vpop.permute.xlu0 %758
      %760 = vrot.lane.b32.xlu0 %v751, 32
      %v761 = vpop.permute.xlu0 %760
      %vm767 = vcmask 326912
      %768 = vst.msk [vmem:[#allocation2] sm:$0xff] %vm767, %v753
      %769 = vst.msk [vmem:[#allocation2 + $0x8] sm:$0xff] %vm767, %v755
      %770 = vst.msk [vmem:[#allocation2 + $0x10] sm:$0xff] %vm767, %v757
      %771 = vst.msk [vmem:[#allocation2 + $0x18] sm:$0xff] %vm767, %v759
      %772 = vst.msk [vmem:[#allocation2 + $0x20] sm:$0xff] %vm767, %v761
      %v773 = vld [vmem:[%s324 + $0x4] sm:$0xc]
      %v774 = vld [vmem:[%s324 + $0x8] sm:$0xf]
      %v775 = vld [vmem:[%s324 + $0xc] sm:$0xf]
      %v776 = vld [vmem:[%s324 + $0x10] sm:$0xf]
      %v777 = vld [vmem:[%s324 + $0x14] sm:$0xf]
      %v778 = vld [vmem:[%s324 + $0x18] sm:$0xf]
      %v779 = vld [vmem:[%s324 + $0x1c] sm:$0xf]
      %v780 = vld [vmem:[%s324 + $0x20] sm:$0xf]
      %v781 = vld [vmem:[%s324 + $0x24] sm:$0xf]
      %v782 = vld [vmem:[%s324 + $0x28] sm:$0xf]
      %v783 = vld [vmem:[%s324 + $0x2c] sm:$0x3]
      %v795 = vunpack.c.l.b16 %v773
      %v796 = vunpack.c.l.b16 %v774
      %v797 = vunpack.c.l.b16 %v775
      %v798 = vunpack.c.l.b16 %v776
      %v799 = vunpack.c.l.b16 %v777
      %v800 = vunpack.c.l.b16 %v778
      %v801 = vunpack.c.l.b16 %v779
      %v802 = vunpack.c.l.b16 %v780
      %v803 = vunpack.c.l.b16 %v781
      %v804 = vunpack.c.l.b16 %v782
      %v805 = vunpack.c.l.b16 %v783
      %v806 = vpack.c.b16 %v796, %v795
      %v807 = vpack.c.b16 %v798, %v797
      %v808 = vpack.c.b16 %v800, %v799
      %v809 = vpack.c.b16 %v802, %v801
      %v810 = vpack.c.b16 %v804, %v803
      %v811 = vpack.c.b16 %v805, %v805
      %vm812 = vcmask 1045504
      %v813 = vrot.slane %v806, 2
      %v814 = vrot.slane %v807, 2
      %v815 = vsel %vm812, %v813, %v814
      %v816 = vrot.slane %v808, 2
      %v817 = vsel %vm812, %v814, %v816
      %v818 = vrot.slane %v809, 2
      %v819 = vsel %vm812, %v816, %v818
      %v820 = vrot.slane %v810, 2
      %v821 = vsel %vm812, %v818, %v820
      %v822 = vrot.slane %v811, 2
      %v823 = vsel %vm812, %v820, %v822
      %824 = vrot.lane.b32.xlu0 %v815, 40
      %v825 = vpop.permute.xlu0 %824
      %826 = vrot.lane.b32.xlu0 %v817, 40
      %v827 = vpop.permute.xlu0 %826
      %828 = vrot.lane.b32.xlu0 %v819, 40
      %v829 = vpop.permute.xlu0 %828
      %830 = vrot.lane.b32.xlu0 %v821, 40
      %v831 = vpop.permute.xlu0 %830
      %832 = vrot.lane.b32.xlu0 %v823, 40
      %v833 = vpop.permute.xlu0 %832
      %vm839 = vcmask 392512
      %840 = vst.msk [vmem:[#allocation2] sm:$0xff] %vm839, %v825
      %841 = vst.msk [vmem:[#allocation2 + $0x8] sm:$0xff] %vm839, %v827
      %842 = vst.msk [vmem:[#allocation2 + $0x10] sm:$0xff] %vm839, %v829
      %843 = vst.msk [vmem:[#allocation2 + $0x18] sm:$0xff] %vm839, %v831
      %844 = vst.msk [vmem:[#allocation2 + $0x20] sm:$0xff] %vm839, %v833
      %v845 = vld [vmem:[%s324 + $0x8] sm:$0xc]
      %v846 = vld [vmem:[%s324 + $0xc] sm:$0xf]
      %v847 = vld [vmem:[%s324 + $0x10] sm:$0xf]
      %v848 = vld [vmem:[%s324 + $0x14] sm:$0xf]
      %v849 = vld [vmem:[%s324 + $0x18] sm:$0xf]
      %v850 = vld [vmem:[%s324 + $0x1c] sm:$0xf]
      %v851 = vld [vmem:[%s324 + $0x20] sm:$0xf]
      %v852 = vld [vmem:[%s324 + $0x24] sm:$0xf]
      %v853 = vld [vmem:[%s324 + $0x28] sm:$0xf]
      %v854 = vld [vmem:[%s324 + $0x2c] sm:$0xf]
      %v855 = vld [vmem:[%s324 + $0x30] sm:$0x3]
      %v867 = vunpack.c.l.b16 %v845
      %v868 = vunpack.c.l.b16 %v846
      %v869 = vunpack.c.l.b16 %v847
      %v870 = vunpack.c.l.b16 %v848
      %v871 = vunpack.c.l.b16 %v849
      %v872 = vunpack.c.l.b16 %v850
      %v873 = vunpack.c.l.b16 %v851
      %v874 = vunpack.c.l.b16 %v852
      %v875 = vunpack.c.l.b16 %v853
      %v876 = vunpack.c.l.b16 %v854
      %v877 = vunpack.c.l.b16 %v855
      %v878 = vpack.c.b16 %v868, %v867
      %v879 = vpack.c.b16 %v870, %v869
      %v880 = vpack.c.b16 %v872, %v871
      %v881 = vpack.c.b16 %v874, %v873
      %v882 = vpack.c.b16 %v876, %v875
      %v883 = vpack.c.b16 %v877, %v877
      %v884 = vrot.slane %v878, 2
      %v885 = vrot.slane %v879, 2
      %v886 = vsel %vm812, %v884, %v885
      %v887 = vrot.slane %v880, 2
      %v888 = vsel %vm812, %v885, %v887
      %v889 = vrot.slane %v881, 2
      %v890 = vsel %vm812, %v887, %v889
      %v891 = vrot.slane %v882, 2
      %v892 = vsel %vm812, %v889, %v891
      %v893 = vrot.slane %v883, 2
      %v894 = vsel %vm812, %v891, %v893
      %895 = vrot.lane.b32.xlu0 %v886, 48
      %v896 = vpop.permute.xlu0 %895
      %897 = vrot.lane.b32.xlu0 %v888, 48
      %v898 = vpop.permute.xlu0 %897
      %899 = vrot.lane.b32.xlu0 %v890, 48
      %v900 = vpop.permute.xlu0 %899
      %901 = vrot.lane.b32.xlu0 %v892, 48
      %v902 = vpop.permute.xlu0 %901
      %903 = vrot.lane.b32.xlu0 %v894, 48
      %v904 = vpop.permute.xlu0 %903
      %vm910 = vcmask 458112
      %911 = vst.msk [vmem:[#allocation2] sm:$0xff] %vm910, %v896
      %912 = vst.msk [vmem:[#allocation2 + $0x8] sm:$0xff] %vm910, %v898
      %913 = vst.msk [vmem:[#allocation2 + $0x10] sm:$0xff] %vm910, %v900
      %914 = vst.msk [vmem:[#allocation2 + $0x18] sm:$0xff] %vm910, %v902
      %915 = vst.msk [vmem:[#allocation2 + $0x20] sm:$0xff] %vm910, %v904
      %v916 = vld [vmem:[%s324 + $0x8] sm:$0xc]
      %v917 = vld [vmem:[%s324 + $0xc] sm:$0xf]
      %v918 = vld [vmem:[%s324 + $0x10] sm:$0xf]
      %v919 = vld [vmem:[%s324 + $0x14] sm:$0xf]
      %v920 = vld [vmem:[%s324 + $0x18] sm:$0xf]
      %v921 = vld [vmem:[%s324 + $0x1c] sm:$0xf]
      %v922 = vld [vmem:[%s324 + $0x20] sm:$0xf]
      %v923 = vld [vmem:[%s324 + $0x24] sm:$0xf]
      %v924 = vld [vmem:[%s324 + $0x28] sm:$0xf]
      %v925 = vld [vmem:[%s324 + $0x2c] sm:$0xf]
      %v926 = vld [vmem:[%s324 + $0x30] sm:$0x7]
      %v938 = vunpack.c.l.b16 %v916
      %v939 = vunpack.c.l.b16 %v917
      %v940 = vunpack.c.l.b16 %v918
      %v941 = vunpack.c.l.b16 %v919
      %v942 = vunpack.c.l.b16 %v920
      %v943 = vunpack.c.l.b16 %v921
      %v944 = vunpack.c.l.b16 %v922
      %v945 = vunpack.c.l.b16 %v923
      %v946 = vunpack.c.l.b16 %v924
      %v947 = vunpack.c.l.b16 %v925
      %v948 = vunpack.c.l.b16 %v926
      %v949 = vpack.c.b16 %v939, %v938
      %v950 = vpack.c.b16 %v941, %v940
      %v951 = vpack.c.b16 %v943, %v942
      %v952 = vpack.c.b16 %v945, %v944
      %v953 = vpack.c.b16 %v947, %v946
      %v954 = vpack.c.b16 %v948, %v948
      %vm955 = vsmask.f32 5376
      %v957 = vshrl.u32 %v949, 16
      %v959 = vrot.slane %v957, 2
      %v960 = vshll.u32 %v949, 16
      %v962 = vrot.slane %v960, 3
      %v963 = vor.u32 %v959, %v962
      %v965 = vshrl.u32 %v950, 16
      %v967 = vrot.slane %v965, 2
      %v968 = vshll.u32 %v950, 16
      %v970 = vrot.slane %v968, 3
      %v971 = vor.u32 %v967, %v970
      %v972 = vsel %vm955, %v963, %v971
      %v974 = vshrl.u32 %v951, 16
      %v976 = vrot.slane %v974, 2
      %v977 = vshll.u32 %v951, 16
      %v979 = vrot.slane %v977, 3
      %v980 = vor.u32 %v976, %v979
      %v981 = vsel %vm955, %v971, %v980
      %v983 = vshrl.u32 %v952, 16
      %v985 = vrot.slane %v983, 2
      %v986 = vshll.u32 %v952, 16
      %v988 = vrot.slane %v986, 3
      %v989 = vor.u32 %v985, %v988
      %v990 = vsel %vm955, %v980, %v989
      %v992 = vshrl.u32 %v953, 16
      %v994 = vrot.slane %v992, 2
      %v995 = vshll.u32 %v953, 16
      %v997 = vrot.slane %v995, 3
      %v998 = vor.u32 %v994, %v997
      %v999 = vsel %vm955, %v989, %v998
      %v1001 = vshrl.u32 %v954, 16
      %v1003 = vrot.slane %v1001, 2
      %v1004 = vshll.u32 %v954, 16
      %v1006 = vrot.slane %v1004, 3
      %v1007 = vor.u32 %v1003, %v1006
      %v1008 = vsel %vm955, %v998, %v1007
      %1009 = vrot.lane.b32.xlu0 %v972, 56
      %v1010 = vpop.permute.xlu0 %1009
      %1011 = vrot.lane.b32.xlu0 %v981, 56
      %v1012 = vpop.permute.xlu0 %1011
      %1013 = vrot.lane.b32.xlu0 %v990, 56
      %v1014 = vpop.permute.xlu0 %1013
      %1015 = vrot.lane.b32.xlu0 %v999, 56
      %v1016 = vpop.permute.xlu0 %1015
      %1017 = vrot.lane.b32.xlu0 %v1008, 56
      %v1018 = vpop.permute.xlu0 %1017
      %vm1024 = vcmask 523712
      %1025 = vst.msk [vmem:[#allocation2] sm:$0xff] %vm1024, %v1010
      %1026 = vst.msk [vmem:[#allocation2 + $0x8] sm:$0xff] %vm1024, %v1012
      %1027 = vst.msk [vmem:[#allocation2 + $0x10] sm:$0xff] %vm1024, %v1014
      %1028 = vst.msk [vmem:[#allocation2 + $0x18] sm:$0xff] %vm1024, %v1016
      %1029 = vst.msk [vmem:[#allocation2 + $0x20] sm:$0xff] %vm1024, %v1018
      %v1030 = vld [vmem:[%s324 + $0x8] sm:$0x8]
      %v1031 = vld [vmem:[%s324 + $0xc] sm:$0xf]
      %v1032 = vld [vmem:[%s324 + $0x10] sm:$0xf]
      %v1033 = vld [vmem:[%s324 + $0x14] sm:$0xf]
      %v1034 = vld [vmem:[%s324 + $0x18] sm:$0xf]
      %v1035 = vld [vmem:[%s324 + $0x1c] sm:$0xf]
      %v1036 = vld [vmem:[%s324 + $0x20] sm:$0xf]
      %v1037 = vld [vmem:[%s324 + $0x24] sm:$0xf]
      %v1038 = vld [vmem:[%s324 + $0x28] sm:$0xf]
      %v1039 = vld [vmem:[%s324 + $0x2c] sm:$0xf]
      %v1040 = vld [vmem:[%s324 + $0x30] sm:$0x7]
      %v1052 = vunpack.c.l.b16 %v1030
      %v1053 = vunpack.c.l.b16 %v1031
      %v1054 = vunpack.c.l.b16 %v1032
      %v1055 = vunpack.c.l.b16 %v1033
      %v1056 = vunpack.c.l.b16 %v1034
      %v1057 = vunpack.c.l.b16 %v1035
      %v1058 = vunpack.c.l.b16 %v1036
      %v1059 = vunpack.c.l.b16 %v1037
      %v1060 = vunpack.c.l.b16 %v1038
      %v1061 = vunpack.c.l.b16 %v1039
      %v1062 = vunpack.c.l.b16 %v1040
      %v1063 = vpack.c.b16 %v1053, %v1052
      %v1064 = vpack.c.b16 %v1055, %v1054
      %v1065 = vpack.c.b16 %v1057, %v1056
      %v1066 = vpack.c.b16 %v1059, %v1058
      %v1067 = vpack.c.b16 %v1061, %v1060
      %v1068 = vpack.c.b16 %v1062, %v1062
      %vm1069 = vcmask 1044480
      %v1070 = vrot.slane %v1063, 3
      %v1071 = vrot.slane %v1064, 3
      %v1072 = vsel %vm1069, %v1070, %v1071
      %v1073 = vrot.slane %v1065, 3
      %v1074 = vsel %vm1069, %v1071, %v1073
      %v1075 = vrot.slane %v1066, 3
      %v1076 = vsel %vm1069, %v1073, %v1075
      %v1077 = vrot.slane %v1067, 3
      %v1078 = vsel %vm1069, %v1075, %v1077
      %v1079 = vrot.slane %v1068, 3
      %v1080 = vsel %vm1069, %v1077, %v1079
      %1081 = vrot.lane.b32.xlu0 %v1072, 64
      %v1082 = vpop.permute.xlu0 %1081
      %1083 = vrot.lane.b32.xlu0 %v1074, 64
      %v1084 = vpop.permute.xlu0 %1083
      %1085 = vrot.lane.b32.xlu0 %v1076, 64
      %v1086 = vpop.permute.xlu0 %1085
      %1087 = vrot.lane.b32.xlu0 %v1078, 64
      %v1088 = vpop.permute.xlu0 %1087
      %1089 = vrot.lane.b32.xlu0 %v1080, 64
      %v1090 = vpop.permute.xlu0 %1089
      %vm1096 = vcmask 589312
      %1097 = vst.msk [vmem:[#allocation2] sm:$0xff] %vm1096, %v1082
      %1098 = vst.msk [vmem:[#allocation2 + $0x8] sm:$0xff] %vm1096, %v1084
      %1099 = vst.msk [vmem:[#allocation2 + $0x10] sm:$0xff] %vm1096, %v1086
      %1100 = vst.msk [vmem:[#allocation2 + $0x18] sm:$0xff] %vm1096, %v1088
      %1101 = vst.msk [vmem:[#allocation2 + $0x20] sm:$0xff] %vm1096, %v1090
      %v1102 = vld [vmem:[#allocation2] sm:$0xff]
      %v1103 = vld [vmem:[#allocation2 + $0x8] sm:$0xff]
      %v1104 = vld [vmem:[#allocation2 + $0x10] sm:$0xff]
      %v1105 = vld [vmem:[#allocation2 + $0x18] sm:$0xff]
      %v1106 = vld [vmem:[#allocation2 + $0x20] sm:$0xff]
      %v1107 = vld [vmem:[%s3] sm:$0xf]
      %v1108 = vld [vmem:[%s3 + $0x4] sm:$0xf]
      %v1109 = vld [vmem:[%s3 + $0x8] sm:$0xf]
      %v1110 = vld [vmem:[%s3 + $0xc] sm:$0xf]
      %v1111 = vld [vmem:[%s3 + $0x10] sm:$0xf]
      %v1112 = vld [vmem:[%s3 + $0x14] sm:$0xf]
      %v1113 = vld [vmem:[%s3 + $0x18] sm:$0xf]
      %v1114 = vld [vmem:[%s3 + $0x1c] sm:$0xf]
      %v1115 = vld [vmem:[%s3 + $0x20] sm:$0xf]
      %v1116 = vld [vmem:[%s334] sm:$0xf]
      %v1117 = vld [vmem:[%s334 + $0x4] sm:$0xf]
      %v1118 = vld [vmem:[%s334 + $0x8] sm:$0xf]
      %v1119 = vld [vmem:[%s334 + $0xc] sm:$0xf]
      %v1120 = vld [vmem:[%s334 + $0x10] sm:$0xf]
      %v1121 = vld [vmem:[%s334 + $0x14] sm:$0xf]
      %v1122 = vld [vmem:[%s334 + $0x18] sm:$0xf]
      %v1123 = vld [vmem:[%s334 + $0x1c] sm:$0xf]
      %v1124 = vld [vmem:[%s334 + $0x20] sm:$0xf]
      %v1125 = vld [vmem:[%s334 + $0x24] sm:$0xf]
      %v1136 = vunpack.c.l.b16 %v1116
      %v1137 = vunpack.c.l.b16 %v1117
      %v1138 = vunpack.c.l.b16 %v1118
      %v1139 = vunpack.c.l.b16 %v1119
      %v1140 = vunpack.c.l.b16 %v1120
      %v1141 = vunpack.c.l.b16 %v1121
      %v1142 = vunpack.c.l.b16 %v1122
      %v1143 = vunpack.c.l.b16 %v1123
      %v1144 = vunpack.c.l.b16 %v1124
      %v1145 = vunpack.c.l.b16 %v1125
      %v1146 = vpack.c.b16 %v1137, %v1136
      %v1147 = vpack.c.b16 %v1139, %v1138
      %v1148 = vpack.c.b16 %v1141, %v1140
      %v1149 = vpack.c.b16 %v1143, %v1142
      %v1150 = vpack.c.b16 %v1145, %v1144
      %1156 = vst.msk [vmem:[#allocation2] sm:$0xff] %vm405, %v1146
      %1157 = vst.msk [vmem:[#allocation2 + $0x8] sm:$0xff] %vm405, %v1147
      %1158 = vst.msk [vmem:[#allocation2 + $0x10] sm:$0xff] %vm405, %v1148
      %1159 = vst.msk [vmem:[#allocation2 + $0x18] sm:$0xff] %vm405, %v1149
      %1160 = vst.msk [vmem:[#allocation2 + $0x20] sm:$0xff] %vm405, %v1150
      %v1161 = vld [vmem:[%s334] sm:$0xf]
      %v1162 = vld [vmem:[%s334 + $0x4] sm:$0xf]
      %v1163 = vld [vmem:[%s334 + $0x8] sm:$0xf]
      %v1164 = vld [vmem:[%s334 + $0xc] sm:$0xf]
      %v1165 = vld [vmem:[%s334 + $0x10] sm:$0xf]
      %v1166 = vld [vmem:[%s334 + $0x14] sm:$0xf]
      %v1167 = vld [vmem:[%s334 + $0x18] sm:$0xf]
      %v1168 = vld [vmem:[%s334 + $0x1c] sm:$0xf]
      %v1169 = vld [vmem:[%s334 + $0x20] sm:$0xf]
      %v1170 = vld [vmem:[%s334 + $0x24] sm:$0xf]
      %v1171 = vld [vmem:[%s334 + $0x28] sm:$0x1]
      %v1183 = vunpack.c.l.b16 %v1161
      %v1184 = vunpack.c.l.b16 %v1162
      %v1185 = vunpack.c.l.b16 %v1163
      %v1186 = vunpack.c.l.b16 %v1164
      %v1187 = vunpack.c.l.b16 %v1165
      %v1188 = vunpack.c.l.b16 %v1166
      %v1189 = vunpack.c.l.b16 %v1167
      %v1190 = vunpack.c.l.b16 %v1168
      %v1191 = vunpack.c.l.b16 %v1169
      %v1192 = vunpack.c.l.b16 %v1170
      %v1193 = vunpack.c.l.b16 %v1171
      %v1194 = vpack.c.b16 %v1184, %v1183
      %v1195 = vpack.c.b16 %v1186, %v1185
      %v1196 = vpack.c.b16 %v1188, %v1187
      %v1197 = vpack.c.b16 %v1190, %v1189
      %v1198 = vpack.c.b16 %v1192, %v1191
      %v1199 = vpack.c.b16 %v1193, %v1193
      %v1201 = vshrl.u32 %v1194, 16
      %v1203 = vshll.u32 %v1194, 16
      %v1205 = vrot.slane %v1203, 1
      %v1206 = vor.u32 %v1201, %v1205
      %v1208 = vshll.u32 %v1195, 16
      %v1210 = vrot.slane %v1208, 1
      %v1211 = vsel %vm450, %v1206, %v1210
      %v1212 = vshrl.u32 %v1195, 16
      %v1214 = vor.u32 %v1212, %v1210
      %v1216 = vshll.u32 %v1196, 16
      %v1218 = vrot.slane %v1216, 1
      %v1219 = vsel %vm450, %v1214, %v1218
      %v1220 = vshrl.u32 %v1196, 16
      %v1222 = vor.u32 %v1220, %v1218
      %v1224 = vshll.u32 %v1197, 16
      %v1226 = vrot.slane %v1224, 1
      %v1227 = vsel %vm450, %v1222, %v1226
      %v1228 = vshrl.u32 %v1197, 16
      %v1230 = vor.u32 %v1228, %v1226
      %v1232 = vshll.u32 %v1198, 16
      %v1234 = vrot.slane %v1232, 1
      %v1235 = vsel %vm450, %v1230, %v1234
      %v1236 = vshrl.u32 %v1198, 16
      %v1238 = vor.u32 %v1236, %v1234
      %v1240 = vshll.u32 %v1199, 16
      %v1242 = vrot.slane %v1240, 1
      %v1243 = vsel %vm450, %v1238, %v1242
      %1244 = vrot.lane.b32.xlu0 %v1211, 8
      %v1245 = vpop.permute.xlu0 %1244
      %1246 = vrot.lane.b32.xlu0 %v1219, 8
      %v1247 = vpop.permute.xlu0 %1246
      %1248 = vrot.lane.b32.xlu0 %v1227, 8
      %v1249 = vpop.permute.xlu0 %1248
      %1250 = vrot.lane.b32.xlu0 %v1235, 8
      %v1251 = vpop.permute.xlu0 %1250
      %1252 = vrot.lane.b32.xlu0 %v1243, 8
      %v1253 = vpop.permute.xlu0 %1252
      %1259 = vst.msk [vmem:[#allocation2] sm:$0xff] %vm510, %v1245
      %1260 = vst.msk [vmem:[#allocation2 + $0x8] sm:$0xff] %vm510, %v1247
      %1261 = vst.msk [vmem:[#allocation2 + $0x10] sm:$0xff] %vm510, %v1249
      %1262 = vst.msk [vmem:[#allocation2 + $0x18] sm:$0xff] %vm510, %v1251
      %1263 = vst.msk [vmem:[#allocation2 + $0x20] sm:$0xff] %vm510, %v1253
      %v1264 = vld [vmem:[%s334] sm:$0xe]
      %v1265 = vld [vmem:[%s334 + $0x4] sm:$0xf]
      %v1266 = vld [vmem:[%s334 + $0x8] sm:$0xf]
      %v1267 = vld [vmem:[%s334 + $0xc] sm:$0xf]
      %v1268 = vld [vmem:[%s334 + $0x10] sm:$0xf]
      %v1269 = vld [vmem:[%s334 + $0x14] sm:$0xf]
      %v1270 = vld [vmem:[%s334 + $0x18] sm:$0xf]
      %v1271 = vld [vmem:[%s334 + $0x1c] sm:$0xf]
      %v1272 = vld [vmem:[%s334 + $0x20] sm:$0xf]
      %v1273 = vld [vmem:[%s334 + $0x24] sm:$0xf]
      %v1274 = vld [vmem:[%s334 + $0x28] sm:$0x1]
      %v1286 = vunpack.c.l.b16 %v1264
      %v1287 = vunpack.c.l.b16 %v1265
      %v1288 = vunpack.c.l.b16 %v1266
      %v1289 = vunpack.c.l.b16 %v1267
      %v1290 = vunpack.c.l.b16 %v1268
      %v1291 = vunpack.c.l.b16 %v1269
      %v1292 = vunpack.c.l.b16 %v1270
      %v1293 = vunpack.c.l.b16 %v1271
      %v1294 = vunpack.c.l.b16 %v1272
      %v1295 = vunpack.c.l.b16 %v1273
      %v1296 = vunpack.c.l.b16 %v1274
      %v1297 = vpack.c.b16 %v1287, %v1286
      %v1298 = vpack.c.b16 %v1289, %v1288
      %v1299 = vpack.c.b16 %v1291, %v1290
      %v1300 = vpack.c.b16 %v1293, %v1292
      %v1301 = vpack.c.b16 %v1295, %v1294
      %v1302 = vpack.c.b16 %v1296, %v1296
      %v1303 = vrot.slane %v1297, 1
      %v1304 = vrot.slane %v1298, 1
      %v1305 = vsel %vm555, %v1303, %v1304
      %v1306 = vrot.slane %v1299, 1
      %v1307 = vsel %vm555, %v1304, %v1306
      %v1308 = vrot.slane %v1300, 1
      %v1309 = vsel %vm555, %v1306, %v1308
      %v1310 = vrot.slane %v1301, 1
      %v1311 = vsel %vm555, %v1308, %v1310
      %v1312 = vrot.slane %v1302, 1
      %v1313 = vsel %vm555, %v1310, %v1312
      %1314 = vrot.lane.b32.xlu0 %v1305, 16
      %v1315 = vpop.permute.xlu0 %1314
      %1316 = vrot.lane.b32.xlu0 %v1307, 16
      %v1317 = vpop.permute.xlu0 %1316
      %1318 = vrot.lane.b32.xlu0 %v1309, 16
      %v1319 = vpop.permute.xlu0 %1318
      %1320 = vrot.lane.b32.xlu0 %v1311, 16
      %v1321 = vpop.permute.xlu0 %1320
      %1322 = vrot.lane.b32.xlu0 %v1313, 16
      %v1323 = vpop.permute.xlu0 %1322
      %1329 = vst.msk [vmem:[#allocation2] sm:$0xff] %vm582, %v1315
      %1330 = vst.msk [vmem:[#allocation2 + $0x8] sm:$0xff] %vm582, %v1317
      %1331 = vst.msk [vmem:[#allocation2 + $0x10] sm:$0xff] %vm582, %v1319
      %1332 = vst.msk [vmem:[#allocation2 + $0x18] sm:$0xff] %vm582, %v1321
      %1333 = vst.msk [vmem:[#allocation2 + $0x20] sm:$0xff] %vm582, %v1323
      %v1334 = vld [vmem:[%s334 + $0x4] sm:$0xe]
      %v1335 = vld [vmem:[%s334 + $0x8] sm:$0xf]
      %v1336 = vld [vmem:[%s334 + $0xc] sm:$0xf]
      %v1337 = vld [vmem:[%s334 + $0x10] sm:$0xf]
      %v1338 = vld [vmem:[%s334 + $0x14] sm:$0xf]
      %v1339 = vld [vmem:[%s334 + $0x18] sm:$0xf]
      %v1340 = vld [vmem:[%s334 + $0x1c] sm:$0xf]
      %v1341 = vld [vmem:[%s334 + $0x20] sm:$0xf]
      %v1342 = vld [vmem:[%s334 + $0x24] sm:$0xf]
      %v1343 = vld [vmem:[%s334 + $0x28] sm:$0xf]
      %v1344 = vld [vmem:[%s334 + $0x2c] sm:$0x1]
      %v1356 = vunpack.c.l.b16 %v1334
      %v1357 = vunpack.c.l.b16 %v1335
      %v1358 = vunpack.c.l.b16 %v1336
      %v1359 = vunpack.c.l.b16 %v1337
      %v1360 = vunpack.c.l.b16 %v1338
      %v1361 = vunpack.c.l.b16 %v1339
      %v1362 = vunpack.c.l.b16 %v1340
      %v1363 = vunpack.c.l.b16 %v1341
      %v1364 = vunpack.c.l.b16 %v1342
      %v1365 = vunpack.c.l.b16 %v1343
      %v1366 = vunpack.c.l.b16 %v1344
      %v1367 = vpack.c.b16 %v1357, %v1356
      %v1368 = vpack.c.b16 %v1359, %v1358
      %v1369 = vpack.c.b16 %v1361, %v1360
      %v1370 = vpack.c.b16 %v1363, %v1362
      %v1371 = vpack.c.b16 %v1365, %v1364
      %v1372 = vpack.c.b16 %v1366, %v1366
      %v1373 = vrot.slane %v1367, 1
      %v1374 = vrot.slane %v1368, 1
      %v1375 = vsel %vm555, %v1373, %v1374
      %v1376 = vrot.slane %v1369, 1
      %v1377 = vsel %vm555, %v1374, %v1376
      %v1378 = vrot.slane %v1370, 1
      %v1379 = vsel %vm555, %v1376, %v1378
      %v1380 = vrot.slane %v1371, 1
      %v1381 = vsel %vm555, %v1378, %v1380
      %v1382 = vrot.slane %v1372, 1
      %v1383 = vsel %vm555, %v1380, %v1382
      %1384 = vrot.lane.b32.xlu0 %v1375, 24
      %v1385 = vpop.permute.xlu0 %1384
      %1386 = vrot.lane.b32.xlu0 %v1377, 24
      %v1387 = vpop.permute.xlu0 %1386
      %1388 = vrot.lane.b32.xlu0 %v1379, 24
      %v1389 = vpop.permute.xlu0 %1388
      %1390 = vrot.lane.b32.xlu0 %v1381, 24
      %v1391 = vpop.permute.xlu0 %1390
      %1392 = vrot.lane.b32.xlu0 %v1383, 24
      %v1393 = vpop.permute.xlu0 %1392
      %1399 = vst.msk [vmem:[#allocation2] sm:$0xff] %vm653, %v1385
      %1400 = vst.msk [vmem:[#allocation2 + $0x8] sm:$0xff] %vm653, %v1387
      %1401 = vst.msk [vmem:[#allocation2 + $0x10] sm:$0xff] %vm653, %v1389
      %1402 = vst.msk [vmem:[#allocation2 + $0x18] sm:$0xff] %vm653, %v1391
      %1403 = vst.msk [vmem:[#allocation2 + $0x20] sm:$0xff] %vm653, %v1393
      %v1404 = vld [vmem:[%s334 + $0x4] sm:$0xe]
      %v1405 = vld [vmem:[%s334 + $0x8] sm:$0xf]
      %v1406 = vld [vmem:[%s334 + $0xc] sm:$0xf]
      %v1407 = vld [vmem:[%s334 + $0x10] sm:$0xf]
      %v1408 = vld [vmem:[%s334 + $0x14] sm:$0xf]
      %v1409 = vld [vmem:[%s334 + $0x18] sm:$0xf]
      %v1410 = vld [vmem:[%s334 + $0x1c] sm:$0xf]
      %v1411 = vld [vmem:[%s334 + $0x20] sm:$0xf]
      %v1412 = vld [vmem:[%s334 + $0x24] sm:$0xf]
      %v1413 = vld [vmem:[%s334 + $0x28] sm:$0xf]
      %v1414 = vld [vmem:[%s334 + $0x2c] sm:$0x3]
      %v1426 = vunpack.c.l.b16 %v1404
      %v1427 = vunpack.c.l.b16 %v1405
      %v1428 = vunpack.c.l.b16 %v1406
      %v1429 = vunpack.c.l.b16 %v1407
      %v1430 = vunpack.c.l.b16 %v1408
      %v1431 = vunpack.c.l.b16 %v1409
      %v1432 = vunpack.c.l.b16 %v1410
      %v1433 = vunpack.c.l.b16 %v1411
      %v1434 = vunpack.c.l.b16 %v1412
      %v1435 = vunpack.c.l.b16 %v1413
      %v1436 = vunpack.c.l.b16 %v1414
      %v1437 = vpack.c.b16 %v1427, %v1426
      %v1438 = vpack.c.b16 %v1429, %v1428
      %v1439 = vpack.c.b16 %v1431, %v1430
      %v1440 = vpack.c.b16 %v1433, %v1432
      %v1441 = vpack.c.b16 %v1435, %v1434
      %v1442 = vpack.c.b16 %v1436, %v1436
      %v1444 = vshrl.u32 %v1437, 16
      %v1446 = vrot.slane %v1444, 1
      %v1447 = vshll.u32 %v1437, 16
      %v1449 = vrot.slane %v1447, 2
      %v1450 = vor.u32 %v1446, %v1449
      %v1452 = vshrl.u32 %v1438, 16
      %v1454 = vrot.slane %v1452, 1
      %v1455 = vshll.u32 %v1438, 16
      %v1457 = vrot.slane %v1455, 2
      %v1458 = vor.u32 %v1454, %v1457
      %v1459 = vsel %vm698, %v1450, %v1458
      %v1461 = vshrl.u32 %v1439, 16
      %v1463 = vrot.slane %v1461, 1
      %v1464 = vshll.u32 %v1439, 16
      %v1466 = vrot.slane %v1464, 2
      %v1467 = vor.u32 %v1463, %v1466
      %v1468 = vsel %vm698, %v1458, %v1467
      %v1470 = vshrl.u32 %v1440, 16
      %v1472 = vrot.slane %v1470, 1
      %v1473 = vshll.u32 %v1440, 16
      %v1475 = vrot.slane %v1473, 2
      %v1476 = vor.u32 %v1472, %v1475
      %v1477 = vsel %vm698, %v1467, %v1476
      %v1479 = vshrl.u32 %v1441, 16
      %v1481 = vrot.slane %v1479, 1
      %v1482 = vshll.u32 %v1441, 16
      %v1484 = vrot.slane %v1482, 2
      %v1485 = vor.u32 %v1481, %v1484
      %v1486 = vsel %vm698, %v1476, %v1485
      %v1488 = vshrl.u32 %v1442, 16
      %v1490 = vrot.slane %v1488, 1
      %v1491 = vshll.u32 %v1442, 16
      %v1493 = vrot.slane %v1491, 2
      %v1494 = vor.u32 %v1490, %v1493
      %v1495 = vsel %vm698, %v1485, %v1494
      %1496 = vrot.lane.b32.xlu0 %v1459, 32
      %v1497 = vpop.permute.xlu0 %1496
      %1498 = vrot.lane.b32.xlu0 %v1468, 32
      %v1499 = vpop.permute.xlu0 %1498
      %1500 = vrot.lane.b32.xlu0 %v1477, 32
      %v1501 = vpop.permute.xlu0 %1500
      %1502 = vrot.lane.b32.xlu0 %v1486, 32
      %v1503 = vpop.permute.xlu0 %1502
      %1504 = vrot.lane.b32.xlu0 %v1495, 32
      %v1505 = vpop.permute.xlu0 %1504
      %1511 = vst.msk [vmem:[#allocation2] sm:$0xff] %vm767, %v1497
      %1512 = vst.msk [vmem:[#allocation2 + $0x8] sm:$0xff] %vm767, %v1499
      %1513 = vst.msk [vmem:[#allocation2 + $0x10] sm:$0xff] %vm767, %v1501
      %1514 = vst.msk [vmem:[#allocation2 + $0x18] sm:$0xff] %vm767, %v1503
      %1515 = vst.msk [vmem:[#allocation2 + $0x20] sm:$0xff] %vm767, %v1505
      %v1516 = vld [vmem:[%s334 + $0x4] sm:$0xc]
      %v1517 = vld [vmem:[%s334 + $0x8] sm:$0xf]
      %v1518 = vld [vmem:[%s334 + $0xc] sm:$0xf]
      %v1519 = vld [vmem:[%s334 + $0x10] sm:$0xf]
      %v1520 = vld [vmem:[%s334 + $0x14] sm:$0xf]
      %v1521 = vld [vmem:[%s334 + $0x18] sm:$0xf]
      %v1522 = vld [vmem:[%s334 + $0x1c] sm:$0xf]
      %v1523 = vld [vmem:[%s334 + $0x20] sm:$0xf]
      %v1524 = vld [vmem:[%s334 + $0x24] sm:$0xf]
      %v1525 = vld [vmem:[%s334 + $0x28] sm:$0xf]
      %v1526 = vld [vmem:[%s334 + $0x2c] sm:$0x3]
      %v1538 = vunpack.c.l.b16 %v1516
      %v1539 = vunpack.c.l.b16 %v1517
      %v1540 = vunpack.c.l.b16 %v1518
      %v1541 = vunpack.c.l.b16 %v1519
      %v1542 = vunpack.c.l.b16 %v1520
      %v1543 = vunpack.c.l.b16 %v1521
      %v1544 = vunpack.c.l.b16 %v1522
      %v1545 = vunpack.c.l.b16 %v1523
      %v1546 = vunpack.c.l.b16 %v1524
      %v1547 = vunpack.c.l.b16 %v1525
      %v1548 = vunpack.c.l.b16 %v1526
      %v1549 = vpack.c.b16 %v1539, %v1538
      %v1550 = vpack.c.b16 %v1541, %v1540
      %v1551 = vpack.c.b16 %v1543, %v1542
      %v1552 = vpack.c.b16 %v1545, %v1544
      %v1553 = vpack.c.b16 %v1547, %v1546
      %v1554 = vpack.c.b16 %v1548, %v1548
      %v1555 = vrot.slane %v1549, 2
      %v1556 = vrot.slane %v1550, 2
      %v1557 = vsel %vm812, %v1555, %v1556
      %v1558 = vrot.slane %v1551, 2
      %v1559 = vsel %vm812, %v1556, %v1558
      %v1560 = vrot.slane %v1552, 2
      %v1561 = vsel %vm812, %v1558, %v1560
      %v1562 = vrot.slane %v1553, 2
      %v1563 = vsel %vm812, %v1560, %v1562
      %v1564 = vrot.slane %v1554, 2
      %v1565 = vsel %vm812, %v1562, %v1564
      %1566 = vrot.lane.b32.xlu0 %v1557, 40
      %v1567 = vpop.permute.xlu0 %1566
      %1568 = vrot.lane.b32.xlu0 %v1559, 40
      %v1569 = vpop.permute.xlu0 %1568
      %1570 = vrot.lane.b32.xlu0 %v1561, 40
      %v1571 = vpop.permute.xlu0 %1570
      %1572 = vrot.lane.b32.xlu0 %v1563, 40
      %v1573 = vpop.permute.xlu0 %1572
      %1574 = vrot.lane.b32.xlu0 %v1565, 40
      %v1575 = vpop.permute.xlu0 %1574
      %1581 = vst.msk [vmem:[#allocation2] sm:$0xff] %vm839, %v1567
      %1582 = vst.msk [vmem:[#allocation2 + $0x8] sm:$0xff] %vm839, %v1569
      %1583 = vst.msk [vmem:[#allocation2 + $0x10] sm:$0xff] %vm839, %v1571
      %1584 = vst.msk [vmem:[#allocation2 + $0x18] sm:$0xff] %vm839, %v1573
      %1585 = vst.msk [vmem:[#allocation2 + $0x20] sm:$0xff] %vm839, %v1575
      %v1586 = vld [vmem:[%s334 + $0x8] sm:$0xc]
      %v1587 = vld [vmem:[%s334 + $0xc] sm:$0xf]
      %v1588 = vld [vmem:[%s334 + $0x10] sm:$0xf]
      %v1589 = vld [vmem:[%s334 + $0x14] sm:$0xf]
      %v1590 = vld [vmem:[%s334 + $0x18] sm:$0xf]
      %v1591 = vld [vmem:[%s334 + $0x1c] sm:$0xf]
      %v1592 = vld [vmem:[%s334 + $0x20] sm:$0xf]
      %v1593 = vld [vmem:[%s334 + $0x24] sm:$0xf]
      %v1594 = vld [vmem:[%s334 + $0x28] sm:$0xf]
      %v1595 = vld [vmem:[%s334 + $0x2c] sm:$0xf]
      %v1596 = vld [vmem:[%s334 + $0x30] sm:$0x3]
      %v1608 = vunpack.c.l.b16 %v1586
      %v1609 = vunpack.c.l.b16 %v1587
      %v1610 = vunpack.c.l.b16 %v1588
      %v1611 = vunpack.c.l.b16 %v1589
      %v1612 = vunpack.c.l.b16 %v1590
      %v1613 = vunpack.c.l.b16 %v1591
      %v1614 = vunpack.c.l.b16 %v1592
      %v1615 = vunpack.c.l.b16 %v1593
      %v1616 = vunpack.c.l.b16 %v1594
      %v1617 = vunpack.c.l.b16 %v1595
      %v1618 = vunpack.c.l.b16 %v1596
      %v1619 = vpack.c.b16 %v1609, %v1608
      %v1620 = vpack.c.b16 %v1611, %v1610
      %v1621 = vpack.c.b16 %v1613, %v1612
      %v1622 = vpack.c.b16 %v1615, %v1614
      %v1623 = vpack.c.b16 %v1617, %v1616
      %v1624 = vpack.c.b16 %v1618, %v1618
      %v1625 = vrot.slane %v1619, 2
      %v1626 = vrot.slane %v1620, 2
      %v1627 = vsel %vm812, %v1625, %v1626
      %v1628 = vrot.slane %v1621, 2
      %v1629 = vsel %vm812, %v1626, %v1628
      %v1630 = vrot.slane %v1622, 2
      %v1631 = vsel %vm812, %v1628, %v1630
      %v1632 = vrot.slane %v1623, 2
      %v1633 = vsel %vm812, %v1630, %v1632
      %v1634 = vrot.slane %v1624, 2
      %v1635 = vsel %vm812, %v1632, %v1634
      %1636 = vrot.lane.b32.xlu0 %v1627, 48
      %v1637 = vpop.permute.xlu0 %1636
      %1638 = vrot.lane.b32.xlu0 %v1629, 48
      %v1639 = vpop.permute.xlu0 %1638
      %1640 = vrot.lane.b32.xlu0 %v1631, 48
      %v1641 = vpop.permute.xlu0 %1640
      %1642 = vrot.lane.b32.xlu0 %v1633, 48
      %v1643 = vpop.permute.xlu0 %1642
      %1644 = vrot.lane.b32.xlu0 %v1635, 48
      %v1645 = vpop.permute.xlu0 %1644
      %1651 = vst.msk [vmem:[#allocation2] sm:$0xff] %vm910, %v1637
      %1652 = vst.msk [vmem:[#allocation2 + $0x8] sm:$0xff] %vm910, %v1639
      %1653 = vst.msk [vmem:[#allocation2 + $0x10] sm:$0xff] %vm910, %v1641
      %1654 = vst.msk [vmem:[#allocation2 + $0x18] sm:$0xff] %vm910, %v1643
      %1655 = vst.msk [vmem:[#allocation2 + $0x20] sm:$0xff] %vm910, %v1645
      %v1656 = vld [vmem:[%s334 + $0x8] sm:$0xc]
      %v1657 = vld [vmem:[%s334 + $0xc] sm:$0xf]
      %v1658 = vld [vmem:[%s334 + $0x10] sm:$0xf]
      %v1659 = vld [vmem:[%s334 + $0x14] sm:$0xf]
      %v1660 = vld [vmem:[%s334 + $0x18] sm:$0xf]
      %v1661 = vld [vmem:[%s334 + $0x1c] sm:$0xf]
      %v1662 = vld [vmem:[%s334 + $0x20] sm:$0xf]
      %v1663 = vld [vmem:[%s334 + $0x24] sm:$0xf]
      %v1664 = vld [vmem:[%s334 + $0x28] sm:$0xf]
      %v1665 = vld [vmem:[%s334 + $0x2c] sm:$0xf]
      %v1666 = vld [vmem:[%s334 + $0x30] sm:$0x7]
      %v1678 = vunpack.c.l.b16 %v1656
      %v1679 = vunpack.c.l.b16 %v1657
      %v1680 = vunpack.c.l.b16 %v1658
      %v1681 = vunpack.c.l.b16 %v1659
      %v1682 = vunpack.c.l.b16 %v1660
      %v1683 = vunpack.c.l.b16 %v1661
      %v1684 = vunpack.c.l.b16 %v1662
      %v1685 = vunpack.c.l.b16 %v1663
      %v1686 = vunpack.c.l.b16 %v1664
      %v1687 = vunpack.c.l.b16 %v1665
      %v1688 = vunpack.c.l.b16 %v1666
      %v1689 = vpack.c.b16 %v1679, %v1678
      %v1690 = vpack.c.b16 %v1681, %v1680
      %v1691 = vpack.c.b16 %v1683, %v1682
      %v1692 = vpack.c.b16 %v1685, %v1684
      %v1693 = vpack.c.b16 %v1687, %v1686
      %v1694 = vpack.c.b16 %v1688, %v1688
      %v1696 = vshrl.u32 %v1689, 16
      %v1698 = vrot.slane %v1696, 2
      %v1699 = vshll.u32 %v1689, 16
      %v1701 = vrot.slane %v1699, 3
      %v1702 = vor.u32 %v1698, %v1701
      %v1704 = vshrl.u32 %v1690, 16
      %v1706 = vrot.slane %v1704, 2
      %v1707 = vshll.u32 %v1690, 16
      %v1709 = vrot.slane %v1707, 3
      %v1710 = vor.u32 %v1706, %v1709
      %v1711 = vsel %vm955, %v1702, %v1710
      %v1713 = vshrl.u32 %v1691, 16
      %v1715 = vrot.slane %v1713, 2
      %v1716 = vshll.u32 %v1691, 16
      %v1718 = vrot.slane %v1716, 3
      %v1719 = vor.u32 %v1715, %v1718
      %v1720 = vsel %vm955, %v1710, %v1719
      %v1722 = vshrl.u32 %v1692, 16
      %v1724 = vrot.slane %v1722, 2
      %v1725 = vshll.u32 %v1692, 16
      %v1727 = vrot.slane %v1725, 3
      %v1728 = vor.u32 %v1724, %v1727
      %v1729 = vsel %vm955, %v1719, %v1728
      %v1731 = vshrl.u32 %v1693, 16
      %v1733 = vrot.slane %v1731, 2
      %v1734 = vshll.u32 %v1693, 16
      %v1736 = vrot.slane %v1734, 3
      %v1737 = vor.u32 %v1733, %v1736
      %v1738 = vsel %vm955, %v1728, %v1737
      %v1740 = vshrl.u32 %v1694, 16
      %v1742 = vrot.slane %v1740, 2
      %v1743 = vshll.u32 %v1694, 16
      %v1745 = vrot.slane %v1743, 3
      %v1746 = vor.u32 %v1742, %v1745
      %v1747 = vsel %vm955, %v1737, %v1746
      %1748 = vrot.lane.b32.xlu0 %v1711, 56
      %v1749 = vpop.permute.xlu0 %1748
      %1750 = vrot.lane.b32.xlu0 %v1720, 56
      %v1751 = vpop.permute.xlu0 %1750
      %1752 = vrot.lane.b32.xlu0 %v1729, 56
      %v1753 = vpop.permute.xlu0 %1752
      %1754 = vrot.lane.b32.xlu0 %v1738, 56
      %v1755 = vpop.permute.xlu0 %1754
      %1756 = vrot.lane.b32.xlu0 %v1747, 56
      %v1757 = vpop.permute.xlu0 %1756
      %1763 = vst.msk [vmem:[#allocation2] sm:$0xff] %vm1024, %v1749
      %1764 = vst.msk [vmem:[#allocation2 + $0x8] sm:$0xff] %vm1024, %v1751
      %1765 = vst.msk [vmem:[#allocation2 + $0x10] sm:$0xff] %vm1024, %v1753
      %1766 = vst.msk [vmem:[#allocation2 + $0x18] sm:$0xff] %vm1024, %v1755
      %1767 = vst.msk [vmem:[#allocation2 + $0x20] sm:$0xff] %vm1024, %v1757
      %v1768 = vld [vmem:[%s334 + $0x8] sm:$0x8]
      %v1769 = vld [vmem:[%s334 + $0xc] sm:$0xf]
      %v1770 = vld [vmem:[%s334 + $0x10] sm:$0xf]
      %v1771 = vld [vmem:[%s334 + $0x14] sm:$0xf]
      %v1772 = vld [vmem:[%s334 + $0x18] sm:$0xf]
      %v1773 = vld [vmem:[%s334 + $0x1c] sm:$0xf]
      %v1774 = vld [vmem:[%s334 + $0x20] sm:$0xf]
      %v1775 = vld [vmem:[%s334 + $0x24] sm:$0xf]
      %v1776 = vld [vmem:[%s334 + $0x28] sm:$0xf]
      %v1777 = vld [vmem:[%s334 + $0x2c] sm:$0xf]
      %v1778 = vld [vmem:[%s334 + $0x30] sm:$0x7]
      %v1790 = vunpack.c.l.b16 %v1768
      %v1791 = vunpack.c.l.b16 %v1769
      %v1792 = vunpack.c.l.b16 %v1770
      %v1793 = vunpack.c.l.b16 %v1771
      %v1794 = vunpack.c.l.b16 %v1772
      %v1795 = vunpack.c.l.b16 %v1773
      %v1796 = vunpack.c.l.b16 %v1774
      %v1797 = vunpack.c.l.b16 %v1775
      %v1798 = vunpack.c.l.b16 %v1776
      %v1799 = vunpack.c.l.b16 %v1777
      %v1800 = vunpack.c.l.b16 %v1778
      %v1801 = vpack.c.b16 %v1791, %v1790
      %v1802 = vpack.c.b16 %v1793, %v1792
      %v1803 = vpack.c.b16 %v1795, %v1794
      %v1804 = vpack.c.b16 %v1797, %v1796
      %v1805 = vpack.c.b16 %v1799, %v1798
      %v1806 = vpack.c.b16 %v1800, %v1800
      %v1807 = vrot.slane %v1801, 3
      %v1808 = vrot.slane %v1802, 3
      %v1809 = vsel %vm1069, %v1807, %v1808
      %v1810 = vrot.slane %v1803, 3
      %v1811 = vsel %vm1069, %v1808, %v1810
      %v1812 = vrot.slane %v1804, 3
      %v1813 = vsel %vm1069, %v1810, %v1812
      %v1814 = vrot.slane %v1805, 3
      %v1815 = vsel %vm1069, %v1812, %v1814
      %v1816 = vrot.slane %v1806, 3
      %v1817 = vsel %vm1069, %v1814, %v1816
      %1818 = vrot.lane.b32.xlu0 %v1809, 64
      %v1819 = vpop.permute.xlu0 %1818
      %1820 = vrot.lane.b32.xlu0 %v1811, 64
      %v1821 = vpop.permute.xlu0 %1820
      %1822 = vrot.lane.b32.xlu0 %v1813, 64
      %v1823 = vpop.permute.xlu0 %1822
      %1824 = vrot.lane.b32.xlu0 %v1815, 64
      %v1825 = vpop.permute.xlu0 %1824
      %1826 = vrot.lane.b32.xlu0 %v1817, 64
      %v1827 = vpop.permute.xlu0 %1826
      %1833 = vst.msk [vmem:[#allocation2] sm:$0xff] %vm1096, %v1819
      %1834 = vst.msk [vmem:[#allocation2 + $0x8] sm:$0xff] %vm1096, %v1821
      %1835 = vst.msk [vmem:[#allocation2 + $0x10] sm:$0xff] %vm1096, %v1823
      %1836 = vst.msk [vmem:[#allocation2 + $0x18] sm:$0xff] %vm1096, %v1825
      %1837 = vst.msk [vmem:[#allocation2 + $0x20] sm:$0xff] %vm1096, %v1827
      %v1838 = vld [vmem:[#allocation2] sm:$0xff]
      %v1839 = vld [vmem:[#allocation2 + $0x8] sm:$0xff]
      %v1840 = vld [vmem:[#allocation2 + $0x10] sm:$0xff]
      %v1841 = vld [vmem:[#allocation2 + $0x18] sm:$0xff]
      %v1842 = vld [vmem:[#allocation2 + $0x20] sm:$0xff]
      %s1843 = scalar_lea.vmem %s3, 36
      %v1844 = vld [vmem:[%s1843] sm:$0xf]
      %v1845 = vld [vmem:[%s1843 + $0x4] sm:$0xf]
      %v1846 = vld [vmem:[%s1843 + $0x8] sm:$0xf]
      %v1847 = vld [vmem:[%s1843 + $0xc] sm:$0xf]
      %v1848 = vld [vmem:[%s1843 + $0x10] sm:$0xf]
      %v1849 = vld [vmem:[%s1843 + $0x14] sm:$0xf]
      %v1850 = vld [vmem:[%s1843 + $0x18] sm:$0xf]
      %v1851 = vld [vmem:[%s1843 + $0x1c] sm:$0xf]
      %v1852 = vld [vmem:[%s1843 + $0x20] sm:$0xf]
      %v1862 = vunpack.c.l.b16 %v1844
      %v1863 = vunpack.c.l.b16 %v1845
      %v1864 = vunpack.c.l.b16 %v1846
      %v1865 = vunpack.c.l.b16 %v1847
      %v1866 = vunpack.c.l.b16 %v1848
      %v1867 = vunpack.c.l.b16 %v1849
      %v1868 = vunpack.c.l.b16 %v1850
      %v1869 = vunpack.c.l.b16 %v1851
      %v1870 = vunpack.c.l.b16 %v1852
      %v1871 = vpack.c.b16 %v1863, %v1862
      %v1872 = vpack.c.b16 %v1865, %v1864
      %v1873 = vpack.c.b16 %v1867, %v1866
      %v1874 = vpack.c.b16 %v1869, %v1868
      %v1875 = vpack.c.b16 %v1870, %v1870
      %vm1880 = vcmask 588800
      %v1882 = vsel %vm1880, %v1838, 0
      %v1885 = vsel %vm1880, %v1839, 0
      %v1888 = vsel %vm1880, %v1840, 0
      %v1891 = vsel %vm1880, %v1841, 0
      %v1894 = vsel %vm1880, %v1842, 0
      %vm1896 = vcmask 1043456
      %v1898 = vsel %vm1896, %v1875, 0
      %1900 = vmatprep.subr.bf16.mxu0 0
      %1901 = vmatpush1.bf16.msra.mxu0 %v1871
      %1902 = vmatprep.subr.bf16.mxu0 0
      %1903 = vmatpush1.bf16.msra.mxu0 %v1872
      %1904 = vmatprep.subr.bf16.mxu0 0
      %1905 = vmatpush1.bf16.msra.mxu0 %v1873
      %1906 = vmatprep.subr.bf16.mxu0 0
      %1907 = vmatpush1.bf16.msra.mxu0 %v1874
      %1908 = vmatprep.subr.bf16.mxu0 0
      %1909 = vmatpush1.bf16.msra.mxu0 %v1898
      %1910 = vmatprep.subr.bf16.mxu0 0
      %1911 = vmatpush1.bf16.msra.mxu0 0
      %1912 = vmatprep.subr.bf16.mxu0 0
      %1913 = vmatpush1.bf16.msra.mxu0 0
      %1914 = vmatprep.subr.bf16.mxu0 0
      %1915 = vmatpush1.bf16.msra.mxu0 0
      %1916 = vmatprep.subr.bf16.mxu0 0
      %1917 = vmatpush1.bf16.msra.mxu0 0
      %1918 = vmatprep.subr.bf16.mxu0 0
      %1919 = vmatpush1.bf16.msra.mxu0 0
      %1920 = vmatprep.subr.bf16.mxu0 0
      %1921 = vmatpush1.bf16.msra.mxu0 0
      %1922 = vmatprep.subr.bf16.mxu0 0
      %1923 = vmatpush1.bf16.msra.mxu0 0
      %1924 = vmatprep.subr.bf16.mxu0 0
      %1925 = vmatpush1.bf16.msra.mxu0 0
      %1926 = vmatprep.subr.bf16.mxu0 0
      %1927 = vmatpush1.bf16.msra.mxu0 0
      %1928 = vmatprep.subr.bf16.mxu0 0
      %1929 = vmatpush1.bf16.msra.mxu0 0
      %1930 = vmatprep.subr.bf16.mxu0 0
      %1931 = vmatpush1.bf16.msra.mxu0 0
      %1932 = vmatprep.mubr.bf16.mxu0 0
      %1933 = vmatmul.mubr.bf16.gmra.mrb[0].mxu0 %v1882
      %v1934 = vpop.f32.mrb[0].mxu0
      %v1935 = vadd.f32 0.0, %v1934
      %v1936 = vpop.f32.mrb[0].mxu0
      %v1937 = vpop.f32.mrb[0].mxu0
      %v1938 = vadd.f32 0.0, %v1937
      %v1939 = vpop.f32.mrb[0].mxu0
      %1940 = vmatprep.mubr.bf16.mxu0 0
      %1941 = vmatmul.mubr.bf16.gmra.mrb[0].mxu0 %v1885
      %v1942 = vpop.f32.mrb[0].mxu0
      %v1943 = vadd.f32 0.0, %v1942
      %v1944 = vpop.f32.mrb[0].mxu0
      %v1945 = vpop.f32.mrb[0].mxu0
      %v1946 = vadd.f32 0.0, %v1945
      %v1947 = vpop.f32.mrb[0].mxu0
      %1948 = vmatprep.mubr.bf16.mxu0 0
      %1949 = vmatmul.mubr.bf16.gmra.mrb[0].mxu0 %v1888
      %v1950 = vpop.f32.mrb[0].mxu0
      %v1951 = vadd.f32 0.0, %v1950
      %v1952 = vpop.f32.mrb[0].mxu0
      %v1953 = vpop.f32.mrb[0].mxu0
      %v1954 = vadd.f32 0.0, %v1953
      %v1955 = vpop.f32.mrb[0].mxu0
      %1956 = vmatprep.mubr.bf16.mxu0 0
      %1957 = vmatmul.mubr.bf16.gmra.mrb[0].mxu0 %v1891
      %v1958 = vpop.f32.mrb[0].mxu0
      %v1959 = vadd.f32 0.0, %v1958
      %v1960 = vpop.f32.mrb[0].mxu0
      %v1961 = vpop.f32.mrb[0].mxu0
      %v1962 = vadd.f32 0.0, %v1961
      %v1963 = vpop.f32.mrb[0].mxu0
      %1964 = vmatprep.mubr.bf16.mxu0 0
      %1965 = vmatmul.mubr.bf16.gmra.mrb[0].mxu0 %v1894
      %v1966 = vpop.f32.mrb[0].mxu0
      %v1967 = vadd.f32 0.0, %v1966
      %v1968 = vpop.f32.mrb[0].mxu0
      %v1969 = vpop.f32.mrb[0].mxu0
      %v1970 = vadd.f32 0.0, %v1969
      %v1971 = vpop.f32.mrb[0].mxu0
      %1972 = vdwg.mxu0
      %v1982 = vunpack.c.l.b16 %v1107
      %v1983 = vunpack.c.l.b16 %v1108
      %v1984 = vunpack.c.l.b16 %v1109
      %v1985 = vunpack.c.l.b16 %v1110
      %v1986 = vunpack.c.l.b16 %v1111
      %v1987 = vunpack.c.l.b16 %v1112
      %v1988 = vunpack.c.l.b16 %v1113
      %v1989 = vunpack.c.l.b16 %v1114
      %v1990 = vunpack.c.l.b16 %v1115
      %v1991 = vpack.c.b16 %v1983, %v1982
      %v1992 = vpack.c.b16 %v1985, %v1984
      %v1993 = vpack.c.b16 %v1987, %v1986
      %v1994 = vpack.c.b16 %v1989, %v1988
      %v1995 = vpack.c.b16 %v1990, %v1990
      %v2001 = vsel %vm1880, %v1102, 0
      %v2004 = vsel %vm1880, %v1103, 0
      %v2007 = vsel %vm1880, %v1104, 0
      %v2010 = vsel %vm1880, %v1105, 0
      %v2013 = vsel %vm1880, %v1106, 0
      %v2016 = vsel %vm1896, %v1995, 0
      %2018 = vmatprep.subr.bf16.mxu0 0
      %2019 = vmatpush1.bf16.msra.mxu0 %v1991
      %2020 = vmatprep.subr.bf16.mxu0 0
      %2021 = vmatpush1.bf16.msra.mxu0 %v1992
      %2022 = vmatprep.subr.bf16.mxu0 0
      %2023 = vmatpush1.bf16.msra.mxu0 %v1993
      %2024 = vmatprep.subr.bf16.mxu0 0
      %2025 = vmatpush1.bf16.msra.mxu0 %v1994
      %2026 = vmatprep.subr.bf16.mxu0 0
      %2027 = vmatpush1.bf16.msra.mxu0 %v2016
      %2028 = vmatprep.subr.bf16.mxu0 0
      %2029 = vmatpush1.bf16.msra.mxu0 0
      %2030 = vmatprep.subr.bf16.mxu0 0
      %2031 = vmatpush1.bf16.msra.mxu0 0
      %2032 = vmatprep.subr.bf16.mxu0 0
      %2033 = vmatpush1.bf16.msra.mxu0 0
      %2034 = vmatprep.subr.bf16.mxu0 0
      %2035 = vmatpush1.bf16.msra.mxu0 0
      %2036 = vmatprep.subr.bf16.mxu0 0
      %2037 = vmatpush1.bf16.msra.mxu0 0
      %2038 = vmatprep.subr.bf16.mxu0 0
      %2039 = vmatpush1.bf16.msra.mxu0 0
      %2040 = vmatprep.subr.bf16.mxu0 0
      %2041 = vmatpush1.bf16.msra.mxu0 0
      %2042 = vmatprep.subr.bf16.mxu0 0
      %2043 = vmatpush1.bf16.msra.mxu0 0
      %2044 = vmatprep.subr.bf16.mxu0 0
      %2045 = vmatpush1.bf16.msra.mxu0 0
      %2046 = vmatprep.subr.bf16.mxu0 0
      %2047 = vmatpush1.bf16.msra.mxu0 0
      %2048 = vmatprep.subr.bf16.mxu0 0
      %2049 = vmatpush1.bf16.msra.mxu0 0
      %2050 = vmatprep.mubr.bf16.mxu0 0
      %2051 = vmatmul.mubr.bf16.gmra.mrb[0].mxu0 %v2001
      %v2052 = vpop.f32.mrb[0].mxu0
      %v2053 = vadd.f32 %v1935, %v2052
      %v2054 = vpop.f32.mrb[0].mxu0
      %v2055 = vpop.f32.mrb[0].mxu0
      %v2056 = vadd.f32 %v1938, %v2055
      %v2057 = vpop.f32.mrb[0].mxu0
      %2058 = vmatprep.mubr.bf16.mxu0 0
      %2059 = vmatmul.mubr.bf16.gmra.mrb[0].mxu0 %v2004
      %v2060 = vpop.f32.mrb[0].mxu0
      %v2061 = vadd.f32 %v1943, %v2060
      %v2062 = vpop.f32.mrb[0].mxu0
      %v2063 = vpop.f32.mrb[0].mxu0
      %v2064 = vadd.f32 %v1946, %v2063
      %v2065 = vpop.f32.mrb[0].mxu0
      %2066 = vmatprep.mubr.bf16.mxu0 0
      %2067 = vmatmul.mubr.bf16.gmra.mrb[0].mxu0 %v2007
      %v2068 = vpop.f32.mrb[0].mxu0
      %v2069 = vadd.f32 %v1951, %v2068
      %v2070 = vpop.f32.mrb[0].mxu0
      %v2071 = vpop.f32.mrb[0].mxu0
      %v2072 = vadd.f32 %v1954, %v2071
      %v2073 = vpop.f32.mrb[0].mxu0
      %2074 = vmatprep.mubr.bf16.mxu0 0
      %2075 = vmatmul.mubr.bf16.gmra.mrb[0].mxu0 %v2010
      %v2076 = vpop.f32.mrb[0].mxu0
      %v2077 = vadd.f32 %v1959, %v2076
      %v2078 = vpop.f32.mrb[0].mxu0
      %v2079 = vpop.f32.mrb[0].mxu0
      %v2080 = vadd.f32 %v1962, %v2079
      %v2081 = vpop.f32.mrb[0].mxu0
      %2082 = vmatprep.mubr.bf16.mxu0 0
      %2083 = vmatmul.mubr.bf16.gmra.mrb[0].mxu0 %v2013
      %v2084 = vpop.f32.mrb[0].mxu0
      %v2085 = vadd.f32 %v1967, %v2084
      %v2086 = vpop.f32.mrb[0].mxu0
      %v2087 = vpop.f32.mrb[0].mxu0
      %v2088 = vadd.f32 %v1970, %v2087
      %v2089 = vpop.f32.mrb[0].mxu0
      %2090 = vdwg.mxu0
      %v2091 = vld [vmem:[%s345] sm:$0xf]
      %v2092 = vld [vmem:[%s345 + $0x4] sm:$0xf]
      %v2093 = vld [vmem:[%s345 + $0x8] sm:$0xf]
      %v2094 = vld [vmem:[%s345 + $0xc] sm:$0xf]
      %v2095 = vld [vmem:[%s345 + $0x10] sm:$0xf]
      %v2096 = vld [vmem:[%s345 + $0x14] sm:$0xf]
      %v2097 = vld [vmem:[%s345 + $0x18] sm:$0xf]
      %v2098 = vld [vmem:[%s345 + $0x1c] sm:$0xf]
      %v2099 = vld [vmem:[%s345 + $0x20] sm:$0xf]
      %v2100 = vld [vmem:[%s345 + $0x24] sm:$0xf]
      %v2111 = vunpack.c.l.b16 %v2091
      %v2112 = vunpack.c.l.b16 %v2092
      %v2113 = vunpack.c.l.b16 %v2093
      %v2114 = vunpack.c.l.b16 %v2094
      %v2115 = vunpack.c.l.b16 %v2095
      %v2116 = vunpack.c.l.b16 %v2096
      %v2117 = vunpack.c.l.b16 %v2097
      %v2118 = vunpack.c.l.b16 %v2098
      %v2119 = vunpack.c.l.b16 %v2099
      %v2120 = vunpack.c.l.b16 %v2100
      %v2121 = vpack.c.b16 %v2112, %v2111
      %v2122 = vpack.c.b16 %v2114, %v2113
      %v2123 = vpack.c.b16 %v2116, %v2115
      %v2124 = vpack.c.b16 %v2118, %v2117
      %v2125 = vpack.c.b16 %v2120, %v2119
      %2131 = vst.msk [vmem:[#allocation2] sm:$0xff] %vm405, %v2121
      %2132 = vst.msk [vmem:[#allocation2 + $0x8] sm:$0xff] %vm405, %v2122
      %2133 = vst.msk [vmem:[#allocation2 + $0x10] sm:$0xff] %vm405, %v2123
      %2134 = vst.msk [vmem:[#allocation2 + $0x18] sm:$0xff] %vm405, %v2124
      %2135 = vst.msk [vmem:[#allocation2 + $0x20] sm:$0xff] %vm405, %v2125
      %v2136 = vld [vmem:[%s345] sm:$0xf]
      %v2137 = vld [vmem:[%s345 + $0x4] sm:$0xf]
      %v2138 = vld [vmem:[%s345 + $0x8] sm:$0xf]
      %v2139 = vld [vmem:[%s345 + $0xc] sm:$0xf]
      %v2140 = vld [vmem:[%s345 + $0x10] sm:$0xf]
      %v2141 = vld [vmem:[%s345 + $0x14] sm:$0xf]
      %v2142 = vld [vmem:[%s345 + $0x18] sm:$0xf]
      %v2143 = vld [vmem:[%s345 + $0x1c] sm:$0xf]
      %v2144 = vld [vmem:[%s345 + $0x20] sm:$0xf]
      %v2145 = vld [vmem:[%s345 + $0x24] sm:$0xf]
      %v2146 = vld [vmem:[%s345 + $0x28] sm:$0x1]
      %v2158 = vunpack.c.l.b16 %v2136
      %v2159 = vunpack.c.l.b16 %v2137
      %v2160 = vunpack.c.l.b16 %v2138
      %v2161 = vunpack.c.l.b16 %v2139
      %v2162 = vunpack.c.l.b16 %v2140
      %v2163 = vunpack.c.l.b16 %v2141
      %v2164 = vunpack.c.l.b16 %v2142
      %v2165 = vunpack.c.l.b16 %v2143
      %v2166 = vunpack.c.l.b16 %v2144
      %v2167 = vunpack.c.l.b16 %v2145
      %v2168 = vunpack.c.l.b16 %v2146
      %v2169 = vpack.c.b16 %v2159, %v2158
      %v2170 = vpack.c.b16 %v2161, %v2160
      %v2171 = vpack.c.b16 %v2163, %v2162
      %v2172 = vpack.c.b16 %v2165, %v2164
      %v2173 = vpack.c.b16 %v2167, %v2166
      %v2174 = vpack.c.b16 %v2168, %v2168
      %v2176 = vshrl.u32 %v2169, 16
      %v2178 = vshll.u32 %v2169, 16
      %v2180 = vrot.slane %v2178, 1
      %v2181 = vor.u32 %v2176, %v2180
      %v2183 = vshll.u32 %v2170, 16
      %v2185 = vrot.slane %v2183, 1
      %v2186 = vsel %vm450, %v2181, %v2185
      %v2187 = vshrl.u32 %v2170, 16
      %v2189 = vor.u32 %v2187, %v2185
      %v2191 = vshll.u32 %v2171, 16
      %v2193 = vrot.slane %v2191, 1
      %v2194 = vsel %vm450, %v2189, %v2193
      %v2195 = vshrl.u32 %v2171, 16
      %v2197 = vor.u32 %v2195, %v2193
      %v2199 = vshll.u32 %v2172, 16
      %v2201 = vrot.slane %v2199, 1
      %v2202 = vsel %vm450, %v2197, %v2201
      %v2203 = vshrl.u32 %v2172, 16
      %v2205 = vor.u32 %v2203, %v2201
      %v2207 = vshll.u32 %v2173, 16
      %v2209 = vrot.slane %v2207, 1
      %v2210 = vsel %vm450, %v2205, %v2209
      %v2211 = vshrl.u32 %v2173, 16
      %v2213 = vor.u32 %v2211, %v2209
      %v2215 = vshll.u32 %v2174, 16
      %v2217 = vrot.slane %v2215, 1
      %v2218 = vsel %vm450, %v2213, %v2217
      %2219 = vrot.lane.b32.xlu0 %v2186, 8
      %v2220 = vpop.permute.xlu0 %2219
      %2221 = vrot.lane.b32.xlu0 %v2194, 8
      %v2222 = vpop.permute.xlu0 %2221
      %2223 = vrot.lane.b32.xlu0 %v2202, 8
      %v2224 = vpop.permute.xlu0 %2223
      %2225 = vrot.lane.b32.xlu0 %v2210, 8
      %v2226 = vpop.permute.xlu0 %2225
      %2227 = vrot.lane.b32.xlu0 %v2218, 8
      %v2228 = vpop.permute.xlu0 %2227
      %2234 = vst.msk [vmem:[#allocation2] sm:$0xff] %vm510, %v2220
      %2235 = vst.msk [vmem:[#allocation2 + $0x8] sm:$0xff] %vm510, %v2222
      %2236 = vst.msk [vmem:[#allocation2 + $0x10] sm:$0xff] %vm510, %v2224
      %2237 = vst.msk [vmem:[#allocation2 + $0x18] sm:$0xff] %vm510, %v2226
      %2238 = vst.msk [vmem:[#allocation2 + $0x20] sm:$0xff] %vm510, %v2228
      %v2239 = vld [vmem:[%s345] sm:$0xe]
      %v2240 = vld [vmem:[%s345 + $0x4] sm:$0xf]
      %v2241 = vld [vmem:[%s345 + $0x8] sm:$0xf]
      %v2242 = vld [vmem:[%s345 + $0xc] sm:$0xf]
      %v2243 = vld [vmem:[%s345 + $0x10] sm:$0xf]
      %v2244 = vld [vmem:[%s345 + $0x14] sm:$0xf]
      %v2245 = vld [vmem:[%s345 + $0x18] sm:$0xf]
      %v2246 = vld [vmem:[%s345 + $0x1c] sm:$0xf]
      %v2247 = vld [vmem:[%s345 + $0x20] sm:$0xf]
      %v2248 = vld [vmem:[%s345 + $0x24] sm:$0xf]
      %v2249 = vld [vmem:[%s345 + $0x28] sm:$0x1]
      %v2261 = vunpack.c.l.b16 %v2239
      %v2262 = vunpack.c.l.b16 %v2240
      %v2263 = vunpack.c.l.b16 %v2241
      %v2264 = vunpack.c.l.b16 %v2242
      %v2265 = vunpack.c.l.b16 %v2243
      %v2266 = vunpack.c.l.b16 %v2244
      %v2267 = vunpack.c.l.b16 %v2245
      %v2268 = vunpack.c.l.b16 %v2246
      %v2269 = vunpack.c.l.b16 %v2247
      %v2270 = vunpack.c.l.b16 %v2248
      %v2271 = vunpack.c.l.b16 %v2249
      %v2272 = vpack.c.b16 %v2262, %v2261
      %v2273 = vpack.c.b16 %v2264, %v2263
      %v2274 = vpack.c.b16 %v2266, %v2265
      %v2275 = vpack.c.b16 %v2268, %v2267
      %v2276 = vpack.c.b16 %v2270, %v2269
      %v2277 = vpack.c.b16 %v2271, %v2271
      %v2278 = vrot.slane %v2272, 1
      %v2279 = vrot.slane %v2273, 1
      %v2280 = vsel %vm555, %v2278, %v2279
      %v2281 = vrot.slane %v2274, 1
      %v2282 = vsel %vm555, %v2279, %v2281
      %v2283 = vrot.slane %v2275, 1
      %v2284 = vsel %vm555, %v2281, %v2283
      %v2285 = vrot.slane %v2276, 1
      %v2286 = vsel %vm555, %v2283, %v2285
      %v2287 = vrot.slane %v2277, 1
      %v2288 = vsel %vm555, %v2285, %v2287
      %2289 = vrot.lane.b32.xlu0 %v2280, 16
      %v2290 = vpop.permute.xlu0 %2289
      %2291 = vrot.lane.b32.xlu0 %v2282, 16
      %v2292 = vpop.permute.xlu0 %2291
      %2293 = vrot.lane.b32.xlu0 %v2284, 16
      %v2294 = vpop.permute.xlu0 %2293
      %2295 = vrot.lane.b32.xlu0 %v2286, 16
      %v2296 = vpop.permute.xlu0 %2295
      %2297 = vrot.lane.b32.xlu0 %v2288, 16
      %v2298 = vpop.permute.xlu0 %2297
      %2304 = vst.msk [vmem:[#allocation2] sm:$0xff] %vm582, %v2290
      %2305 = vst.msk [vmem:[#allocation2 + $0x8] sm:$0xff] %vm582, %v2292
      %2306 = vst.msk [vmem:[#allocation2 + $0x10] sm:$0xff] %vm582, %v2294
      %2307 = vst.msk [vmem:[#allocation2 + $0x18] sm:$0xff] %vm582, %v2296
      %2308 = vst.msk [vmem:[#allocation2 + $0x20] sm:$0xff] %vm582, %v2298
      %v2309 = vld [vmem:[%s345 + $0x4] sm:$0xe]
      %v2310 = vld [vmem:[%s345 + $0x8] sm:$0xf]
      %v2311 = vld [vmem:[%s345 + $0xc] sm:$0xf]
      %v2312 = vld [vmem:[%s345 + $0x10] sm:$0xf]
      %v2313 = vld [vmem:[%s345 + $0x14] sm:$0xf]
      %v2314 = vld [vmem:[%s345 + $0x18] sm:$0xf]
      %v2315 = vld [vmem:[%s345 + $0x1c] sm:$0xf]
      %v2316 = vld [vmem:[%s345 + $0x20] sm:$0xf]
      %v2317 = vld [vmem:[%s345 + $0x24] sm:$0xf]
      %v2318 = vld [vmem:[%s345 + $0x28] sm:$0xf]
      %v2319 = vld [vmem:[%s345 + $0x2c] sm:$0x1]
      %v2331 = vunpack.c.l.b16 %v2309
      %v2332 = vunpack.c.l.b16 %v2310
      %v2333 = vunpack.c.l.b16 %v2311
      %v2334 = vunpack.c.l.b16 %v2312
      %v2335 = vunpack.c.l.b16 %v2313
      %v2336 = vunpack.c.l.b16 %v2314
      %v2337 = vunpack.c.l.b16 %v2315
      %v2338 = vunpack.c.l.b16 %v2316
      %v2339 = vunpack.c.l.b16 %v2317
      %v2340 = vunpack.c.l.b16 %v2318
      %v2341 = vunpack.c.l.b16 %v2319
      %v2342 = vpack.c.b16 %v2332, %v2331
      %v2343 = vpack.c.b16 %v2334, %v2333
      %v2344 = vpack.c.b16 %v2336, %v2335
      %v2345 = vpack.c.b16 %v2338, %v2337
      %v2346 = vpack.c.b16 %v2340, %v2339
      %v2347 = vpack.c.b16 %v2341, %v2341
      %v2348 = vrot.slane %v2342, 1
      %v2349 = vrot.slane %v2343, 1
      %v2350 = vsel %vm555, %v2348, %v2349
      %v2351 = vrot.slane %v2344, 1
      %v2352 = vsel %vm555, %v2349, %v2351
      %v2353 = vrot.slane %v2345, 1
      %v2354 = vsel %vm555, %v2351, %v2353
      %v2355 = vrot.slane %v2346, 1
      %v2356 = vsel %vm555, %v2353, %v2355
      %v2357 = vrot.slane %v2347, 1
      %v2358 = vsel %vm555, %v2355, %v2357
      %2359 = vrot.lane.b32.xlu0 %v2350, 24
      %v2360 = vpop.permute.xlu0 %2359
      %2361 = vrot.lane.b32.xlu0 %v2352, 24
      %v2362 = vpop.permute.xlu0 %2361
      %2363 = vrot.lane.b32.xlu0 %v2354, 24
      %v2364 = vpop.permute.xlu0 %2363
      %2365 = vrot.lane.b32.xlu0 %v2356, 24
      %v2366 = vpop.permute.xlu0 %2365
      %2367 = vrot.lane.b32.xlu0 %v2358, 24
      %v2368 = vpop.permute.xlu0 %2367
      %2374 = vst.msk [vmem:[#allocation2] sm:$0xff] %vm653, %v2360
      %2375 = vst.msk [vmem:[#allocation2 + $0x8] sm:$0xff] %vm653, %v2362
      %2376 = vst.msk [vmem:[#allocation2 + $0x10] sm:$0xff] %vm653, %v2364
      %2377 = vst.msk [vmem:[#allocation2 + $0x18] sm:$0xff] %vm653, %v2366
      %2378 = vst.msk [vmem:[#allocation2 + $0x20] sm:$0xff] %vm653, %v2368
      %v2379 = vld [vmem:[%s345 + $0x4] sm:$0xe]
      %v2380 = vld [vmem:[%s345 + $0x8] sm:$0xf]
      %v2381 = vld [vmem:[%s345 + $0xc] sm:$0xf]
      %v2382 = vld [vmem:[%s345 + $0x10] sm:$0xf]
      %v2383 = vld [vmem:[%s345 + $0x14] sm:$0xf]
      %v2384 = vld [vmem:[%s345 + $0x18] sm:$0xf]
      %v2385 = vld [vmem:[%s345 + $0x1c] sm:$0xf]
      %v2386 = vld [vmem:[%s345 + $0x20] sm:$0xf]
      %v2387 = vld [vmem:[%s345 + $0x24] sm:$0xf]
      %v2388 = vld [vmem:[%s345 + $0x28] sm:$0xf]
      %v2389 = vld [vmem:[%s345 + $0x2c] sm:$0x3]
      %v2401 = vunpack.c.l.b16 %v2379
      %v2402 = vunpack.c.l.b16 %v2380
      %v2403 = vunpack.c.l.b16 %v2381
      %v2404 = vunpack.c.l.b16 %v2382
      %v2405 = vunpack.c.l.b16 %v2383
      %v2406 = vunpack.c.l.b16 %v2384
      %v2407 = vunpack.c.l.b16 %v2385
      %v2408 = vunpack.c.l.b16 %v2386
      %v2409 = vunpack.c.l.b16 %v2387
      %v2410 = vunpack.c.l.b16 %v2388
      %v2411 = vunpack.c.l.b16 %v2389
      %v2412 = vpack.c.b16 %v2402, %v2401
      %v2413 = vpack.c.b16 %v2404, %v2403
      %v2414 = vpack.c.b16 %v2406, %v2405
      %v2415 = vpack.c.b16 %v2408, %v2407
      %v2416 = vpack.c.b16 %v2410, %v2409
      %v2417 = vpack.c.b16 %v2411, %v2411
      %v2419 = vshrl.u32 %v2412, 16
      %v2421 = vrot.slane %v2419, 1
      %v2422 = vshll.u32 %v2412, 16
      %v2424 = vrot.slane %v2422, 2
      %v2425 = vor.u32 %v2421, %v2424
      %v2427 = vshrl.u32 %v2413, 16
      %v2429 = vrot.slane %v2427, 1
      %v2430 = vshll.u32 %v2413, 16
      %v2432 = vrot.slane %v2430, 2
      %v2433 = vor.u32 %v2429, %v2432
      %v2434 = vsel %vm698, %v2425, %v2433
      %v2436 = vshrl.u32 %v2414, 16
      %v2438 = vrot.slane %v2436, 1
      %v2439 = vshll.u32 %v2414, 16
      %v2441 = vrot.slane %v2439, 2
      %v2442 = vor.u32 %v2438, %v2441
      %v2443 = vsel %vm698, %v2433, %v2442
      %v2445 = vshrl.u32 %v2415, 16
      %v2447 = vrot.slane %v2445, 1
      %v2448 = vshll.u32 %v2415, 16
      %v2450 = vrot.slane %v2448, 2
      %v2451 = vor.u32 %v2447, %v2450
      %v2452 = vsel %vm698, %v2442, %v2451
      %v2454 = vshrl.u32 %v2416, 16
      %v2456 = vrot.slane %v2454, 1
      %v2457 = vshll.u32 %v2416, 16
      %v2459 = vrot.slane %v2457, 2
      %v2460 = vor.u32 %v2456, %v2459
      %v2461 = vsel %vm698, %v2451, %v2460
      %v2463 = vshrl.u32 %v2417, 16
      %v2465 = vrot.slane %v2463, 1
      %v2466 = vshll.u32 %v2417, 16
      %v2468 = vrot.slane %v2466, 2
      %v2469 = vor.u32 %v2465, %v2468
      %v2470 = vsel %vm698, %v2460, %v2469
      %2471 = vrot.lane.b32.xlu0 %v2434, 32
      %v2472 = vpop.permute.xlu0 %2471
      %2473 = vrot.lane.b32.xlu0 %v2443, 32
      %v2474 = vpop.permute.xlu0 %2473
      %2475 = vrot.lane.b32.xlu0 %v2452, 32
      %v2476 = vpop.permute.xlu0 %2475
      %2477 = vrot.lane.b32.xlu0 %v2461, 32
      %v2478 = vpop.permute.xlu0 %2477
      %2479 = vrot.lane.b32.xlu0 %v2470, 32
      %v2480 = vpop.permute.xlu0 %2479
      %2486 = vst.msk [vmem:[#allocation2] sm:$0xff] %vm767, %v2472
      %2487 = vst.msk [vmem:[#allocation2 + $0x8] sm:$0xff] %vm767, %v2474
      %2488 = vst.msk [vmem:[#allocation2 + $0x10] sm:$0xff] %vm767, %v2476
      %2489 = vst.msk [vmem:[#allocation2 + $0x18] sm:$0xff] %vm767, %v2478
      %2490 = vst.msk [vmem:[#allocation2 + $0x20] sm:$0xff] %vm767, %v2480
      %v2491 = vld [vmem:[%s345 + $0x4] sm:$0xc]
      %v2492 = vld [vmem:[%s345 + $0x8] sm:$0xf]
      %v2493 = vld [vmem:[%s345 + $0xc] sm:$0xf]
      %v2494 = vld [vmem:[%s345 + $0x10] sm:$0xf]
      %v2495 = vld [vmem:[%s345 + $0x14] sm:$0xf]
      %v2496 = vld [vmem:[%s345 + $0x18] sm:$0xf]
      %v2497 = vld [vmem:[%s345 + $0x1c] sm:$0xf]
      %v2498 = vld [vmem:[%s345 + $0x20] sm:$0xf]
      %v2499 = vld [vmem:[%s345 + $0x24] sm:$0xf]
      %v2500 = vld [vmem:[%s345 + $0x28] sm:$0xf]
      %v2501 = vld [vmem:[%s345 + $0x2c] sm:$0x3]
      %v2513 = vunpack.c.l.b16 %v2491
      %v2514 = vunpack.c.l.b16 %v2492
      %v2515 = vunpack.c.l.b16 %v2493
      %v2516 = vunpack.c.l.b16 %v2494
      %v2517 = vunpack.c.l.b16 %v2495
      %v2518 = vunpack.c.l.b16 %v2496
      %v2519 = vunpack.c.l.b16 %v2497
      %v2520 = vunpack.c.l.b16 %v2498
      %v2521 = vunpack.c.l.b16 %v2499
      %v2522 = vunpack.c.l.b16 %v2500
      %v2523 = vunpack.c.l.b16 %v2501
      %v2524 = vpack.c.b16 %v2514, %v2513
      %v2525 = vpack.c.b16 %v2516, %v2515
      %v2526 = vpack.c.b16 %v2518, %v2517
      %v2527 = vpack.c.b16 %v2520, %v2519
      %v2528 = vpack.c.b16 %v2522, %v2521
      %v2529 = vpack.c.b16 %v2523, %v2523
      %v2530 = vrot.slane %v2524, 2
      %v2531 = vrot.slane %v2525, 2
      %v2532 = vsel %vm812, %v2530, %v2531
      %v2533 = vrot.slane %v2526, 2
      %v2534 = vsel %vm812, %v2531, %v2533
      %v2535 = vrot.slane %v2527, 2
      %v2536 = vsel %vm812, %v2533, %v2535
      %v2537 = vrot.slane %v2528, 2
      %v2538 = vsel %vm812, %v2535, %v2537
      %v2539 = vrot.slane %v2529, 2
      %v2540 = vsel %vm812, %v2537, %v2539
      %2541 = vrot.lane.b32.xlu0 %v2532, 40
      %v2542 = vpop.permute.xlu0 %2541
      %2543 = vrot.lane.b32.xlu0 %v2534, 40
      %v2544 = vpop.permute.xlu0 %2543
      %2545 = vrot.lane.b32.xlu0 %v2536, 40
      %v2546 = vpop.permute.xlu0 %2545
      %2547 = vrot.lane.b32.xlu0 %v2538, 40
      %v2548 = vpop.permute.xlu0 %2547
      %2549 = vrot.lane.b32.xlu0 %v2540, 40
      %v2550 = vpop.permute.xlu0 %2549
      %2556 = vst.msk [vmem:[#allocation2] sm:$0xff] %vm839, %v2542
      %2557 = vst.msk [vmem:[#allocation2 + $0x8] sm:$0xff] %vm839, %v2544
      %2558 = vst.msk [vmem:[#allocation2 + $0x10] sm:$0xff] %vm839, %v2546
      %2559 = vst.msk [vmem:[#allocation2 + $0x18] sm:$0xff] %vm839, %v2548
      %2560 = vst.msk [vmem:[#allocation2 + $0x20] sm:$0xff] %vm839, %v2550
      %v2561 = vld [vmem:[%s345 + $0x8] sm:$0xc]
      %v2562 = vld [vmem:[%s345 + $0xc] sm:$0xf]
      %v2563 = vld [vmem:[%s345 + $0x10] sm:$0xf]
      %v2564 = vld [vmem:[%s345 + $0x14] sm:$0xf]
      %v2565 = vld [vmem:[%s345 + $0x18] sm:$0xf]
      %v2566 = vld [vmem:[%s345 + $0x1c] sm:$0xf]
      %v2567 = vld [vmem:[%s345 + $0x20] sm:$0xf]
      %v2568 = vld [vmem:[%s345 + $0x24] sm:$0xf]
      %v2569 = vld [vmem:[%s345 + $0x28] sm:$0xf]
      %v2570 = vld [vmem:[%s345 + $0x2c] sm:$0xf]
      %v2571 = vld [vmem:[%s345 + $0x30] sm:$0x3]
      %v2583 = vunpack.c.l.b16 %v2561
      %v2584 = vunpack.c.l.b16 %v2562
      %v2585 = vunpack.c.l.b16 %v2563
      %v2586 = vunpack.c.l.b16 %v2564
      %v2587 = vunpack.c.l.b16 %v2565
      %v2588 = vunpack.c.l.b16 %v2566
      %v2589 = vunpack.c.l.b16 %v2567
      %v2590 = vunpack.c.l.b16 %v2568
      %v2591 = vunpack.c.l.b16 %v2569
      %v2592 = vunpack.c.l.b16 %v2570
      %v2593 = vunpack.c.l.b16 %v2571
      %v2594 = vpack.c.b16 %v2584, %v2583
      %v2595 = vpack.c.b16 %v2586, %v2585
      %v2596 = vpack.c.b16 %v2588, %v2587
      %v2597 = vpack.c.b16 %v2590, %v2589
      %v2598 = vpack.c.b16 %v2592, %v2591
      %v2599 = vpack.c.b16 %v2593, %v2593
      %v2600 = vrot.slane %v2594, 2
      %v2601 = vrot.slane %v2595, 2
      %v2602 = vsel %vm812, %v2600, %v2601
      %v2603 = vrot.slane %v2596, 2
      %v2604 = vsel %vm812, %v2601, %v2603
      %v2605 = vrot.slane %v2597, 2
      %v2606 = vsel %vm812, %v2603, %v2605
      %v2607 = vrot.slane %v2598, 2
      %v2608 = vsel %vm812, %v2605, %v2607
      %v2609 = vrot.slane %v2599, 2
      %v2610 = vsel %vm812, %v2607, %v2609
      %2611 = vrot.lane.b32.xlu0 %v2602, 48
      %v2612 = vpop.permute.xlu0 %2611
      %2613 = vrot.lane.b32.xlu0 %v2604, 48
      %v2614 = vpop.permute.xlu0 %2613
      %2615 = vrot.lane.b32.xlu0 %v2606, 48
      %v2616 = vpop.permute.xlu0 %2615
      %2617 = vrot.lane.b32.xlu0 %v2608, 48
      %v2618 = vpop.permute.xlu0 %2617
      %2619 = vrot.lane.b32.xlu0 %v2610, 48
      %v2620 = vpop.permute.xlu0 %2619
      %2626 = vst.msk [vmem:[#allocation2] sm:$0xff] %vm910, %v2612
      %2627 = vst.msk [vmem:[#allocation2 + $0x8] sm:$0xff] %vm910, %v2614
      %2628 = vst.msk [vmem:[#allocation2 + $0x10] sm:$0xff] %vm910, %v2616
      %2629 = vst.msk [vmem:[#allocation2 + $0x18] sm:$0xff] %vm910, %v2618
      %2630 = vst.msk [vmem:[#allocation2 + $0x20] sm:$0xff] %vm910, %v2620
      %v2631 = vld [vmem:[%s345 + $0x8] sm:$0xc]
      %v2632 = vld [vmem:[%s345 + $0xc] sm:$0xf]
      %v2633 = vld [vmem:[%s345 + $0x10] sm:$0xf]
      %v2634 = vld [vmem:[%s345 + $0x14] sm:$0xf]
      %v2635 = vld [vmem:[%s345 + $0x18] sm:$0xf]
      %v2636 = vld [vmem:[%s345 + $0x1c] sm:$0xf]
      %v2637 = vld [vmem:[%s345 + $0x20] sm:$0xf]
      %v2638 = vld [vmem:[%s345 + $0x24] sm:$0xf]
      %v2639 = vld [vmem:[%s345 + $0x28] sm:$0xf]
      %v2640 = vld [vmem:[%s345 + $0x2c] sm:$0xf]
      %v2641 = vld [vmem:[%s345 + $0x30] sm:$0x7]
      %v2653 = vunpack.c.l.b16 %v2631
      %v2654 = vunpack.c.l.b16 %v2632
      %v2655 = vunpack.c.l.b16 %v2633
      %v2656 = vunpack.c.l.b16 %v2634
      %v2657 = vunpack.c.l.b16 %v2635
      %v2658 = vunpack.c.l.b16 %v2636
      %v2659 = vunpack.c.l.b16 %v2637
      %v2660 = vunpack.c.l.b16 %v2638
      %v2661 = vunpack.c.l.b16 %v2639
      %v2662 = vunpack.c.l.b16 %v2640
      %v2663 = vunpack.c.l.b16 %v2641
      %v2664 = vpack.c.b16 %v2654, %v2653
      %v2665 = vpack.c.b16 %v2656, %v2655
      %v2666 = vpack.c.b16 %v2658, %v2657
      %v2667 = vpack.c.b16 %v2660, %v2659
      %v2668 = vpack.c.b16 %v2662, %v2661
      %v2669 = vpack.c.b16 %v2663, %v2663
      %v2671 = vshrl.u32 %v2664, 16
      %v2673 = vrot.slane %v2671, 2
      %v2674 = vshll.u32 %v2664, 16
      %v2676 = vrot.slane %v2674, 3
      %v2677 = vor.u32 %v2673, %v2676
      %v2679 = vshrl.u32 %v2665, 16
      %v2681 = vrot.slane %v2679, 2
      %v2682 = vshll.u32 %v2665, 16
      %v2684 = vrot.slane %v2682, 3
      %v2685 = vor.u32 %v2681, %v2684
      %v2686 = vsel %vm955, %v2677, %v2685
      %v2688 = vshrl.u32 %v2666, 16
      %v2690 = vrot.slane %v2688, 2
      %v2691 = vshll.u32 %v2666, 16
      %v2693 = vrot.slane %v2691, 3
      %v2694 = vor.u32 %v2690, %v2693
      %v2695 = vsel %vm955, %v2685, %v2694
      %v2697 = vshrl.u32 %v2667, 16
      %v2699 = vrot.slane %v2697, 2
      %v2700 = vshll.u32 %v2667, 16
      %v2702 = vrot.slane %v2700, 3
      %v2703 = vor.u32 %v2699, %v2702
      %v2704 = vsel %vm955, %v2694, %v2703
      %v2706 = vshrl.u32 %v2668, 16
      %v2708 = vrot.slane %v2706, 2
      %v2709 = vshll.u32 %v2668, 16
      %v2711 = vrot.slane %v2709, 3
      %v2712 = vor.u32 %v2708, %v2711
      %v2713 = vsel %vm955, %v2703, %v2712
      %v2715 = vshrl.u32 %v2669, 16
      %v2717 = vrot.slane %v2715, 2
      %v2718 = vshll.u32 %v2669, 16
      %v2720 = vrot.slane %v2718, 3
      %v2721 = vor.u32 %v2717, %v2720
      %v2722 = vsel %vm955, %v2712, %v2721
      %2723 = vrot.lane.b32.xlu0 %v2686, 56
      %v2724 = vpop.permute.xlu0 %2723
      %2725 = vrot.lane.b32.xlu0 %v2695, 56
      %v2726 = vpop.permute.xlu0 %2725
      %2727 = vrot.lane.b32.xlu0 %v2704, 56
      %v2728 = vpop.permute.xlu0 %2727
      %2729 = vrot.lane.b32.xlu0 %v2713, 56
      %v2730 = vpop.permute.xlu0 %2729
      %2731 = vrot.lane.b32.xlu0 %v2722, 56
      %v2732 = vpop.permute.xlu0 %2731
      %2738 = vst.msk [vmem:[#allocation2] sm:$0xff] %vm1024, %v2724
      %2739 = vst.msk [vmem:[#allocation2 + $0x8] sm:$0xff] %vm1024, %v2726
      %2740 = vst.msk [vmem:[#allocation2 + $0x10] sm:$0xff] %vm1024, %v2728
      %2741 = vst.msk [vmem:[#allocation2 + $0x18] sm:$0xff] %vm1024, %v2730
      %2742 = vst.msk [vmem:[#allocation2 + $0x20] sm:$0xff] %vm1024, %v2732
      %v2743 = vld [vmem:[%s345 + $0x8] sm:$0x8]
      %v2744 = vld [vmem:[%s345 + $0xc] sm:$0xf]
      %v2745 = vld [vmem:[%s345 + $0x10] sm:$0xf]
      %v2746 = vld [vmem:[%s345 + $0x14] sm:$0xf]
      %v2747 = vld [vmem:[%s345 + $0x18] sm:$0xf]
      %v2748 = vld [vmem:[%s345 + $0x1c] sm:$0xf]
      %v2749 = vld [vmem:[%s345 + $0x20] sm:$0xf]
      %v2750 = vld [vmem:[%s345 + $0x24] sm:$0xf]
      %v2751 = vld [vmem:[%s345 + $0x28] sm:$0xf]
      %v2752 = vld [vmem:[%s345 + $0x2c] sm:$0xf]
      %v2753 = vld [vmem:[%s345 + $0x30] sm:$0x7]
      %v2765 = vunpack.c.l.b16 %v2743
      %v2766 = vunpack.c.l.b16 %v2744
      %v2767 = vunpack.c.l.b16 %v2745
      %v2768 = vunpack.c.l.b16 %v2746
      %v2769 = vunpack.c.l.b16 %v2747
      %v2770 = vunpack.c.l.b16 %v2748
      %v2771 = vunpack.c.l.b16 %v2749
      %v2772 = vunpack.c.l.b16 %v2750
      %v2773 = vunpack.c.l.b16 %v2751
      %v2774 = vunpack.c.l.b16 %v2752
      %v2775 = vunpack.c.l.b16 %v2753
      %v2776 = vpack.c.b16 %v2766, %v2765
      %v2777 = vpack.c.b16 %v2768, %v2767
      %v2778 = vpack.c.b16 %v2770, %v2769
      %v2779 = vpack.c.b16 %v2772, %v2771
      %v2780 = vpack.c.b16 %v2774, %v2773
      %v2781 = vpack.c.b16 %v2775, %v2775
      %v2782 = vrot.slane %v2776, 3
      %v2783 = vrot.slane %v2777, 3
      %v2784 = vsel %vm1069, %v2782, %v2783
      %v2785 = vrot.slane %v2778, 3
      %v2786 = vsel %vm1069, %v2783, %v2785
      %v2787 = vrot.slane %v2779, 3
      %v2788 = vsel %vm1069, %v2785, %v2787
      %v2789 = vrot.slane %v2780, 3
      %v2790 = vsel %vm1069, %v2787, %v2789
      %v2791 = vrot.slane %v2781, 3
      %v2792 = vsel %vm1069, %v2789, %v2791
      %2793 = vrot.lane.b32.xlu0 %v2784, 64
      %v2794 = vpop.permute.xlu0 %2793
      %2795 = vrot.lane.b32.xlu0 %v2786, 64
      %v2796 = vpop.permute.xlu0 %2795
      %2797 = vrot.lane.b32.xlu0 %v2788, 64
      %v2798 = vpop.permute.xlu0 %2797
      %2799 = vrot.lane.b32.xlu0 %v2790, 64
      %v2800 = vpop.permute.xlu0 %2799
      %2801 = vrot.lane.b32.xlu0 %v2792, 64
      %v2802 = vpop.permute.xlu0 %2801
      %2808 = vst.msk [vmem:[#allocation2] sm:$0xff] %vm1096, %v2794
      %2809 = vst.msk [vmem:[#allocation2 + $0x8] sm:$0xff] %vm1096, %v2796
      %2810 = vst.msk [vmem:[#allocation2 + $0x10] sm:$0xff] %vm1096, %v2798
      %2811 = vst.msk [vmem:[#allocation2 + $0x18] sm:$0xff] %vm1096, %v2800
      %2812 = vst.msk [vmem:[#allocation2 + $0x20] sm:$0xff] %vm1096, %v2802
      %v2813 = vld [vmem:[#allocation2] sm:$0xff]
      %v2814 = vld [vmem:[#allocation2 + $0x8] sm:$0xff]
      %v2815 = vld [vmem:[#allocation2 + $0x10] sm:$0xff]
      %v2816 = vld [vmem:[#allocation2 + $0x18] sm:$0xff]
      %v2817 = vld [vmem:[#allocation2 + $0x20] sm:$0xff]
      %s2818 = scalar_lea.vmem %s3, 72
      %v2819 = vld [vmem:[%s2818] sm:$0xf]
      %v2820 = vld [vmem:[%s2818 + $0x4] sm:$0xf]
      %v2821 = vld [vmem:[%s2818 + $0x8] sm:$0xf]
      %v2822 = vld [vmem:[%s2818 + $0xc] sm:$0xf]
      %v2823 = vld [vmem:[%s2818 + $0x10] sm:$0xf]
      %v2824 = vld [vmem:[%s2818 + $0x14] sm:$0xf]
      %v2825 = vld [vmem:[%s2818 + $0x18] sm:$0xf]
      %v2826 = vld [vmem:[%s2818 + $0x1c] sm:$0xf]
      %v2827 = vld [vmem:[%s2818 + $0x20] sm:$0xf]
      %v2837 = vunpack.c.l.b16 %v2819
      %v2838 = vunpack.c.l.b16 %v2820
      %v2839 = vunpack.c.l.b16 %v2821
      %v2840 = vunpack.c.l.b16 %v2822
      %v2841 = vunpack.c.l.b16 %v2823
      %v2842 = vunpack.c.l.b16 %v2824
      %v2843 = vunpack.c.l.b16 %v2825
      %v2844 = vunpack.c.l.b16 %v2826
      %v2845 = vunpack.c.l.b16 %v2827
      %v2846 = vpack.c.b16 %v2838, %v2837
      %v2847 = vpack.c.b16 %v2840, %v2839
      %v2848 = vpack.c.b16 %v2842, %v2841
      %v2849 = vpack.c.b16 %v2844, %v2843
      %v2850 = vpack.c.b16 %v2845, %v2845
      %v2856 = vsel %vm1880, %v2813, 0
      %v2859 = vsel %vm1880, %v2814, 0
      %v2862 = vsel %vm1880, %v2815, 0
      %v2865 = vsel %vm1880, %v2816, 0
      %v2868 = vsel %vm1880, %v2817, 0
      %v2871 = vsel %vm1896, %v2850, 0
      %2873 = vmatprep.subr.bf16.mxu0 0
      %2874 = vmatpush1.bf16.msra.mxu0 %v2846
      %2875 = vmatprep.subr.bf16.mxu0 0
      %2876 = vmatpush1.bf16.msra.mxu0 %v2847
      %2877 = vmatprep.subr.bf16.mxu0 0
      %2878 = vmatpush1.bf16.msra.mxu0 %v2848
      %2879 = vmatprep.subr.bf16.mxu0 0
      %2880 = vmatpush1.bf16.msra.mxu0 %v2849
      %2881 = vmatprep.subr.bf16.mxu0 0
      %2882 = vmatpush1.bf16.msra.mxu0 %v2871
      %2883 = vmatprep.subr.bf16.mxu0 0
      %2884 = vmatpush1.bf16.msra.mxu0 0
      %2885 = vmatprep.subr.bf16.mxu0 0
      %2886 = vmatpush1.bf16.msra.mxu0 0
      %2887 = vmatprep.subr.bf16.mxu0 0
      %2888 = vmatpush1.bf16.msra.mxu0 0
      %2889 = vmatprep.subr.bf16.mxu0 0
      %2890 = vmatpush1.bf16.msra.mxu0 0
      %2891 = vmatprep.subr.bf16.mxu0 0
      %2892 = vmatpush1.bf16.msra.mxu0 0
      %2893 = vmatprep.subr.bf16.mxu0 0
      %2894 = vmatpush1.bf16.msra.mxu0 0
      %2895 = vmatprep.subr.bf16.mxu0 0
      %2896 = vmatpush1.bf16.msra.mxu0 0
      %2897 = vmatprep.subr.bf16.mxu0 0
      %2898 = vmatpush1.bf16.msra.mxu0 0
      %2899 = vmatprep.subr.bf16.mxu0 0
      %2900 = vmatpush1.bf16.msra.mxu0 0
      %2901 = vmatprep.subr.bf16.mxu0 0
      %2902 = vmatpush1.bf16.msra.mxu0 0
      %2903 = vmatprep.subr.bf16.mxu0 0
      %2904 = vmatpush1.bf16.msra.mxu0 0
      %2905 = vmatprep.mubr.bf16.mxu0 0
      %2906 = vmatmul.mubr.bf16.gmra.mrb[0].mxu0 %v2856
      %v2907 = vpop.f32.mrb[0].mxu0
      %v2908 = vadd.f32 0.0, %v2907
      %v2909 = vpop.f32.mrb[0].mxu0
      %v2910 = vpop.f32.mrb[0].mxu0
      %v2911 = vadd.f32 0.0, %v2910
      %v2912 = vpop.f32.mrb[0].mxu0
      %2913 = vmatprep.mubr.bf16.mxu0 0
      %2914 = vmatmul.mubr.bf16.gmra.mrb[0].mxu0 %v2859
      %v2915 = vpop.f32.mrb[0].mxu0
      %v2916 = vadd.f32 0.0, %v2915
      %v2917 = vpop.f32.mrb[0].mxu0
      %v2918 = vpop.f32.mrb[0].mxu0
      %v2919 = vadd.f32 0.0, %v2918
      %v2920 = vpop.f32.mrb[0].mxu0
      %2921 = vmatprep.mubr.bf16.mxu0 0
      %2922 = vmatmul.mubr.bf16.gmra.mrb[0].mxu0 %v2862
      %v2923 = vpop.f32.mrb[0].mxu0
      %v2924 = vadd.f32 0.0, %v2923
      %v2925 = vpop.f32.mrb[0].mxu0
      %v2926 = vpop.f32.mrb[0].mxu0
      %v2927 = vadd.f32 0.0, %v2926
      %v2928 = vpop.f32.mrb[0].mxu0
      %2929 = vmatprep.mubr.bf16.mxu0 0
      %2930 = vmatmul.mubr.bf16.gmra.mrb[0].mxu0 %v2865
      %v2931 = vpop.f32.mrb[0].mxu0
      %v2932 = vadd.f32 0.0, %v2931
      %v2933 = vpop.f32.mrb[0].mxu0
      %v2934 = vpop.f32.mrb[0].mxu0
      %v2935 = vadd.f32 0.0, %v2934
      %v2936 = vpop.f32.mrb[0].mxu0
      %2937 = vmatprep.mubr.bf16.mxu0 0
      %2938 = vmatmul.mubr.bf16.gmra.mrb[0].mxu0 %v2868
      %v2939 = vpop.f32.mrb[0].mxu0
      %v2940 = vadd.f32 0.0, %v2939
      %v2941 = vpop.f32.mrb[0].mxu0
      %v2942 = vpop.f32.mrb[0].mxu0
      %v2943 = vadd.f32 0.0, %v2942
      %v2944 = vpop.f32.mrb[0].mxu0
      %2945 = vdwg.mxu0
      %v2946 = vadd.f32 %v2053, %v2908
      %v2947 = vadd.f32 %v2056, %v2911
      %v2948 = vadd.f32 %v2061, %v2916
      %v2949 = vadd.f32 %v2064, %v2919
      %v2950 = vadd.f32 %v2069, %v2924
      %v2951 = vadd.f32 %v2072, %v2927
      %v2952 = vadd.f32 %v2077, %v2932
      %v2953 = vadd.f32 %v2080, %v2935
      %v2954 = vadd.f32 %v2085, %v2940
      %v2955 = vadd.f32 %v2088, %v2943
      %v2956 = vlaneseq
      %v2957 = vshrl.u32 %v2956, 7
      %v2958 = vadd.s32 %v2957, 8
      %v2959 = vadd.s32 %v2957, 16
      %v2960 = vadd.s32 %v2957, 24
      %v2961 = vadd.s32 %v2957, 32
      %v2962 = vadd.s32 %v2957, 40
      %v2963 = vadd.s32 %v2957, 48
      %v2964 = vadd.s32 %v2957, 56
      %v2965 = vadd.s32 %v2957, 64
      %v2966 = vadd.s32 %v2957, 72
      %vm2967 = vcmp.lt.s32.totalorder %v2957, 0
      %v2968 = vsub.s32 0, %v2957
      %v2969 = vsel %vm2967, %v2968, %v2957
      %v2970 = vmul.u32.u64.compose %v2969, 3435973837
      %v2971 = vextract.low.u32 %v2970
      %v2972 = vextract.high.u32 %v2970
      %v2973 = vshrl.u32 %v2972, 3
      %v2974 = vmul.u32 %v2973, 10
      %v2975 = vsub.s32 %v2969, %v2974
      %v2976 = vsub.s32 0, %v2975
      %v2977 = vsel %vm2967, %v2976, %v2975
      %vm2978 = vcmp.lt.s32.totalorder %v2958, 0
      %v2979 = vsub.s32 0, %v2958
      %v2980 = vsel %vm2978, %v2979, %v2958
      %v2981 = vmul.u32.u64.compose %v2980, 3435973837
      %v2982 = vextract.low.u32 %v2981
      %v2983 = vextract.high.u32 %v2981
      %v2984 = vshrl.u32 %v2983, 3
      %v2985 = vmul.u32 %v2984, 10
      %v2986 = vsub.s32 %v2980, %v2985
      %v2987 = vsub.s32 0, %v2986
      %v2988 = vsel %vm2978, %v2987, %v2986
      %vm2989 = vcmp.lt.s32.totalorder %v2959, 0
      %v2990 = vsub.s32 0, %v2959
      %v2991 = vsel %vm2989, %v2990, %v2959
      %v2992 = vmul.u32.u64.compose %v2991, 3435973837
      %v2993 = vextract.low.u32 %v2992
      %v2994 = vextract.high.u32 %v2992
      %v2995 = vshrl.u32 %v2994, 3
      %v2996 = vmul.u32 %v2995, 10
      %v2997 = vsub.s32 %v2991, %v2996
      %v2998 = vsub.s32 0, %v2997
      %v2999 = vsel %vm2989, %v2998, %v2997
      %vm3000 = vcmp.lt.s32.totalorder %v2960, 0
      %v3001 = vsub.s32 0, %v2960
      %v3002 = vsel %vm3000, %v3001, %v2960
      %v3003 = vmul.u32.u64.compose %v3002, 3435973837
      %v3004 = vextract.low.u32 %v3003
      %v3005 = vextract.high.u32 %v3003
      %v3006 = vshrl.u32 %v3005, 3
      %v3007 = vmul.u32 %v3006, 10
      %v3008 = vsub.s32 %v3002, %v3007
      %v3009 = vsub.s32 0, %v3008
      %v3010 = vsel %vm3000, %v3009, %v3008
      %vm3011 = vcmp.lt.s32.totalorder %v2961, 0
      %v3012 = vsub.s32 0, %v2961
      %v3013 = vsel %vm3011, %v3012, %v2961
      %v3014 = vmul.u32.u64.compose %v3013, 3435973837
      %v3015 = vextract.low.u32 %v3014
      %v3016 = vextract.high.u32 %v3014
      %v3017 = vshrl.u32 %v3016, 3
      %v3018 = vmul.u32 %v3017, 10
      %v3019 = vsub.s32 %v3013, %v3018
      %v3020 = vsub.s32 0, %v3019
      %v3021 = vsel %vm3011, %v3020, %v3019
      %vm3022 = vcmp.lt.s32.totalorder %v2962, 0
      %v3023 = vsub.s32 0, %v2962
      %v3024 = vsel %vm3022, %v3023, %v2962
      %v3025 = vmul.u32.u64.compose %v3024, 3435973837
      %v3026 = vextract.low.u32 %v3025
      %v3027 = vextract.high.u32 %v3025
      %v3028 = vshrl.u32 %v3027, 3
      %v3029 = vmul.u32 %v3028, 10
      %v3030 = vsub.s32 %v3024, %v3029
      %v3031 = vsub.s32 0, %v3030
      %v3032 = vsel %vm3022, %v3031, %v3030
      %vm3033 = vcmp.lt.s32.totalorder %v2963, 0
      %v3034 = vsub.s32 0, %v2963
      %v3035 = vsel %vm3033, %v3034, %v2963
      %v3036 = vmul.u32.u64.compose %v3035, 3435973837
      %v3037 = vextract.low.u32 %v3036
      %v3038 = vextract.high.u32 %v3036
      %v3039 = vshrl.u32 %v3038, 3
      %v3040 = vmul.u32 %v3039, 10
      %v3041 = vsub.s32 %v3035, %v3040
      %v3042 = vsub.s32 0, %v3041
      %v3043 = vsel %vm3033, %v3042, %v3041
      %vm3044 = vcmp.lt.s32.totalorder %v2964, 0
      %v3045 = vsub.s32 0, %v2964
      %v3046 = vsel %vm3044, %v3045, %v2964
      %v3047 = vmul.u32.u64.compose %v3046, 3435973837
      %v3048 = vextract.low.u32 %v3047
      %v3049 = vextract.high.u32 %v3047
      %v3050 = vshrl.u32 %v3049, 3
      %v3051 = vmul.u32 %v3050, 10
      %v3052 = vsub.s32 %v3046, %v3051
      %v3053 = vsub.s32 0, %v3052
      %v3054 = vsel %vm3044, %v3053, %v3052
      %vm3055 = vcmp.lt.s32.totalorder %v2965, 0
      %v3056 = vsub.s32 0, %v2965
      %v3057 = vsel %vm3055, %v3056, %v2965
      %v3058 = vmul.u32.u64.compose %v3057, 3435973837
      %v3059 = vextract.low.u32 %v3058
      %v3060 = vextract.high.u32 %v3058
      %v3061 = vshrl.u32 %v3060, 3
      %v3062 = vmul.u32 %v3061, 10
      %v3063 = vsub.s32 %v3057, %v3062
      %v3064 = vsub.s32 0, %v3063
      %v3065 = vsel %vm3055, %v3064, %v3063
      %vm3066 = vcmp.lt.s32.totalorder %v2966, 0
      %v3067 = vsub.s32 0, %v2966
      %v3068 = vsel %vm3066, %v3067, %v2966
      %v3069 = vmul.u32.u64.compose %v3068, 3435973837
      %v3070 = vextract.low.u32 %v3069
      %v3071 = vextract.high.u32 %v3069
      %v3072 = vshrl.u32 %v3071, 3
      %v3073 = vmul.u32 %v3072, 10
      %v3074 = vsub.s32 %v3068, %v3073
      %v3075 = vsub.s32 0, %v3074
      %v3076 = vsel %vm3066, %v3075, %v3074
      %vm3077 = vcmp.ne.s32.totalorder %v2977, 0
      %vm3078 = vcmp.ne.s32.totalorder %v2988, 0
      %vm3079 = vcmp.ne.s32.totalorder %v2999, 0
      %vm3080 = vcmp.ne.s32.totalorder %v3010, 0
      %vm3081 = vcmp.ne.s32.totalorder %v3021, 0
      %vm3082 = vcmp.ne.s32.totalorder %v3032, 0
      %vm3083 = vcmp.ne.s32.totalorder %v3043, 0
      %vm3084 = vcmp.ne.s32.totalorder %v3054, 0
      %vm3085 = vcmp.ne.s32.totalorder %v3065, 0
      %vm3086 = vcmp.ne.s32.totalorder %v3076, 0
      %vm3087 = vcmp.lt.s32.totalorder %v2977, 0
      %vm3088 = vcmp.lt.s32.totalorder %v2988, 0
      %vm3089 = vcmp.lt.s32.totalorder %v2999, 0
      %vm3090 = vcmp.lt.s32.totalorder %v3010, 0
      %vm3091 = vcmp.lt.s32.totalorder %v3021, 0
      %vm3092 = vcmp.lt.s32.totalorder %v3032, 0
      %vm3093 = vcmp.lt.s32.totalorder %v3043, 0
      %vm3094 = vcmp.lt.s32.totalorder %v3054, 0
      %vm3095 = vcmp.lt.s32.totalorder %v3065, 0
      %vm3096 = vcmp.lt.s32.totalorder %v3076, 0
      %vm3097 = vmand %vm3087, %vm3077
      %vm3098 = vmand %vm3088, %vm3078
      %vm3099 = vmand %vm3089, %vm3079
      %vm3100 = vmand %vm3090, %vm3080
      %vm3101 = vmand %vm3091, %vm3081
      %vm3102 = vmand %vm3092, %vm3082
      %vm3103 = vmand %vm3093, %vm3083
      %vm3104 = vmand %vm3094, %vm3084
      %vm3105 = vmand %vm3095, %vm3085
      %vm3106 = vmand %vm3096, %vm3086
      %v3107 = vadd.s32 %v2977, 10
      %v3108 = vadd.s32 %v2988, 10
      %v3109 = vadd.s32 %v2999, 10
      %v3110 = vadd.s32 %v3010, 10
      %v3111 = vadd.s32 %v3021, 10
      %v3112 = vadd.s32 %v3032, 10
      %v3113 = vadd.s32 %v3043, 10
      %v3114 = vadd.s32 %v3054, 10
      %v3115 = vadd.s32 %v3065, 10
      %v3116 = vadd.s32 %v3076, 10
      %v3117 = vsel %vm3097, %v3107, %v2977
      %v3118 = vsel %vm3098, %v3108, %v2988
      %v3119 = vsel %vm3099, %v3109, %v2999
      %v3120 = vsel %vm3100, %v3110, %v3010
      %v3121 = vsel %vm3101, %v3111, %v3021
      %v3122 = vsel %vm3102, %v3112, %v3032
      %v3123 = vsel %vm3103, %v3113, %v3043
      %v3124 = vsel %vm3104, %v3114, %v3054
      %v3125 = vsel %vm3105, %v3115, %v3065
      %v3126 = vsel %vm3106, %v3116, %v3076
      %vm3127 = vcmp.lt.s32.totalorder %v3117, 8
      %vm3128 = vcmp.lt.s32.totalorder %v3118, 8
      %vm3129 = vcmp.lt.s32.totalorder %v3119, 8
      %vm3130 = vcmp.lt.s32.totalorder %v3120, 8
      %vm3131 = vcmp.lt.s32.totalorder %v3121, 8
      %vm3132 = vcmp.lt.s32.totalorder %v3122, 8
      %vm3133 = vcmp.lt.s32.totalorder %v3123, 8
      %vm3134 = vcmp.lt.s32.totalorder %v3124, 8
      %vm3135 = vcmp.lt.s32.totalorder %v3125, 8
      %vm3136 = vcmp.lt.s32.totalorder %v3126, 8
      %v3137 = vsel %vm3127, 1, 0
      %v3138 = vsel %vm3128, 1, 0
      %v3139 = vsel %vm3129, 1, 0
      %v3140 = vsel %vm3130, 1, 0
      %v3141 = vsel %vm3131, 1, 0
      %v3142 = vsel %vm3132, 1, 0
      %v3143 = vsel %vm3133, 1, 0
      %v3144 = vsel %vm3134, 1, 0
      %v3145 = vsel %vm3135, 1, 0
      %v3146 = vsel %vm3136, 1, 0
      %vm3147 = vcmp.eq.s32.totalorder %v3137, 1
      %vm3148 = vcmp.eq.s32.totalorder %v3138, 1
      %vm3149 = vcmp.eq.s32.totalorder %v3139, 1
      %vm3150 = vcmp.eq.s32.totalorder %v3140, 1
      %vm3151 = vcmp.eq.s32.totalorder %v3141, 1
      %vm3152 = vcmp.eq.s32.totalorder %v3142, 1
      %vm3153 = vcmp.eq.s32.totalorder %v3143, 1
      %vm3154 = vcmp.eq.s32.totalorder %v3144, 1
      %vm3155 = vcmp.eq.s32.totalorder %v3145, 1
      %vm3156 = vcmp.eq.s32.totalorder %v3146, 1
      %v3157 = vsel %vm3147, %v2946, 0.0
      %v3158 = vsel %vm3148, %v2947, 0.0
      %v3159 = vsel %vm3149, %v2948, 0.0
      %v3160 = vsel %vm3150, %v2949, 0.0
      %v3161 = vsel %vm3151, %v2950, 0.0
      %v3162 = vsel %vm3152, %v2951, 0.0
      %v3163 = vsel %vm3153, %v2952, 0.0
      %v3164 = vsel %vm3154, %v2953, 0.0
      %v3165 = vsel %vm3155, %v2954, 0.0
      %v3166 = vsel %vm3156, %v2955, 0.0
      %v3167 = vpack.c.bf16 %v3158, %v3157
      %v3168 = vpack.c.bf16 %v3160, %v3159
      %v3169 = vpack.c.bf16 %v3162, %v3161
      %v3170 = vpack.c.bf16 %v3164, %v3163
      %v3171 = vpack.c.bf16 %v3166, %v3165
      %v3177 = vunpack.c.l.b16 %v3167
      %v3178 = vunpack.c.h.b16 %v3167
      %v3179 = vunpack.c.l.b16 %v3168
      %v3180 = vunpack.c.h.b16 %v3168
      %v3181 = vunpack.c.l.b16 %v3169
      %v3182 = vunpack.c.h.b16 %v3169
      %v3183 = vunpack.c.l.b16 %v3170
      %v3184 = vunpack.c.h.b16 %v3170
      %v3185 = vunpack.c.l.b16 %v3171
      %v3186 = vunpack.c.h.b16 %v3171
      %v3187 = vpack.c.b16 %v3177, %v3177
      %v3188 = vpack.c.b16 %v3178, %v3178
      %v3189 = vpack.c.b16 %v3179, %v3179
      %v3190 = vpack.c.b16 %v3180, %v3180
      %v3191 = vpack.c.b16 %v3181, %v3181
      %v3192 = vpack.c.b16 %v3182, %v3182
      %v3193 = vpack.c.b16 %v3183, %v3183
      %v3194 = vpack.c.b16 %v3184, %v3184
      %v3195 = vpack.c.b16 %v3185, %v3185
      %v3196 = vpack.c.b16 %v3186, %v3186
      %vm3207 = vcmask 60416
      %3208 = vst.msk [vmem:[%s355] sm:$0xf] %vm3207, %v3187
      %3209 = vst.msk [vmem:[%s355 + $0x4] sm:$0xf] %vm3207, %v3188
      %3210 = vst.msk [vmem:[%s355 + $0x8] sm:$0xf] %vm3207, %v3189
      %3211 = vst.msk [vmem:[%s355 + $0xc] sm:$0xf] %vm3207, %v3190
      %3212 = vst.msk [vmem:[%s355 + $0x10] sm:$0xf] %vm3207, %v3191
      %3213 = vst.msk [vmem:[%s355 + $0x14] sm:$0xf] %vm3207, %v3192
      %3214 = vst.msk [vmem:[%s355 + $0x18] sm:$0xf] %vm3207, %v3193
      %3215 = vst.msk [vmem:[%s355 + $0x1c] sm:$0xf] %vm3207, %v3194
      %3216 = vst.msk [vmem:[%s355 + $0x20] sm:$0xf] %vm3207, %v3195
      %3217 = vst.msk [vmem:[%s355 + $0x24] sm:$0xf] %vm3207, %v3196
      %v3218 = vsel %vm405, %v3157, 0.0
      %v3219 = vsel %vm405, %v3158, 0.0
      %v3220 = vadd.f32 %v3218, %v3219
      %v3221 = vsel %vm405, %v3159, 0.0
      %v3222 = vadd.f32 %v3220, %v3221
      %v3223 = vsel %vm405, %v3160, 0.0
      %v3224 = vadd.f32 %v3222, %v3223
      %v3225 = vsel %vm405, %v3161, 0.0
      %v3226 = vadd.f32 %v3224, %v3225
      %v3227 = vsel %vm405, %v3162, 0.0
      %v3228 = vadd.f32 %v3226, %v3227
      %v3229 = vsel %vm405, %v3163, 0.0
      %v3230 = vadd.f32 %v3228, %v3229
      %v3231 = vsel %vm405, %v3164, 0.0
      %v3232 = vadd.f32 %v3230, %v3231
      %v3233 = vsel %vm405, %v3165, 0.0
      %v3234 = vadd.f32 %v3232, %v3233
      %v3235 = vsel %vm405, %v3166, 0.0
      %v3236 = vadd.f32 %v3234, %v3235
      %v3237 = vrot.slane %v3236, 4
      %v3238 = vadd.f32 %v3236, %v3237
      %v3239 = vrot.slane %v3238, 2
      %v3240 = vadd.f32 %v3238, %v3239
      %v3241 = vrot.slane %v3240, 1
      %v3242 = vadd.f32 %v3240, %v3241
      %vm3243 = vcmask 57344
      %3244 = vst.msk [vmem:[%s363] sm:$0x1] %vm3243, %v3242
      %v3245 = vmul.f32 %v3157, %v3157
      %v3246 = vmul.f32 %v3158, %v3158
      %v3247 = vmul.f32 %v3159, %v3159
      %v3248 = vmul.f32 %v3160, %v3160
      %v3249 = vmul.f32 %v3161, %v3161
      %v3250 = vmul.f32 %v3162, %v3162
      %v3251 = vmul.f32 %v3163, %v3163
      %v3252 = vmul.f32 %v3164, %v3164
      %v3253 = vmul.f32 %v3165, %v3165
      %v3254 = vmul.f32 %v3166, %v3166
      %v3255 = vsel %vm405, %v3245, 0.0
      %v3256 = vsel %vm405, %v3246, 0.0
      %v3257 = vadd.f32 %v3255, %v3256
      %v3258 = vsel %vm405, %v3247, 0.0
      %v3259 = vadd.f32 %v3257, %v3258
      %v3260 = vsel %vm405, %v3248, 0.0
      %v3261 = vadd.f32 %v3259, %v3260
      %v3262 = vsel %vm405, %v3249, 0.0
      %v3263 = vadd.f32 %v3261, %v3262
      %v3264 = vsel %vm405, %v3250, 0.0
      %v3265 = vadd.f32 %v3263, %v3264
      %v3266 = vsel %vm405, %v3251, 0.0
      %v3267 = vadd.f32 %v3265, %v3266
      %v3268 = vsel %vm405, %v3252, 0.0
      %v3269 = vadd.f32 %v3267, %v3268
      %v3270 = vsel %vm405, %v3253, 0.0
      %v3271 = vadd.f32 %v3269, %v3270
      %v3272 = vsel %vm405, %v3254, 0.0
      %v3273 = vadd.f32 %v3271, %v3272
      %v3274 = vrot.slane %v3273, 4
      %v3275 = vadd.f32 %v3273, %v3274
      %v3276 = vrot.slane %v3275, 2
      %v3277 = vadd.f32 %v3275, %v3276
      %v3278 = vrot.slane %v3277, 1
      %v3279 = vadd.f32 %v3277, %v3278
      %3280 = vst.msk [vmem:[%s363 + $0x1] sm:$0x1] %vm3243, %v3279
      %p3281 = scmp.lt.s32.totalorder %s21, 1
      %s3282 = scalar_select %p3281, %s21, 1
      %p3283 = scmp.lt.s32.totalorder %s22, 7
      %s3284 = scalar_select %p3283, %s22, 7
      %s3285 = smul.addr %s3284, 10
      %s3286 = smul.addr %s3282, 80
      %s3287 = sadd.s32 %s3285, %s3286
      %s3288 = smul.addr %s3287, 4
      %s3289 = scalar_lea.vmem %s4, %s3288
      %p3290 = scmp.lt.s32.totalorder %s21, 1
      %s3291 = scalar_select %p3290, %s21, 1
      %p3292 = scmp.lt.s32.totalorder %s22, 7
      %s3293 = scalar_select %p3292, %s22, 7
      %s3294 = smul.addr %s3291, 8
      %s3295 = sadd.s32 %s3293, %s3294
      %s3296 = smul.addr %s3295, 2
      %s3297 = scalar_lea.vmem %s5, %s3296
      // Predicated region
      $region37: #{down_block_forward.4} parent=35 // pred_check
        %p3298 = pneg %p158
      $region38: #{down_block_forward.4} parent=35 // pred_check_branch
        %3300 = sbr.rel (%p3298) target = $region40
      $region39: #{down_block_forward.4} parent=35 // pred_region
        _
      $region40: #{down_block_forward.4} parent=35 // pred_fallthru
        _
      // Predicated region
      $region41: #{down_block_forward.4} parent=35 // pred_check
        %p3301 = pneg %p186
      $region42: #{down_block_forward.4} parent=35 // pred_check_branch
        %3303 = sbr.rel (%p3301) target = $region44
      $region43: #{down_block_forward.4} parent=35 // pred_region
        _
      $region44: #{down_block_forward.4} parent=35 // pred_fallthru
        _
    $region36: #{down_block_forward.4} parent=5 // pred_fallthru
      _
    %p3304 = scmp.le.s32.totalorder 2, %s12
    // Predicated region
    $region45: #{down_block_forward.4} parent=5 // pred_check
      %p3305 = pneg %p3304
    $region46: #{down_block_forward.4} parent=5 // pred_check_branch
      %3307 = sbr.rel (%p3305) target = $region48
    $region47: #{down_block_forward.4} parent=5 // pred_region
      %s3308 = ssub.s32 %s12, 2
      // Predicated region
      $region49: #{down_block_forward.4} parent=47 // pred_check
        %p3309 = pneg %p164
      $region50: #{down_block_forward.4} parent=47 // pred_check_branch
        %3311 = sbr.rel (%p3309) target = $region52
      $region51: #{down_block_forward.4} parent=47 // pred_region
        %p3312 = scmp.lt.s32.totalorder %s23, 1
        %s3313 = scalar_select %p3312, %s23, 1
        %p3314 = scmp.lt.s32.totalorder %s24, 7
        %s3315 = scalar_select %p3314, %s24, 7
        %s3316 = smul.addr %s3315, 10
        %s3317 = smul.addr %s3313, 80
        %s3318 = sadd.s32 %s3316, %s3317
        %s3319 = smul.addr %s3318, 4
        %s3320 = scalar_lea.vmem %s4, %s3319
      $region52: #{down_block_forward.4} parent=47 // pred_fallthru
        _
      // Predicated region
      $region53: #{down_block_forward.4} parent=47 // pred_check
        %p3321 = pneg %p192
      $region54: #{down_block_forward.4} parent=47 // pred_check_branch
        %3323 = sbr.rel (%p3321) target = $region56
      $region55: #{down_block_forward.4} parent=47 // pred_region
        %p3324 = scmp.lt.s32.totalorder %s23, 1
        %s3325 = scalar_select %p3324, %s23, 1
        %p3326 = scmp.lt.s32.totalorder %s24, 7
        %s3327 = scalar_select %p3326, %s24, 7
        %s3328 = smul.addr %s3325, 8
        %s3329 = sadd.s32 %s3327, %s3328
        %s3330 = smul.addr %s3329, 2
        %s3331 = scalar_lea.vmem %s5, %s3330
      $region56: #{down_block_forward.4} parent=47 // pred_fallthru
        _
    $region48: #{down_block_forward.4} parent=5 // pred_fallthru
      _
  $region6: #{down_block_forward.4} parent=0 // loop_footer
    %s16 = sadd.s32 1, %s12
  $region7: #{down_block_forward.4} parent=0 // loop_footer_branch
    %11 = sbr.rel target = $region3
  $region8: #{down_block_forward.4} parent=0 // loop_exit
    _

</llo_original>
